<compile_context>
chip_gen: v6e
topology: v6e:2x2x1
jax: 0.10.0
libtpu: 0.0.40
codegen_flags: <defaults>
</compile_context>

<pallas_src>
import functools

import jax
import jax.numpy as jnp
from jax import lax
from jax.experimental import pallas as pl
from jax.experimental.pallas import tpu as pltpu


# ------------------------- fused bidirectional LSTM layer kernel -------------------------

def _bilstm_layer_kernel(gx_ref, lens_ref, w_hh_ref, out_ref, *, T, B, H):
    """One bidirectional LSTM layer, both directions fused, whole sequence in VMEM.

    gx_ref  : (T, 2B, 4H) bf16  rows [:B] = x_t @ W_ih_f + b_f          (forward, time t)
                                rows [B:] = x_{T-1-t} @ W_ih_b + b_b     (backward, time T-1-t)
    lens_ref: (2B, H)     int32 sequence lengths broadcast over H, stacked twice
    w_hh_ref: (H, 8H)     bf16  [W_hh_f | W_hh_b]  (weight-stationary in VMEM)
    out_ref : (T, B, 2H)  bf16  [..., :H] = forward h_t, [..., H:] = backward h_t
    """
    H4 = 4 * H
    lens = lens_ref[...]                                                  # (2B, H) int32
    # Loop-invariant row masks, hoisted out of the recurrence.
    row_is_fwd = lax.broadcasted_iota(jnp.int32, (2 * B, H), 0) < B
    row_is_fwd_4 = lax.broadcasted_iota(jnp.int32, (2 * B, H4), 0) < B

    def step(t, carry):
        h, c = carry                                                      # (2B, H) f32
        tb = T - 1 - t

        # One stacked recurrent matmul: (2B,H) bf16 @ (H,8H) bf16 -> (2B,8H) f32.
        gm = jnp.dot(h.astype(jnp.bfloat16), w_hh_ref[...],
                     preferred_element_type=jnp.float32)
        # Forward rows use W_hh_f (first 4H cols), backward rows use W_hh_b (last 4H cols).
        g_rec = jnp.where(row_is_fwd_4, gm[:, :H4], gm[:, H4:])           # (2B, 4H) f32
        gates = gx_ref[t].astype(jnp.float32) + g_rec

        i = jax.nn.sigmoid(gates[:, 0 * H:1 * H])
        f = jax.nn.sigmoid(gates[:, 1 * H:2 * H])
        g = jnp.tanh(gates[:, 2 * H:3 * H])
        o = jax.nn.sigmoid(gates[:, 3 * H:4 * H])
        c_new = f * c + i * g
        h_new = o * jnp.tanh(c_new)

        # Packed-sequence masking: forward rows valid while t < len (freeze afterwards),
        # backward rows valid while T-1-t < len (stay zero before their start).
        t_rows = jnp.where(row_is_fwd, t, tb)                             # (2B, H) int32
        valid = lens > t_rows
        h = jnp.where(valid, h_new, h)
        c = jnp.where(valid, c_new, c)

        out_ref[t, :, pl.ds(0, H)] = h[:B].astype(out_ref.dtype)
        out_ref[tb, :, pl.ds(H, H)] = h[B:].astype(out_ref.dtype)
        return (h, c)

    z = jnp.zeros((2 * B, H), jnp.float32)
    unroll = T if T <= 16 else 4
    lax.fori_loop(0, T, step, (z, z), unroll=unroll)


def bilstm_layer(x_tm, lens2, lp):
    """x_tm: (T, B, D) time-major input.  Returns (T, B, 2H) bf16 (fwd | bwd)."""
    T, B, D = x_tm.shape
    H = lp["w_hh_f"].shape[0]

    # Hoisted input projection: ONE (T*B, D) @ (D, 4H) bf16 matmul per direction (XLA/MXU),
    # off the serial recurrence.  Bias (b_ih + b_hh) folded in; result stored bf16.
    x2d = x_tm.reshape(T * B, D).astype(jnp.bfloat16)

    def in_proj(w_ih, b):
        g = jnp.dot(x2d, w_ih.astype(jnp.bfloat16),
                    preferred_element_type=jnp.float32) + b
        return g.reshape(T, B, 4 * H).astype(jnp.bfloat16)

    gx_f = in_proj(lp["w_ih_f"], lp["b_f"])
    gx_b = in_proj(lp["w_ih_b"], lp["b_b"])
    # Stack directions along the batch axis; backward rows are pre-reversed in time so the
    # kernel reads both directions' step-t operands from one (2B, 4H) slab per step.
    gx = jnp.concatenate([gx_f, gx_b[::-1]], axis=1)                      # (T, 2B, 4H) bf16
    w_hh = jnp.concatenate([lp["w_hh_f"], lp["w_hh_b"]], axis=1).astype(jnp.bfloat16)

    kernel = functools.partial(_bilstm_layer_kernel, T=T, B=B, H=H)
    vmem = pl.BlockSpec(memory_space=pltpu.MemorySpace.VMEM)

    # TODO(synk): for large T/B/H, chunk the T axis with a BlockSpec grid (carry h/c in VMEM
    # scratch, mark T "arbitrary", raise vmem_limit_bytes) instead of keeping whole (T,*)
    # slabs resident; on v7x, alternatively split the two directions across the 2 TensorCores.
    out = pl.pallas_call(
        kernel,
        out_shape=jax.ShapeDtypeStruct((T, B, 2 * H), jnp.bfloat16),
        in_specs=[vmem, vmem, vmem],
        out_specs=vmem,
    )(gx, lens2, w_hh)
    return out


# --------------------------------------- forward ----------------------------------------

def lstm_model_forward(params, padded_texts, lengths):
    B, T = padded_texts.shape
    H = params["lstm"][0]["w_hh_f"].shape[0]

    # Embedding lookup (gather) kept in XLA glue.
    emb = jnp.take(params["embedding"], padded_texts, axis=0)            # (B, T, E)
    x = jnp.transpose(emb, (1, 0, 2)).astype(jnp.float32)                # (T, B, E)

    # Tiny T-independent lengths tile (fwd rows then bwd rows), built once for all layers.
    lens = lengths.astype(jnp.int32)
    lens2 = jnp.broadcast_to(jnp.concatenate([lens, lens])[:, None],
                             (2 * B, H)).astype(jnp.int32)               # (2B, H)

    layer_in = x
    out = None
    for lp in params["lstm"]:
        out = bilstm_layer(layer_in, lens2, lp)                          # (T, B, 2H) bf16
        layer_in = out

    # Final hidden states of the last layer (packed-sequence hn semantics):
    h_fwd_final = out[-1, :, :H].astype(jnp.float32)   # forward: state frozen at t = len-1
    h_bwd_final = out[0, :, H:].astype(jnp.float32)    # backward: state after reaching t = 0

    # torch: concat_hidden = cat((hn[-1], hn[-2]), dim=1) = [last-layer backward, forward]
    concat_hidden = jnp.concatenate([h_bwd_final, h_fwd_final], axis=1)  # (B, 2H)

    # Linear head in plain XLA: a 2-wide output lane dim in Pallas is pure launch overhead.
    return jnp.dot(concat_hidden, params["linear_w"]) + params["linear_b"]


# ----------------------------------- param initialization --------------------------------

def init_params(key, vocab_size, embed_dim, hidden, layers, num_classes):
    keys = iter(jax.random.split(key, 1 + 8 * layers + 2))
    k = 1.0 / jnp.sqrt(hidden)

    def unif(shape):
        return jax.random.uniform(next(keys), shape, jnp.float32, -k, k)

    params = {"embedding": jax.random.normal(next(keys), (vocab_size, embed_dim),
                                             jnp.float32)}
    lstm_params = []
    d_in = embed_dim
    for _ in range(layers):
        lp = {
            "w_ih_f": unif((d_in, 4 * hidden)),
            "w_hh_f": unif((hidden, 4 * hidden)),
            "b_f":    unif((1, 4 * hidden)) + unif((1, 4 * hidden)),   # b_ih + b_hh
            "w_ih_b": unif((d_in, 4 * hidden)),
            "w_hh_b": unif((hidden, 4 * hidden)),
            "b_b":    unif((1, 4 * hidden)) + unif((1, 4 * hidden)),   # b_ih + b_hh
        }
        lstm_params.append(lp)
        d_in = 2 * hidden
    params["lstm"] = lstm_params
    params["linear_w"] = unif((2 * hidden, num_classes))
    params["linear_b"] = unif((num_classes,))
    return params


# -------------------------------------------- main ---------------------------------------

if __name__ == "__main__":
    # Small shapes consistent with the module (embed_dim/hidden scaled down).
    VOCAB = 50
    EMBED = 128
    HIDDEN = 128
    LAYERS = 2
    NUM_CLASSES = 2     # ag=False
    B, T = 8, 8

    root = jax.random.PRNGKey(0)
    k_param, k_tok = jax.random.split(root)

    params = init_params(k_param, VOCAB, EMBED, HIDDEN, LAYERS, NUM_CLASSES)
    padded_texts = jax.random.randint(k_tok, (B, T), 0, VOCAB, dtype=jnp.int32)
    lengths = jnp.array([8, 5, 3, 8, 2, 7, 6, 4], dtype=jnp.int32)

    fwd = jax.jit(lstm_model_forward)
    out = fwd(params, padded_texts, lengths)
    jax.block_until_ready(out)
    assert out.shape == (B, NUM_CLASSES) and out.dtype == jnp.float32
    print("KERNEL_OK")
</pallas_src>

<mosaic_0001>
module attributes {stable_mosaic.version = 11 : i64} {
  func.func @_bilstm_layer_kernel(%arg0: memref<8x16x512xbf16, #tpu.memory_space<vmem>>, %arg1: memref<16x128xi32, #tpu.memory_space<vmem>>, %arg2: memref<128x1024xbf16, #tpu.memory_space<vmem>>, %arg3: memref<8x8x256xbf16, #tpu.memory_space<vmem>>) attributes {dimension_semantics = [], scalar_prefetch = 0 : i64, scratch_operands = 0 : i64, tpu.core_type = #tpu.core_type<tc>} {
    %c0 = arith.constant 0 : index
    %c0_0 = arith.constant 0 : index
    %0 = vector.load %arg1[%c0, %c0_0] : memref<16x128xi32, #tpu.memory_space<vmem>>, vector<16x128xi32>
    %1 = tpu.iota {dimensions = array<i32: 0>} : vector<16x128xi32>
    %c8_i32 = arith.constant 8 : i32
    %2 = vector.broadcast %c8_i32 : i32 to vector<16x128xi32>
    %3 = arith.cmpi slt, %1, %2 : vector<16x128xi32>
    %4 = tpu.iota {dimensions = array<i32: 0>} : vector<16x512xi32>
    %c8_i32_1 = arith.constant 8 : i32
    %5 = vector.broadcast %c8_i32_1 : i32 to vector<16x512xi32>
    %6 = arith.cmpi slt, %4, %5 : vector<16x512xi32>
    %cst = arith.constant 0.000000e+00 : f32
    %7 = vector.broadcast %cst : f32 to vector<16x128xf32>
    %c0_i32 = arith.constant 0 : i32
    %c7_i32 = arith.constant 7 : i32
    %8 = arith.subi %c7_i32, %c0_i32 : i32
    %9 = arith.truncf %7 : vector<16x128xf32> to vector<16x128xbf16>
    %c0_2 = arith.constant 0 : index
    %c0_3 = arith.constant 0 : index
    %10 = vector.load %arg2[%c0_2, %c0_3] : memref<128x1024xbf16, #tpu.memory_space<vmem>>, vector<128x1024xbf16>
    %cst_4 = arith.constant dense<0.000000e+00> : vector<16x1024xf32>
    %11 = tpu.matmul %9, %10, %cst_4 {dimension_numbers = #tpu.dot_dimension_numbers<[1], [0], [0], [1], [0, 0, 1, 1], [], []>} : vector<16x128xbf16>, vector<128x1024xbf16>, vector<16x1024xf32> -> vector<16x1024xf32>
    %12 = vector.extract_strided_slice %11 {offsets = [0, 0], sizes = [16, 512], strides = [1, 1]} : vector<16x1024xf32> to vector<16x512xf32>
    %13 = vector.extract_strided_slice %11 {offsets = [0, 512], sizes = [16, 512], strides = [1, 1]} : vector<16x1024xf32> to vector<16x512xf32>
    %14 = arith.select %6, %12, %13 : vector<16x512xi1>, vector<16x512xf32>
    %15 = arith.index_cast %c0_i32 : i32 to index
    %c0_5 = arith.constant 0 : index
    %c0_6 = arith.constant 0 : index
    %16 = vector.load %arg0[%15, %c0_5, %c0_6] : memref<8x16x512xbf16, #tpu.memory_space<vmem>>, vector<1x16x512xbf16>
    %17 = vector.shape_cast %16 : vector<1x16x512xbf16> to vector<16x512xbf16>
    %18 = arith.extf %17 : vector<16x512xbf16> to vector<16x512xf32>
    %19 = arith.addf %18, %14 : vector<16x512xf32>
    %20 = vector.extract_strided_slice %19 {offsets = [0, 0], sizes = [16, 128], strides = [1, 1]} : vector<16x512xf32> to vector<16x128xf32>
    %21 = arith.negf %20 : vector<16x128xf32>
    %22 = math.exp %21 : vector<16x128xf32>
    %cst_7 = arith.constant 1.000000e+00 : f32
    %23 = vector.broadcast %cst_7 : f32 to vector<16x128xf32>
    %24 = arith.addf %23, %22 : vector<16x128xf32>
    %25 = arith.divf %23, %24 : vector<16x128xf32>
    %26 = vector.extract_strided_slice %19 {offsets = [0, 128], sizes = [16, 128], strides = [1, 1]} : vector<16x512xf32> to vector<16x128xf32>
    %27 = arith.negf %26 : vector<16x128xf32>
    %28 = math.exp %27 : vector<16x128xf32>
    %cst_8 = arith.constant 1.000000e+00 : f32
    %29 = vector.broadcast %cst_8 : f32 to vector<16x128xf32>
    %30 = arith.addf %29, %28 : vector<16x128xf32>
    %31 = arith.divf %29, %30 : vector<16x128xf32>
    %32 = vector.extract_strided_slice %19 {offsets = [0, 256], sizes = [16, 128], strides = [1, 1]} : vector<16x512xf32> to vector<16x128xf32>
    %33 = math.tanh %32 : vector<16x128xf32>
    %34 = vector.extract_strided_slice %19 {offsets = [0, 384], sizes = [16, 128], strides = [1, 1]} : vector<16x512xf32> to vector<16x128xf32>
    %35 = arith.negf %34 : vector<16x128xf32>
    %36 = math.exp %35 : vector<16x128xf32>
    %cst_9 = arith.constant 1.000000e+00 : f32
    %37 = vector.broadcast %cst_9 : f32 to vector<16x128xf32>
    %38 = arith.addf %37, %36 : vector<16x128xf32>
    %39 = arith.divf %37, %38 : vector<16x128xf32>
    %40 = arith.mulf %31, %7 : vector<16x128xf32>
    %41 = arith.mulf %25, %33 : vector<16x128xf32>
    %42 = arith.addf %40, %41 : vector<16x128xf32>
    %43 = math.tanh %42 : vector<16x128xf32>
    %44 = arith.mulf %39, %43 : vector<16x128xf32>
    %45 = vector.broadcast %c0_i32 : i32 to vector<16x128xi32>
    %46 = vector.broadcast %8 : i32 to vector<16x128xi32>
    %47 = arith.select %3, %45, %46 : vector<16x128xi1>, vector<16x128xi32>
    %48 = arith.cmpi sgt, %0, %47 : vector<16x128xi32>
    %49 = arith.select %48, %44, %7 : vector<16x128xi1>, vector<16x128xf32>
    %50 = arith.select %48, %42, %7 : vector<16x128xi1>, vector<16x128xf32>
    %51 = vector.extract_strided_slice %49 {offsets = [0, 0], sizes = [8, 128], strides = [1, 1]} : vector<16x128xf32> to vector<8x128xf32>
    %52 = arith.truncf %51 : vector<8x128xf32> to vector<8x128xbf16>
    %53 = arith.index_cast %c0_i32 : i32 to index
    %c0_10 = arith.constant 0 : index
    %c0_11 = arith.constant 0 : index
    %54 = vector.load %arg3[%53, %c0_10, %c0_11] : memref<8x8x256xbf16, #tpu.memory_space<vmem>>, vector<1x8x128xbf16>
    %55 = vector.shape_cast %54 : vector<1x8x128xbf16> to vector<8x128xbf16>
    %56 = vector.shape_cast %52 : vector<8x128xbf16> to vector<1x8x128xbf16>
    tpu.vector_store %arg3[%53, %c0_10, %c0_11], %56 {strides = array<i32>} : memref<8x8x256xbf16, #tpu.memory_space<vmem>>, vector<1x8x128xbf16>,
    %57 = vector.extract_strided_slice %49 {offsets = [8, 0], sizes = [8, 128], strides = [1, 1]} : vector<16x128xf32> to vector<8x128xf32>
    %58 = arith.truncf %57 : vector<8x128xf32> to vector<8x128xbf16>
    %59 = arith.index_cast %8 : i32 to index
    %c0_12 = arith.constant 0 : index
    %c128 = arith.constant 128 : index
    %60 = vector.load %arg3[%59, %c0_12, %c128] : memref<8x8x256xbf16, #tpu.memory_space<vmem>>, vector<1x8x128xbf16>
    %61 = vector.shape_cast %60 : vector<1x8x128xbf16> to vector<8x128xbf16>
    %62 = vector.shape_cast %58 : vector<8x128xbf16> to vector<1x8x128xbf16>
    tpu.vector_store %arg3[%59, %c0_12, %c128], %62 {strides = array<i32>} : memref<8x8x256xbf16, #tpu.memory_space<vmem>>, vector<1x8x128xbf16>,
    %c1_i32 = arith.constant 1 : i32
    %c7_i32_13 = arith.constant 7 : i32
    %63 = arith.subi %c7_i32_13, %c1_i32 : i32
    %64 = arith.truncf %49 : vector<16x128xf32> to vector<16x128xbf16>
    %c0_14 = arith.constant 0 : index
    %c0_15 = arith.constant 0 : index
    %65 = vector.load %arg2[%c0_14, %c0_15] : memref<128x1024xbf16, #tpu.memory_space<vmem>>, vector<128x1024xbf16>
    %cst_16 = arith.constant dense<0.000000e+00> : vector<16x1024xf32>
    %66 = tpu.matmul %64, %65, %cst_16 {dimension_numbers = #tpu.dot_dimension_numbers<[1], [0], [0], [1], [0, 0, 1, 1], [], []>} : vector<16x128xbf16>, vector<128x1024xbf16>, vector<16x1024xf32> -> vector<16x1024xf32>
    %67 = vector.extract_strided_slice %66 {offsets = [0, 0], sizes = [16, 512], strides = [1, 1]} : vector<16x1024xf32> to vector<16x512xf32>
    %68 = vector.extract_strided_slice %66 {offsets = [0, 512], sizes = [16, 512], strides = [1, 1]} : vector<16x1024xf32> to vector<16x512xf32>
    %69 = arith.select %6, %67, %68 : vector<16x512xi1>, vector<16x512xf32>
    %70 = arith.index_cast %c1_i32 : i32 to index
    %c0_17 = arith.constant 0 : index
    %c0_18 = arith.constant 0 : index
    %71 = vector.load %arg0[%70, %c0_17, %c0_18] : memref<8x16x512xbf16, #tpu.memory_space<vmem>>, vector<1x16x512xbf16>
    %72 = vector.shape_cast %71 : vector<1x16x512xbf16> to vector<16x512xbf16>
    %73 = arith.extf %72 : vector<16x512xbf16> to vector<16x512xf32>
    %74 = arith.addf %73, %69 : vector<16x512xf32>
    %75 = vector.extract_strided_slice %74 {offsets = [0, 0], sizes = [16, 128], strides = [1, 1]} : vector<16x512xf32> to vector<16x128xf32>
    %76 = arith.negf %75 : vector<16x128xf32>
    %77 = math.exp %76 : vector<16x128xf32>
    %cst_19 = arith.constant 1.000000e+00 : f32
    %78 = vector.broadcast %cst_19 : f32 to vector<16x128xf32>
    %79 = arith.addf %78, %77 : vector<16x128xf32>
    %80 = arith.divf %78, %79 : vector<16x128xf32>
    %81 = vector.extract_strided_slice %74 {offsets = [0, 128], sizes = [16, 128], strides = [1, 1]} : vector<16x512xf32> to vector<16x128xf32>
    %82 = arith.negf %81 : vector<16x128xf32>
    %83 = math.exp %82 : vector<16x128xf32>
    %cst_20 = arith.constant 1.000000e+00 : f32
    %84 = vector.broadcast %cst_20 : f32 to vector<16x128xf32>
    %85 = arith.addf %84, %83 : vector<16x128xf32>
    %86 = arith.divf %84, %85 : vector<16x128xf32>
    %87 = vector.extract_strided_slice %74 {offsets = [0, 256], sizes = [16, 128], strides = [1, 1]} : vector<16x512xf32> to vector<16x128xf32>
    %88 = math.tanh %87 : vector<16x128xf32>
    %89 = vector.extract_strided_slice %74 {offsets = [0, 384], sizes = [16, 128], strides = [1, 1]} : vector<16x512xf32> to vector<16x128xf32>
    %90 = arith.negf %89 : vector<16x128xf32>
    %91 = math.exp %90 : vector<16x128xf32>
    %cst_21 = arith.constant 1.000000e+00 : f32
    %92 = vector.broadcast %cst_21 : f32 to vector<16x128xf32>
    %93 = arith.addf %92, %91 : vector<16x128xf32>
    %94 = arith.divf %92, %93 : vector<16x128xf32>
    %95 = arith.mulf %86, %50 : vector<16x128xf32>
    %96 = arith.mulf %80, %88 : vector<16x128xf32>
    %97 = arith.addf %95, %96 : vector<16x128xf32>
    %98 = math.tanh %97 : vector<16x128xf32>
    %99 = arith.mulf %94, %98 : vector<16x128xf32>
    %100 = vector.broadcast %c1_i32 : i32 to vector<16x128xi32>
    %101 = vector.broadcast %63 : i32 to vector<16x128xi32>
    %102 = arith.select %3, %100, %101 : vector<16x128xi1>, vector<16x128xi32>
    %103 = arith.cmpi sgt, %0, %102 : vector<16x128xi32>
    %104 = arith.select %103, %99, %49 : vector<16x128xi1>, vector<16x128xf32>
    %105 = arith.select %103, %97, %50 : vector<16x128xi1>, vector<16x128xf32>
    %106 = vector.extract_strided_slice %104 {offsets = [0, 0], sizes = [8, 128], strides = [1, 1]} : vector<16x128xf32> to vector<8x128xf32>
    %107 = arith.truncf %106 : vector<8x128xf32> to vector<8x128xbf16>
    %108 = arith.index_cast %c1_i32 : i32 to index
    %c0_22 = arith.constant 0 : index
    %c0_23 = arith.constant 0 : index
    %109 = vector.load %arg3[%108, %c0_22, %c0_23] : memref<8x8x256xbf16, #tpu.memory_space<vmem>>, vector<1x8x128xbf16>
    %110 = vector.shape_cast %109 : vector<1x8x128xbf16> to vector<8x128xbf16>
    %111 = vector.shape_cast %107 : vector<8x128xbf16> to vector<1x8x128xbf16>
    tpu.vector_store %arg3[%108, %c0_22, %c0_23], %111 {strides = array<i32>} : memref<8x8x256xbf16, #tpu.memory_space<vmem>>, vector<1x8x128xbf16>,
    %112 = vector.extract_strided_slice %104 {offsets = [8, 0], sizes = [8, 128], strides = [1, 1]} : vector<16x128xf32> to vector<8x128xf32>
    %113 = arith.truncf %112 : vector<8x128xf32> to vector<8x128xbf16>
    %114 = arith.index_cast %63 : i32 to index
    %c0_24 = arith.constant 0 : index
    %c128_25 = arith.constant 128 : index
    %115 = vector.load %arg3[%114, %c0_24, %c128_25] : memref<8x8x256xbf16, #tpu.memory_space<vmem>>, vector<1x8x128xbf16>
    %116 = vector.shape_cast %115 : vector<1x8x128xbf16> to vector<8x128xbf16>
    %117 = vector.shape_cast %113 : vector<8x128xbf16> to vector<1x8x128xbf16>
    tpu.vector_store %arg3[%114, %c0_24, %c128_25], %117 {strides = array<i32>} : memref<8x8x256xbf16, #tpu.memory_space<vmem>>, vector<1x8x128xbf16>,
    %c2_i32 = arith.constant 2 : i32
    %c7_i32_26 = arith.constant 7 : i32
    %118 = arith.subi %c7_i32_26, %c2_i32 : i32
    %119 = arith.truncf %104 : vector<16x128xf32> to vector<16x128xbf16>
    %c0_27 = arith.constant 0 : index
    %c0_28 = arith.constant 0 : index
    %120 = vector.load %arg2[%c0_27, %c0_28] : memref<128x1024xbf16, #tpu.memory_space<vmem>>, vector<128x1024xbf16>
    %cst_29 = arith.constant dense<0.000000e+00> : vector<16x1024xf32>
    %121 = tpu.matmul %119, %120, %cst_29 {dimension_numbers = #tpu.dot_dimension_numbers<[1], [0], [0], [1], [0, 0, 1, 1], [], []>} : vector<16x128xbf16>, vector<128x1024xbf16>, vector<16x1024xf32> -> vector<16x1024xf32>
    %122 = vector.extract_strided_slice %121 {offsets = [0, 0], sizes = [16, 512], strides = [1, 1]} : vector<16x1024xf32> to vector<16x512xf32>
    %123 = vector.extract_strided_slice %121 {offsets = [0, 512], sizes = [16, 512], strides = [1, 1]} : vector<16x1024xf32> to vector<16x512xf32>
    %124 = arith.select %6, %122, %123 : vector<16x512xi1>, vector<16x512xf32>
    %125 = arith.index_cast %c2_i32 : i32 to index
    %c0_30 = arith.constant 0 : index
    %c0_31 = arith.constant 0 : index
    %126 = vector.load %arg0[%125, %c0_30, %c0_31] : memref<8x16x512xbf16, #tpu.memory_space<vmem>>, vector<1x16x512xbf16>
    %127 = vector.shape_cast %126 : vector<1x16x512xbf16> to vector<16x512xbf16>
    %128 = arith.extf %127 : vector<16x512xbf16> to vector<16x512xf32>
    %129 = arith.addf %128, %124 : vector<16x512xf32>
    %130 = vector.extract_strided_slice %129 {offsets = [0, 0], sizes = [16, 128], strides = [1, 1]} : vector<16x512xf32> to vector<16x128xf32>
    %131 = arith.negf %130 : vector<16x128xf32>
    %132 = math.exp %131 : vector<16x128xf32>
    %cst_32 = arith.constant 1.000000e+00 : f32
    %133 = vector.broadcast %cst_32 : f32 to vector<16x128xf32>
    %134 = arith.addf %133, %132 : vector<16x128xf32>
    %135 = arith.divf %133, %134 : vector<16x128xf32>
    %136 = vector.extract_strided_slice %129 {offsets = [0, 128], sizes = [16, 128], strides = [1, 1]} : vector<16x512xf32> to vector<16x128xf32>
    %137 = arith.negf %136 : vector<16x128xf32>
    %138 = math.exp %137 : vector<16x128xf32>
    %cst_33 = arith.constant 1.000000e+00 : f32
    %139 = vector.broadcast %cst_33 : f32 to vector<16x128xf32>
    %140 = arith.addf %139, %138 : vector<16x128xf32>
    %141 = arith.divf %139, %140 : vector<16x128xf32>
    %142 = vector.extract_strided_slice %129 {offsets = [0, 256], sizes = [16, 128], strides = [1, 1]} : vector<16x512xf32> to vector<16x128xf32>
    %143 = math.tanh %142 : vector<16x128xf32>
    %144 = vector.extract_strided_slice %129 {offsets = [0, 384], sizes = [16, 128], strides = [1, 1]} : vector<16x512xf32> to vector<16x128xf32>
    %145 = arith.negf %144 : vector<16x128xf32>
    %146 = math.exp %145 : vector<16x128xf32>
    %cst_34 = arith.constant 1.000000e+00 : f32
    %147 = vector.broadcast %cst_34 : f32 to vector<16x128xf32>
    %148 = arith.addf %147, %146 : vector<16x128xf32>
    %149 = arith.divf %147, %148 : vector<16x128xf32>
    %150 = arith.mulf %141, %105 : vector<16x128xf32>
    %151 = arith.mulf %135, %143 : vector<16x128xf32>
    %152 = arith.addf %150, %151 : vector<16x128xf32>
    %153 = math.tanh %152 : vector<16x128xf32>
    %154 = arith.mulf %149, %153 : vector<16x128xf32>
    %155 = vector.broadcast %c2_i32 : i32 to vector<16x128xi32>
    %156 = vector.broadcast %118 : i32 to vector<16x128xi32>
    %157 = arith.select %3, %155, %156 : vector<16x128xi1>, vector<16x128xi32>
    %158 = arith.cmpi sgt, %0, %157 : vector<16x128xi32>
    %159 = arith.select %158, %154, %104 : vector<16x128xi1>, vector<16x128xf32>
    %160 = arith.select %158, %152, %105 : vector<16x128xi1>, vector<16x128xf32>
    %161 = vector.extract_strided_slice %159 {offsets = [0, 0], sizes = [8, 128], strides = [1, 1]} : vector<16x128xf32> to vector<8x128xf32>
    %162 = arith.truncf %161 : vector<8x128xf32> to vector<8x128xbf16>
    %163 = arith.index_cast %c2_i32 : i32 to index
    %c0_35 = arith.constant 0 : index
    %c0_36 = arith.constant 0 : index
    %164 = vector.load %arg3[%163, %c0_35, %c0_36] : memref<8x8x256xbf16, #tpu.memory_space<vmem>>, vector<1x8x128xbf16>
    %165 = vector.shape_cast %164 : vector<1x8x128xbf16> to vector<8x128xbf16>
    %166 = vector.shape_cast %162 : vector<8x128xbf16> to vector<1x8x128xbf16>
    tpu.vector_store %arg3[%163, %c0_35, %c0_36], %166 {strides = array<i32>} : memref<8x8x256xbf16, #tpu.memory_space<vmem>>, vector<1x8x128xbf16>,
    %167 = vector.extract_strided_slice %159 {offsets = [8, 0], sizes = [8, 128], strides = [1, 1]} : vector<16x128xf32> to vector<8x128xf32>
    %168 = arith.truncf %167 : vector<8x128xf32> to vector<8x128xbf16>
    %169 = arith.index_cast %118 : i32 to index
    %c0_37 = arith.constant 0 : index
    %c128_38 = arith.constant 128 : index
    %170 = vector.load %arg3[%169, %c0_37, %c128_38] : memref<8x8x256xbf16, #tpu.memory_space<vmem>>, vector<1x8x128xbf16>
    %171 = vector.shape_cast %170 : vector<1x8x128xbf16> to vector<8x128xbf16>
    %172 = vector.shape_cast %168 : vector<8x128xbf16> to vector<1x8x128xbf16>
    tpu.vector_store %arg3[%169, %c0_37, %c128_38], %172 {strides = array<i32>} : memref<8x8x256xbf16, #tpu.memory_space<vmem>>, vector<1x8x128xbf16>,
    %c3_i32 = arith.constant 3 : i32
    %c7_i32_39 = arith.constant 7 : i32
    %173 = arith.subi %c7_i32_39, %c3_i32 : i32
    %174 = arith.truncf %159 : vector<16x128xf32> to vector<16x128xbf16>
    %c0_40 = arith.constant 0 : index
    %c0_41 = arith.constant 0 : index
    %175 = vector.load %arg2[%c0_40, %c0_41] : memref<128x1024xbf16, #tpu.memory_space<vmem>>, vector<128x1024xbf16>
    %cst_42 = arith.constant dense<0.000000e+00> : vector<16x1024xf32>
    %176 = tpu.matmul %174, %175, %cst_42 {dimension_numbers = #tpu.dot_dimension_numbers<[1], [0], [0], [1], [0, 0, 1, 1], [], []>} : vector<16x128xbf16>, vector<128x1024xbf16>, vector<16x1024xf32> -> vector<16x1024xf32>
    %177 = vector.extract_strided_slice %176 {offsets = [0, 0], sizes = [16, 512], strides = [1, 1]} : vector<16x1024xf32> to vector<16x512xf32>
    %178 = vector.extract_strided_slice %176 {offsets = [0, 512], sizes = [16, 512], strides = [1, 1]} : vector<16x1024xf32> to vector<16x512xf32>
    %179 = arith.select %6, %177, %178 : vector<16x512xi1>, vector<16x512xf32>
    %180 = arith.index_cast %c3_i32 : i32 to index
    %c0_43 = arith.constant 0 : index
    %c0_44 = arith.constant 0 : index
    %181 = vector.load %arg0[%180, %c0_43, %c0_44] : memref<8x16x512xbf16, #tpu.memory_space<vmem>>, vector<1x16x512xbf16>
    %182 = vector.shape_cast %181 : vector<1x16x512xbf16> to vector<16x512xbf16>
    %183 = arith.extf %182 : vector<16x512xbf16> to vector<16x512xf32>
    %184 = arith.addf %183, %179 : vector<16x512xf32>
    %185 = vector.extract_strided_slice %184 {offsets = [0, 0], sizes = [16, 128], strides = [1, 1]} : vector<16x512xf32> to vector<16x128xf32>
    %186 = arith.negf %185 : vector<16x128xf32>
    %187 = math.exp %186 : vector<16x128xf32>
    %cst_45 = arith.constant 1.000000e+00 : f32
    %188 = vector.broadcast %cst_45 : f32 to vector<16x128xf32>
    %189 = arith.addf %188, %187 : vector<16x128xf32>
    %190 = arith.divf %188, %189 : vector<16x128xf32>
    %191 = vector.extract_strided_slice %184 {offsets = [0, 128], sizes = [16, 128], strides = [1, 1]} : vector<16x512xf32> to vector<16x128xf32>
    %192 = arith.negf %191 : vector<16x128xf32>
    %193 = math.exp %192 : vector<16x128xf32>
    %cst_46 = arith.constant 1.000000e+00 : f32
    %194 = vector.broadcast %cst_46 : f32 to vector<16x128xf32>
    %195 = arith.addf %194, %193 : vector<16x128xf32>
    %196 = arith.divf %194, %195 : vector<16x128xf32>
    %197 = vector.extract_strided_slice %184 {offsets = [0, 256], sizes = [16, 128], strides = [1, 1]} : vector<16x512xf32> to vector<16x128xf32>
    %198 = math.tanh %197 : vector<16x128xf32>
    %199 = vector.extract_strided_slice %184 {offsets = [0, 384], sizes = [16, 128], strides = [1, 1]} : vector<16x512xf32> to vector<16x128xf32>
    %200 = arith.negf %199 : vector<16x128xf32>
    %201 = math.exp %200 : vector<16x128xf32>
    %cst_47 = arith.constant 1.000000e+00 : f32
    %202 = vector.broadcast %cst_47 : f32 to vector<16x128xf32>
    %203 = arith.addf %202, %201 : vector<16x128xf32>
    %204 = arith.divf %202, %203 : vector<16x128xf32>
    %205 = arith.mulf %196, %160 : vector<16x128xf32>
    %206 = arith.mulf %190, %198 : vector<16x128xf32>
    %207 = arith.addf %205, %206 : vector<16x128xf32>
    %208 = math.tanh %207 : vector<16x128xf32>
    %209 = arith.mulf %204, %208 : vector<16x128xf32>
    %210 = vector.broadcast %c3_i32 : i32 to vector<16x128xi32>
    %211 = vector.broadcast %173 : i32 to vector<16x128xi32>
    %212 = arith.select %3, %210, %211 : vector<16x128xi1>, vector<16x128xi32>
    %213 = arith.cmpi sgt, %0, %212 : vector<16x128xi32>
    %214 = arith.select %213, %209, %159 : vector<16x128xi1>, vector<16x128xf32>
    %215 = arith.select %213, %207, %160 : vector<16x128xi1>, vector<16x128xf32>
    %216 = vector.extract_strided_slice %214 {offsets = [0, 0], sizes = [8, 128], strides = [1, 1]} : vector<16x128xf32> to vector<8x128xf32>
    %217 = arith.truncf %216 : vector<8x128xf32> to vector<8x128xbf16>
    %218 = arith.index_cast %c3_i32 : i32 to index
    %c0_48 = arith.constant 0 : index
    %c0_49 = arith.constant 0 : index
    %219 = vector.load %arg3[%218, %c0_48, %c0_49] : memref<8x8x256xbf16, #tpu.memory_space<vmem>>, vector<1x8x128xbf16>
    %220 = vector.shape_cast %219 : vector<1x8x128xbf16> to vector<8x128xbf16>
    %221 = vector.shape_cast %217 : vector<8x128xbf16> to vector<1x8x128xbf16>
    tpu.vector_store %arg3[%218, %c0_48, %c0_49], %221 {strides = array<i32>} : memref<8x8x256xbf16, #tpu.memory_space<vmem>>, vector<1x8x128xbf16>,
    %222 = vector.extract_strided_slice %214 {offsets = [8, 0], sizes = [8, 128], strides = [1, 1]} : vector<16x128xf32> to vector<8x128xf32>
    %223 = arith.truncf %222 : vector<8x128xf32> to vector<8x128xbf16>
    %224 = arith.index_cast %173 : i32 to index
    %c0_50 = arith.constant 0 : index
    %c128_51 = arith.constant 128 : index
    %225 = vector.load %arg3[%224, %c0_50, %c128_51] : memref<8x8x256xbf16, #tpu.memory_space<vmem>>, vector<1x8x128xbf16>
    %226 = vector.shape_cast %225 : vector<1x8x128xbf16> to vector<8x128xbf16>
    %227 = vector.shape_cast %223 : vector<8x128xbf16> to vector<1x8x128xbf16>
    tpu.vector_store %arg3[%224, %c0_50, %c128_51], %227 {strides = array<i32>} : memref<8x8x256xbf16, #tpu.memory_space<vmem>>, vector<1x8x128xbf16>,
    %c4_i32 = arith.constant 4 : i32
    %c7_i32_52 = arith.constant 7 : i32
    %228 = arith.subi %c7_i32_52, %c4_i32 : i32
    %229 = arith.truncf %214 : vector<16x128xf32> to vector<16x128xbf16>
    %c0_53 = arith.constant 0 : index
    %c0_54 = arith.constant 0 : index
    %230 = vector.load %arg2[%c0_53, %c0_54] : memref<128x1024xbf16, #tpu.memory_space<vmem>>, vector<128x1024xbf16>
    %cst_55 = arith.constant dense<0.000000e+00> : vector<16x1024xf32>
    %231 = tpu.matmul %229, %230, %cst_55 {dimension_numbers = #tpu.dot_dimension_numbers<[1], [0], [0], [1], [0, 0, 1, 1], [], []>} : vector<16x128xbf16>, vector<128x1024xbf16>, vector<16x1024xf32> -> vector<16x1024xf32>
    %232 = vector.extract_strided_slice %231 {offsets = [0, 0], sizes = [16, 512], strides = [1, 1]} : vector<16x1024xf32> to vector<16x512xf32>
    %233 = vector.extract_strided_slice %231 {offsets = [0, 512], sizes = [16, 512], strides = [1, 1]} : vector<16x1024xf32> to vector<16x512xf32>
    %234 = arith.select %6, %232, %233 : vector<16x512xi1>, vector<16x512xf32>
    %235 = arith.index_cast %c4_i32 : i32 to index
    %c0_56 = arith.constant 0 : index
    %c0_57 = arith.constant 0 : index
    %236 = vector.load %arg0[%235, %c0_56, %c0_57] : memref<8x16x512xbf16, #tpu.memory_space<vmem>>, vector<1x16x512xbf16>
    %237 = vector.shape_cast %236 : vector<1x16x512xbf16> to vector<16x512xbf16>
    %238 = arith.extf %237 : vector<16x512xbf16> to vector<16x512xf32>
    %239 = arith.addf %238, %234 : vector<16x512xf32>
    %240 = vector.extract_strided_slice %239 {offsets = [0, 0], sizes = [16, 128], strides = [1, 1]} : vector<16x512xf32> to vector<16x128xf32>
    %241 = arith.negf %240 : vector<16x128xf32>
    %242 = math.exp %241 : vector<16x128xf32>
    %cst_58 = arith.constant 1.000000e+00 : f32
    %243 = vector.broadcast %cst_58 : f32 to vector<16x128xf32>
    %244 = arith.addf %243, %242 : vector<16x128xf32>
    %245 = arith.divf %243, %244 : vector<16x128xf32>
    %246 = vector.extract_strided_slice %239 {offsets = [0, 128], sizes = [16, 128], strides = [1, 1]} : vector<16x512xf32> to vector<16x128xf32>
    %247 = arith.negf %246 : vector<16x128xf32>
    %248 = math.exp %247 : vector<16x128xf32>
    %cst_59 = arith.constant 1.000000e+00 : f32
    %249 = vector.broadcast %cst_59 : f32 to vector<16x128xf32>
    %250 = arith.addf %249, %248 : vector<16x128xf32>
    %251 = arith.divf %249, %250 : vector<16x128xf32>
    %252 = vector.extract_strided_slice %239 {offsets = [0, 256], sizes = [16, 128], strides = [1, 1]} : vector<16x512xf32> to vector<16x128xf32>
    %253 = math.tanh %252 : vector<16x128xf32>
    %254 = vector.extract_strided_slice %239 {offsets = [0, 384], sizes = [16, 128], strides = [1, 1]} : vector<16x512xf32> to vector<16x128xf32>
    %255 = arith.negf %254 : vector<16x128xf32>
    %256 = math.exp %255 : vector<16x128xf32>
    %cst_60 = arith.constant 1.000000e+00 : f32
    %257 = vector.broadcast %cst_60 : f32 to vector<16x128xf32>
    %258 = arith.addf %257, %256 : vector<16x128xf32>
    %259 = arith.divf %257, %258 : vector<16x128xf32>
    %260 = arith.mulf %251, %215 : vector<16x128xf32>
    %261 = arith.mulf %245, %253 : vector<16x128xf32>
    %262 = arith.addf %260, %261 : vector<16x128xf32>
    %263 = math.tanh %262 : vector<16x128xf32>
    %264 = arith.mulf %259, %263 : vector<16x128xf32>
    %265 = vector.broadcast %c4_i32 : i32 to vector<16x128xi32>
    %266 = vector.broadcast %228 : i32 to vector<16x128xi32>
    %267 = arith.select %3, %265, %266 : vector<16x128xi1>, vector<16x128xi32>
    %268 = arith.cmpi sgt, %0, %267 : vector<16x128xi32>
    %269 = arith.select %268, %264, %214 : vector<16x128xi1>, vector<16x128xf32>
    %270 = arith.select %268, %262, %215 : vector<16x128xi1>, vector<16x128xf32>
    %271 = vector.extract_strided_slice %269 {offsets = [0, 0], sizes = [8, 128], strides = [1, 1]} : vector<16x128xf32> to vector<8x128xf32>
    %272 = arith.truncf %271 : vector<8x128xf32> to vector<8x128xbf16>
    %273 = arith.index_cast %c4_i32 : i32 to index
    %c0_61 = arith.constant 0 : index
    %c0_62 = arith.constant 0 : index
    %274 = vector.load %arg3[%273, %c0_61, %c0_62] : memref<8x8x256xbf16, #tpu.memory_space<vmem>>, vector<1x8x128xbf16>
    %275 = vector.shape_cast %274 : vector<1x8x128xbf16> to vector<8x128xbf16>
    %276 = vector.shape_cast %272 : vector<8x128xbf16> to vector<1x8x128xbf16>
    tpu.vector_store %arg3[%273, %c0_61, %c0_62], %276 {strides = array<i32>} : memref<8x8x256xbf16, #tpu.memory_space<vmem>>, vector<1x8x128xbf16>,
    %277 = vector.extract_strided_slice %269 {offsets = [8, 0], sizes = [8, 128], strides = [1, 1]} : vector<16x128xf32> to vector<8x128xf32>
    %278 = arith.truncf %277 : vector<8x128xf32> to vector<8x128xbf16>
    %279 = arith.index_cast %228 : i32 to index
    %c0_63 = arith.constant 0 : index
    %c128_64 = arith.constant 128 : index
    %280 = vector.load %arg3[%279, %c0_63, %c128_64] : memref<8x8x256xbf16, #tpu.memory_space<vmem>>, vector<1x8x128xbf16>
    %281 = vector.shape_cast %280 : vector<1x8x128xbf16> to vector<8x128xbf16>
    %282 = vector.shape_cast %278 : vector<8x128xbf16> to vector<1x8x128xbf16>
    tpu.vector_store %arg3[%279, %c0_63, %c128_64], %282 {strides = array<i32>} : memref<8x8x256xbf16, #tpu.memory_space<vmem>>, vector<1x8x128xbf16>,
    %c5_i32 = arith.constant 5 : i32
    %c7_i32_65 = arith.constant 7 : i32
    %283 = arith.subi %c7_i32_65, %c5_i32 : i32
    %284 = arith.truncf %269 : vector<16x128xf32> to vector<16x128xbf16>
    %c0_66 = arith.constant 0 : index
    %c0_67 = arith.constant 0 : index
    %285 = vector.load %arg2[%c0_66, %c0_67] : memref<128x1024xbf16, #tpu.memory_space<vmem>>, vector<128x1024xbf16>
    %cst_68 = arith.constant dense<0.000000e+00> : vector<16x1024xf32>
    %286 = tpu.matmul %284, %285, %cst_68 {dimension_numbers = #tpu.dot_dimension_numbers<[1], [0], [0], [1], [0, 0, 1, 1], [], []>} : vector<16x128xbf16>, vector<128x1024xbf16>, vector<16x1024xf32> -> vector<16x1024xf32>
    %287 = vector.extract_strided_slice %286 {offsets = [0, 0], sizes = [16, 512], strides = [1, 1]} : vector<16x1024xf32> to vector<16x512xf32>
    %288 = vector.extract_strided_slice %286 {offsets = [0, 512], sizes = [16, 512], strides = [1, 1]} : vector<16x1024xf32> to vector<16x512xf32>
    %289 = arith.select %6, %287, %288 : vector<16x512xi1>, vector<16x512xf32>
    %290 = arith.index_cast %c5_i32 : i32 to index
    %c0_69 = arith.constant 0 : index
    %c0_70 = arith.constant 0 : index
    %291 = vector.load %arg0[%290, %c0_69, %c0_70] : memref<8x16x512xbf16, #tpu.memory_space<vmem>>, vector<1x16x512xbf16>
    %292 = vector.shape_cast %291 : vector<1x16x512xbf16> to vector<16x512xbf16>
    %293 = arith.extf %292 : vector<16x512xbf16> to vector<16x512xf32>
    %294 = arith.addf %293, %289 : vector<16x512xf32>
    %295 = vector.extract_strided_slice %294 {offsets = [0, 0], sizes = [16, 128], strides = [1, 1]} : vector<16x512xf32> to vector<16x128xf32>
    %296 = arith.negf %295 : vector<16x128xf32>
    %297 = math.exp %296 : vector<16x128xf32>
    %cst_71 = arith.constant 1.000000e+00 : f32
    %298 = vector.broadcast %cst_71 : f32 to vector<16x128xf32>
    %299 = arith.addf %298, %297 : vector<16x128xf32>
    %300 = arith.divf %298, %299 : vector<16x128xf32>
    %301 = vector.extract_strided_slice %294 {offsets = [0, 128], sizes = [16, 128], strides = [1, 1]} : vector<16x512xf32> to vector<16x128xf32>
    %302 = arith.negf %301 : vector<16x128xf32>
    %303 = math.exp %302 : vector<16x128xf32>
    %cst_72 = arith.constant 1.000000e+00 : f32
    %304 = vector.broadcast %cst_72 : f32 to vector<16x128xf32>
    %305 = arith.addf %304, %303 : vector<16x128xf32>
    %306 = arith.divf %304, %305 : vector<16x128xf32>
    %307 = vector.extract_strided_slice %294 {offsets = [0, 256], sizes = [16, 128], strides = [1, 1]} : vector<16x512xf32> to vector<16x128xf32>
    %308 = math.tanh %307 : vector<16x128xf32>
    %309 = vector.extract_strided_slice %294 {offsets = [0, 384], sizes = [16, 128], strides = [1, 1]} : vector<16x512xf32> to vector<16x128xf32>
    %310 = arith.negf %309 : vector<16x128xf32>
    %311 = math.exp %310 : vector<16x128xf32>
    %cst_73 = arith.constant 1.000000e+00 : f32
    %312 = vector.broadcast %cst_73 : f32 to vector<16x128xf32>
    %313 = arith.addf %312, %311 : vector<16x128xf32>
    %314 = arith.divf %312, %313 : vector<16x128xf32>
    %315 = arith.mulf %306, %270 : vector<16x128xf32>
    %316 = arith.mulf %300, %308 : vector<16x128xf32>
    %317 = arith.addf %315, %316 : vector<16x128xf32>
    %318 = math.tanh %317 : vector<16x128xf32>
    %319 = arith.mulf %314, %318 : vector<16x128xf32>
    %320 = vector.broadcast %c5_i32 : i32 to vector<16x128xi32>
    %321 = vector.broadcast %283 : i32 to vector<16x128xi32>
    %322 = arith.select %3, %320, %321 : vector<16x128xi1>, vector<16x128xi32>
    %323 = arith.cmpi sgt, %0, %322 : vector<16x128xi32>
    %324 = arith.select %323, %319, %269 : vector<16x128xi1>, vector<16x128xf32>
    %325 = arith.select %323, %317, %270 : vector<16x128xi1>, vector<16x128xf32>
    %326 = vector.extract_strided_slice %324 {offsets = [0, 0], sizes = [8, 128], strides = [1, 1]} : vector<16x128xf32> to vector<8x128xf32>
    %327 = arith.truncf %326 : vector<8x128xf32> to vector<8x128xbf16>
    %328 = arith.index_cast %c5_i32 : i32 to index
    %c0_74 = arith.constant 0 : index
    %c0_75 = arith.constant 0 : index
    %329 = vector.load %arg3[%328, %c0_74, %c0_75] : memref<8x8x256xbf16, #tpu.memory_space<vmem>>, vector<1x8x128xbf16>
    %330 = vector.shape_cast %329 : vector<1x8x128xbf16> to vector<8x128xbf16>
    %331 = vector.shape_cast %327 : vector<8x128xbf16> to vector<1x8x128xbf16>
    tpu.vector_store %arg3[%328, %c0_74, %c0_75], %331 {strides = array<i32>} : memref<8x8x256xbf16, #tpu.memory_space<vmem>>, vector<1x8x128xbf16>,
    %332 = vector.extract_strided_slice %324 {offsets = [8, 0], sizes = [8, 128], strides = [1, 1]} : vector<16x128xf32> to vector<8x128xf32>
    %333 = arith.truncf %332 : vector<8x128xf32> to vector<8x128xbf16>
    %334 = arith.index_cast %283 : i32 to index
    %c0_76 = arith.constant 0 : index
    %c128_77 = arith.constant 128 : index
    %335 = vector.load %arg3[%334, %c0_76, %c128_77] : memref<8x8x256xbf16, #tpu.memory_space<vmem>>, vector<1x8x128xbf16>
    %336 = vector.shape_cast %335 : vector<1x8x128xbf16> to vector<8x128xbf16>
    %337 = vector.shape_cast %333 : vector<8x128xbf16> to vector<1x8x128xbf16>
    tpu.vector_store %arg3[%334, %c0_76, %c128_77], %337 {strides = array<i32>} : memref<8x8x256xbf16, #tpu.memory_space<vmem>>, vector<1x8x128xbf16>,
    %c6_i32 = arith.constant 6 : i32
    %c7_i32_78 = arith.constant 7 : i32
    %338 = arith.subi %c7_i32_78, %c6_i32 : i32
    %339 = arith.truncf %324 : vector<16x128xf32> to vector<16x128xbf16>
    %c0_79 = arith.constant 0 : index
    %c0_80 = arith.constant 0 : index
    %340 = vector.load %arg2[%c0_79, %c0_80] : memref<128x1024xbf16, #tpu.memory_space<vmem>>, vector<128x1024xbf16>
    %cst_81 = arith.constant dense<0.000000e+00> : vector<16x1024xf32>
    %341 = tpu.matmul %339, %340, %cst_81 {dimension_numbers = #tpu.dot_dimension_numbers<[1], [0], [0], [1], [0, 0, 1, 1], [], []>} : vector<16x128xbf16>, vector<128x1024xbf16>, vector<16x1024xf32> -> vector<16x1024xf32>
    %342 = vector.extract_strided_slice %341 {offsets = [0, 0], sizes = [16, 512], strides = [1, 1]} : vector<16x1024xf32> to vector<16x512xf32>
    %343 = vector.extract_strided_slice %341 {offsets = [0, 512], sizes = [16, 512], strides = [1, 1]} : vector<16x1024xf32> to vector<16x512xf32>
    %344 = arith.select %6, %342, %343 : vector<16x512xi1>, vector<16x512xf32>
    %345 = arith.index_cast %c6_i32 : i32 to index
    %c0_82 = arith.constant 0 : index
    %c0_83 = arith.constant 0 : index
    %346 = vector.load %arg0[%345, %c0_82, %c0_83] : memref<8x16x512xbf16, #tpu.memory_space<vmem>>, vector<1x16x512xbf16>
    %347 = vector.shape_cast %346 : vector<1x16x512xbf16> to vector<16x512xbf16>
    %348 = arith.extf %347 : vector<16x512xbf16> to vector<16x512xf32>
    %349 = arith.addf %348, %344 : vector<16x512xf32>
    %350 = vector.extract_strided_slice %349 {offsets = [0, 0], sizes = [16, 128], strides = [1, 1]} : vector<16x512xf32> to vector<16x128xf32>
    %351 = arith.negf %350 : vector<16x128xf32>
    %352 = math.exp %351 : vector<16x128xf32>
    %cst_84 = arith.constant 1.000000e+00 : f32
    %353 = vector.broadcast %cst_84 : f32 to vector<16x128xf32>
    %354 = arith.addf %353, %352 : vector<16x128xf32>
    %355 = arith.divf %353, %354 : vector<16x128xf32>
    %356 = vector.extract_strided_slice %349 {offsets = [0, 128], sizes = [16, 128], strides = [1, 1]} : vector<16x512xf32> to vector<16x128xf32>
    %357 = arith.negf %356 : vector<16x128xf32>
    %358 = math.exp %357 : vector<16x128xf32>
    %cst_85 = arith.constant 1.000000e+00 : f32
    %359 = vector.broadcast %cst_85 : f32 to vector<16x128xf32>
    %360 = arith.addf %359, %358 : vector<16x128xf32>
    %361 = arith.divf %359, %360 : vector<16x128xf32>
    %362 = vector.extract_strided_slice %349 {offsets = [0, 256], sizes = [16, 128], strides = [1, 1]} : vector<16x512xf32> to vector<16x128xf32>
    %363 = math.tanh %362 : vector<16x128xf32>
    %364 = vector.extract_strided_slice %349 {offsets = [0, 384], sizes = [16, 128], strides = [1, 1]} : vector<16x512xf32> to vector<16x128xf32>
    %365 = arith.negf %364 : vector<16x128xf32>
    %366 = math.exp %365 : vector<16x128xf32>
    %cst_86 = arith.constant 1.000000e+00 : f32
    %367 = vector.broadcast %cst_86 : f32 to vector<16x128xf32>
    %368 = arith.addf %367, %366 : vector<16x128xf32>
    %369 = arith.divf %367, %368 : vector<16x128xf32>
    %370 = arith.mulf %361, %325 : vector<16x128xf32>
    %371 = arith.mulf %355, %363 : vector<16x128xf32>
    %372 = arith.addf %370, %371 : vector<16x128xf32>
    %373 = math.tanh %372 : vector<16x128xf32>
    %374 = arith.mulf %369, %373 : vector<16x128xf32>
    %375 = vector.broadcast %c6_i32 : i32 to vector<16x128xi32>
    %376 = vector.broadcast %338 : i32 to vector<16x128xi32>
    %377 = arith.select %3, %375, %376 : vector<16x128xi1>, vector<16x128xi32>
    %378 = arith.cmpi sgt, %0, %377 : vector<16x128xi32>
    %379 = arith.select %378, %374, %324 : vector<16x128xi1>, vector<16x128xf32>
    %380 = arith.select %378, %372, %325 : vector<16x128xi1>, vector<16x128xf32>
    %381 = vector.extract_strided_slice %379 {offsets = [0, 0], sizes = [8, 128], strides = [1, 1]} : vector<16x128xf32> to vector<8x128xf32>
    %382 = arith.truncf %381 : vector<8x128xf32> to vector<8x128xbf16>
    %383 = arith.index_cast %c6_i32 : i32 to index
    %c0_87 = arith.constant 0 : index
    %c0_88 = arith.constant 0 : index
    %384 = vector.load %arg3[%383, %c0_87, %c0_88] : memref<8x8x256xbf16, #tpu.memory_space<vmem>>, vector<1x8x128xbf16>
    %385 = vector.shape_cast %384 : vector<1x8x128xbf16> to vector<8x128xbf16>
    %386 = vector.shape_cast %382 : vector<8x128xbf16> to vector<1x8x128xbf16>
    tpu.vector_store %arg3[%383, %c0_87, %c0_88], %386 {strides = array<i32>} : memref<8x8x256xbf16, #tpu.memory_space<vmem>>, vector<1x8x128xbf16>,
    %387 = vector.extract_strided_slice %379 {offsets = [8, 0], sizes = [8, 128], strides = [1, 1]} : vector<16x128xf32> to vector<8x128xf32>
    %388 = arith.truncf %387 : vector<8x128xf32> to vector<8x128xbf16>
    %389 = arith.index_cast %338 : i32 to index
    %c0_89 = arith.constant 0 : index
    %c128_90 = arith.constant 128 : index
    %390 = vector.load %arg3[%389, %c0_89, %c128_90] : memref<8x8x256xbf16, #tpu.memory_space<vmem>>, vector<1x8x128xbf16>
    %391 = vector.shape_cast %390 : vector<1x8x128xbf16> to vector<8x128xbf16>
    %392 = vector.shape_cast %388 : vector<8x128xbf16> to vector<1x8x128xbf16>
    tpu.vector_store %arg3[%389, %c0_89, %c128_90], %392 {strides = array<i32>} : memref<8x8x256xbf16, #tpu.memory_space<vmem>>, vector<1x8x128xbf16>,
    %c7_i32_91 = arith.constant 7 : i32
    %c7_i32_92 = arith.constant 7 : i32
    %393 = arith.subi %c7_i32_92, %c7_i32_91 : i32
    %394 = arith.truncf %379 : vector<16x128xf32> to vector<16x128xbf16>
    %c0_93 = arith.constant 0 : index
    %c0_94 = arith.constant 0 : index
    %395 = vector.load %arg2[%c0_93, %c0_94] : memref<128x1024xbf16, #tpu.memory_space<vmem>>, vector<128x1024xbf16>
    %cst_95 = arith.constant dense<0.000000e+00> : vector<16x1024xf32>
    %396 = tpu.matmul %394, %395, %cst_95 {dimension_numbers = #tpu.dot_dimension_numbers<[1], [0], [0], [1], [0, 0, 1, 1], [], []>} : vector<16x128xbf16>, vector<128x1024xbf16>, vector<16x1024xf32> -> vector<16x1024xf32>
    %397 = vector.extract_strided_slice %396 {offsets = [0, 0], sizes = [16, 512], strides = [1, 1]} : vector<16x1024xf32> to vector<16x512xf32>
    %398 = vector.extract_strided_slice %396 {offsets = [0, 512], sizes = [16, 512], strides = [1, 1]} : vector<16x1024xf32> to vector<16x512xf32>
    %399 = arith.select %6, %397, %398 : vector<16x512xi1>, vector<16x512xf32>
    %400 = arith.index_cast %c7_i32_91 : i32 to index
    %c0_96 = arith.constant 0 : index
    %c0_97 = arith.constant 0 : index
    %401 = vector.load %arg0[%400, %c0_96, %c0_97] : memref<8x16x512xbf16, #tpu.memory_space<vmem>>, vector<1x16x512xbf16>
    %402 = vector.shape_cast %401 : vector<1x16x512xbf16> to vector<16x512xbf16>
    %403 = arith.extf %402 : vector<16x512xbf16> to vector<16x512xf32>
    %404 = arith.addf %403, %399 : vector<16x512xf32>
    %405 = vector.extract_strided_slice %404 {offsets = [0, 0], sizes = [16, 128], strides = [1, 1]} : vector<16x512xf32> to vector<16x128xf32>
    %406 = arith.negf %405 : vector<16x128xf32>
    %407 = math.exp %406 : vector<16x128xf32>
    %cst_98 = arith.constant 1.000000e+00 : f32
    %408 = vector.broadcast %cst_98 : f32 to vector<16x128xf32>
    %409 = arith.addf %408, %407 : vector<16x128xf32>
    %410 = arith.divf %408, %409 : vector<16x128xf32>
    %411 = vector.extract_strided_slice %404 {offsets = [0, 128], sizes = [16, 128], strides = [1, 1]} : vector<16x512xf32> to vector<16x128xf32>
    %412 = arith.negf %411 : vector<16x128xf32>
    %413 = math.exp %412 : vector<16x128xf32>
    %cst_99 = arith.constant 1.000000e+00 : f32
    %414 = vector.broadcast %cst_99 : f32 to vector<16x128xf32>
    %415 = arith.addf %414, %413 : vector<16x128xf32>
    %416 = arith.divf %414, %415 : vector<16x128xf32>
    %417 = vector.extract_strided_slice %404 {offsets = [0, 256], sizes = [16, 128], strides = [1, 1]} : vector<16x512xf32> to vector<16x128xf32>
    %418 = math.tanh %417 : vector<16x128xf32>
    %419 = vector.extract_strided_slice %404 {offsets = [0, 384], sizes = [16, 128], strides = [1, 1]} : vector<16x512xf32> to vector<16x128xf32>
    %420 = arith.negf %419 : vector<16x128xf32>
    %421 = math.exp %420 : vector<16x128xf32>
    %cst_100 = arith.constant 1.000000e+00 : f32
    %422 = vector.broadcast %cst_100 : f32 to vector<16x128xf32>
    %423 = arith.addf %422, %421 : vector<16x128xf32>
    %424 = arith.divf %422, %423 : vector<16x128xf32>
    %425 = arith.mulf %416, %380 : vector<16x128xf32>
    %426 = arith.mulf %410, %418 : vector<16x128xf32>
    %427 = arith.addf %425, %426 : vector<16x128xf32>
    %428 = math.tanh %427 : vector<16x128xf32>
    %429 = arith.mulf %424, %428 : vector<16x128xf32>
    %430 = vector.broadcast %c7_i32_91 : i32 to vector<16x128xi32>
    %431 = vector.broadcast %393 : i32 to vector<16x128xi32>
    %432 = arith.select %3, %430, %431 : vector<16x128xi1>, vector<16x128xi32>
    %433 = arith.cmpi sgt, %0, %432 : vector<16x128xi32>
    %434 = arith.select %433, %429, %379 : vector<16x128xi1>, vector<16x128xf32>
    %435 = arith.select %433, %427, %380 : vector<16x128xi1>, vector<16x128xf32>
    %436 = vector.extract_strided_slice %434 {offsets = [0, 0], sizes = [8, 128], strides = [1, 1]} : vector<16x128xf32> to vector<8x128xf32>
    %437 = arith.truncf %436 : vector<8x128xf32> to vector<8x128xbf16>
    %438 = arith.index_cast %c7_i32_91 : i32 to index
    %c0_101 = arith.constant 0 : index
    %c0_102 = arith.constant 0 : index
    %439 = vector.load %arg3[%438, %c0_101, %c0_102] : memref<8x8x256xbf16, #tpu.memory_space<vmem>>, vector<1x8x128xbf16>
    %440 = vector.shape_cast %439 : vector<1x8x128xbf16> to vector<8x128xbf16>
    %441 = vector.shape_cast %437 : vector<8x128xbf16> to vector<1x8x128xbf16>
    tpu.vector_store %arg3[%438, %c0_101, %c0_102], %441 {strides = array<i32>} : memref<8x8x256xbf16, #tpu.memory_space<vmem>>, vector<1x8x128xbf16>,
    %442 = vector.extract_strided_slice %434 {offsets = [8, 0], sizes = [8, 128], strides = [1, 1]} : vector<16x128xf32> to vector<8x128xf32>
    %443 = arith.truncf %442 : vector<8x128xf32> to vector<8x128xbf16>
    %444 = arith.index_cast %393 : i32 to index
    %c0_103 = arith.constant 0 : index
    %c128_104 = arith.constant 128 : index
    %445 = vector.load %arg3[%444, %c0_103, %c128_104] : memref<8x8x256xbf16, #tpu.memory_space<vmem>>, vector<1x8x128xbf16>
    %446 = vector.shape_cast %445 : vector<1x8x128xbf16> to vector<8x128xbf16>
    %447 = vector.shape_cast %443 : vector<8x128xbf16> to vector<1x8x128xbf16>
    tpu.vector_store %arg3[%444, %c0_103, %c128_104], %447 {strides = array<i32>} : memref<8x8x256xbf16, #tpu.memory_space<vmem>>, vector<1x8x128xbf16>,
    %c8_i32_105 = arith.constant 8 : i32
    return
  }
}

</mosaic_0001>

<llo_original>
// kernel: lstm_model_forward.2
$region0: #{lstm_model_forward.2}
  #allocation0 [shape = 'u32[]', space=smem, size = 0x4, offset = 0x4, fixed_abs, tag = 'smem constant byte address 0x4 - core index']
  #allocation1 [shape = 'u32[144,128]{1,0:T(1,128)}', space=vmem, size = 0x12000, scoped, tag = 'internal scratch']
  %s0 = inlined_call_operand.vmem [shape: bf16[8,16,512], index: 0, kind: input, shape index: {}]
  %s1 = inlined_call_operand.vmem [shape: s32[16,128], index: 1, kind: input, shape index: {}]
  %s2 = inlined_call_operand.vmem [shape: bf16[128,1024], index: 2, kind: input, shape index: {}]
  %s3 = inlined_call_operand.vmem [shape: bf16[8,8,256], index: 3, kind: output, shape index: {}]
  %s4 = sld [smem:[#allocation0]]
  $region22: #{lstm_model_forward.2} parent=0
    _
  %s6 = ssub.s32 1, %s4
  %s7 = scalar_select 0, %s6, %s4
  // Predicated region
  $region2: #{lstm_model_forward.2} parent=0 // pred_check
    _
  $region3: #{lstm_model_forward.2} parent=0 // pred_check_branch
    %9 = sbr.rel (0) target = $region5
  $region4: #{lstm_model_forward.2} parent=0 // pred_region
    _
  $region5: #{lstm_model_forward.2} parent=0 // pred_fallthru
    _
  // Predicated region
  $region6: #{lstm_model_forward.2} parent=0 // pred_check
    _
  $region7: #{lstm_model_forward.2} parent=0 // pred_check_branch
    %11 = sbr.rel (0) target = $region9
  $region8: #{lstm_model_forward.2} parent=0 // pred_region
    _
  $region9: #{lstm_model_forward.2} parent=0 // pred_fallthru
    _
  // Predicated region
  $region10: #{lstm_model_forward.2} parent=0 // pred_check
    _
  $region11: #{lstm_model_forward.2} parent=0 // pred_check_branch
    %13 = sbr.rel (0) target = $region13
  $region12: #{lstm_model_forward.2} parent=0 // pred_region
    _
  $region13: #{lstm_model_forward.2} parent=0 // pred_fallthru
    _
  %v15 = vld [vmem:[%s1] sm:$0xff]
  %v16 = vld [vmem:[%s1 + $0x8] sm:$0xff]
  %v17 = vlaneseq
  %v18 = vshrl.u32 %v17, 7
  %v19 = vadd.s32 %v18, 8
  %vm20 = vcmp.lt.s32.totalorder %v18, 8
  %vm21 = vcmp.lt.s32.totalorder %v19, 8
  %v22 = vld [vmem:[%s2] sm:$0xff]
  %v23 = vld [vmem:[%s2 + $0x8] sm:$0xff]
  %v24 = vld [vmem:[%s2 + $0x10] sm:$0xff]
  %v25 = vld [vmem:[%s2 + $0x18] sm:$0xff]
  %v26 = vld [vmem:[%s2 + $0x20] sm:$0xff]
  %v27 = vld [vmem:[%s2 + $0x28] sm:$0xff]
  %v28 = vld [vmem:[%s2 + $0x30] sm:$0xff]
  %v29 = vld [vmem:[%s2 + $0x38] sm:$0xff]
  %v30 = vld [vmem:[%s2 + $0x40] sm:$0xff]
  %v31 = vld [vmem:[%s2 + $0x48] sm:$0xff]
  %v32 = vld [vmem:[%s2 + $0x50] sm:$0xff]
  %v33 = vld [vmem:[%s2 + $0x58] sm:$0xff]
  %v34 = vld [vmem:[%s2 + $0x60] sm:$0xff]
  %v35 = vld [vmem:[%s2 + $0x68] sm:$0xff]
  %v36 = vld [vmem:[%s2 + $0x70] sm:$0xff]
  %v37 = vld [vmem:[%s2 + $0x78] sm:$0xff]
  %v38 = vld [vmem:[%s2 + $0x80] sm:$0xff]
  %v39 = vld [vmem:[%s2 + $0x88] sm:$0xff]
  %v40 = vld [vmem:[%s2 + $0x90] sm:$0xff]
  %v41 = vld [vmem:[%s2 + $0x98] sm:$0xff]
  %v42 = vld [vmem:[%s2 + $0xa0] sm:$0xff]
  %v43 = vld [vmem:[%s2 + $0xa8] sm:$0xff]
  %v44 = vld [vmem:[%s2 + $0xb0] sm:$0xff]
  %v45 = vld [vmem:[%s2 + $0xb8] sm:$0xff]
  %v46 = vld [vmem:[%s2 + $0xc0] sm:$0xff]
  %v47 = vld [vmem:[%s2 + $0xc8] sm:$0xff]
  %v48 = vld [vmem:[%s2 + $0xd0] sm:$0xff]
  %v49 = vld [vmem:[%s2 + $0xd8] sm:$0xff]
  %v50 = vld [vmem:[%s2 + $0xe0] sm:$0xff]
  %v51 = vld [vmem:[%s2 + $0xe8] sm:$0xff]
  %v52 = vld [vmem:[%s2 + $0xf0] sm:$0xff]
  %v53 = vld [vmem:[%s2 + $0xf8] sm:$0xff]
  %v54 = vld [vmem:[%s2 + $0x100] sm:$0xff]
  %v55 = vld [vmem:[%s2 + $0x108] sm:$0xff]
  %v56 = vld [vmem:[%s2 + $0x110] sm:$0xff]
  %v57 = vld [vmem:[%s2 + $0x118] sm:$0xff]
  %v58 = vld [vmem:[%s2 + $0x120] sm:$0xff]
  %v59 = vld [vmem:[%s2 + $0x128] sm:$0xff]
  %v60 = vld [vmem:[%s2 + $0x130] sm:$0xff]
  %v61 = vld [vmem:[%s2 + $0x138] sm:$0xff]
  %v62 = vld [vmem:[%s2 + $0x140] sm:$0xff]
  %v63 = vld [vmem:[%s2 + $0x148] sm:$0xff]
  %v64 = vld [vmem:[%s2 + $0x150] sm:$0xff]
  %v65 = vld [vmem:[%s2 + $0x158] sm:$0xff]
  %v66 = vld [vmem:[%s2 + $0x160] sm:$0xff]
  %v67 = vld [vmem:[%s2 + $0x168] sm:$0xff]
  %v68 = vld [vmem:[%s2 + $0x170] sm:$0xff]
  %v69 = vld [vmem:[%s2 + $0x178] sm:$0xff]
  %v70 = vld [vmem:[%s2 + $0x180] sm:$0xff]
  %v71 = vld [vmem:[%s2 + $0x188] sm:$0xff]
  %v72 = vld [vmem:[%s2 + $0x190] sm:$0xff]
  %v73 = vld [vmem:[%s2 + $0x198] sm:$0xff]
  %v74 = vld [vmem:[%s2 + $0x1a0] sm:$0xff]
  %v75 = vld [vmem:[%s2 + $0x1a8] sm:$0xff]
  %v76 = vld [vmem:[%s2 + $0x1b0] sm:$0xff]
  %v77 = vld [vmem:[%s2 + $0x1b8] sm:$0xff]
  %v78 = vld [vmem:[%s2 + $0x1c0] sm:$0xff]
  %v79 = vld [vmem:[%s2 + $0x1c8] sm:$0xff]
  %v80 = vld [vmem:[%s2 + $0x1d0] sm:$0xff]
  %v81 = vld [vmem:[%s2 + $0x1d8] sm:$0xff]
  %v82 = vld [vmem:[%s2 + $0x1e0] sm:$0xff]
  %v83 = vld [vmem:[%s2 + $0x1e8] sm:$0xff]
  %v84 = vld [vmem:[%s2 + $0x1f0] sm:$0xff]
  %v85 = vld [vmem:[%s2 + $0x1f8] sm:$0xff]
  %v150 = vunpack.c.l.b16 %v22
  %v151 = vunpack.c.h.b16 %v22
  %v152 = vunpack.c.l.b16 %v23
  %v153 = vunpack.c.h.b16 %v23
  %v154 = vunpack.c.l.b16 %v24
  %v155 = vunpack.c.h.b16 %v24
  %v156 = vunpack.c.l.b16 %v25
  %v157 = vunpack.c.h.b16 %v25
  %v158 = vunpack.c.l.b16 %v26
  %v159 = vunpack.c.h.b16 %v26
  %v160 = vunpack.c.l.b16 %v27
  %v161 = vunpack.c.h.b16 %v27
  %v162 = vunpack.c.l.b16 %v28
  %v163 = vunpack.c.h.b16 %v28
  %v164 = vunpack.c.l.b16 %v29
  %v165 = vunpack.c.h.b16 %v29
  %v166 = vunpack.c.l.b16 %v30
  %v167 = vunpack.c.h.b16 %v30
  %v168 = vunpack.c.l.b16 %v31
  %v169 = vunpack.c.h.b16 %v31
  %v170 = vunpack.c.l.b16 %v32
  %v171 = vunpack.c.h.b16 %v32
  %v172 = vunpack.c.l.b16 %v33
  %v173 = vunpack.c.h.b16 %v33
  %v174 = vunpack.c.l.b16 %v34
  %v175 = vunpack.c.h.b16 %v34
  %v176 = vunpack.c.l.b16 %v35
  %v177 = vunpack.c.h.b16 %v35
  %v178 = vunpack.c.l.b16 %v36
  %v179 = vunpack.c.h.b16 %v36
  %v180 = vunpack.c.l.b16 %v37
  %v181 = vunpack.c.h.b16 %v37
  %v182 = vunpack.c.l.b16 %v38
  %v183 = vunpack.c.h.b16 %v38
  %v184 = vunpack.c.l.b16 %v39
  %v185 = vunpack.c.h.b16 %v39
  %v186 = vunpack.c.l.b16 %v40
  %v187 = vunpack.c.h.b16 %v40
  %v188 = vunpack.c.l.b16 %v41
  %v189 = vunpack.c.h.b16 %v41
  %v190 = vunpack.c.l.b16 %v42
  %v191 = vunpack.c.h.b16 %v42
  %v192 = vunpack.c.l.b16 %v43
  %v193 = vunpack.c.h.b16 %v43
  %v194 = vunpack.c.l.b16 %v44
  %v195 = vunpack.c.h.b16 %v44
  %v196 = vunpack.c.l.b16 %v45
  %v197 = vunpack.c.h.b16 %v45
  %v198 = vunpack.c.l.b16 %v46
  %v199 = vunpack.c.h.b16 %v46
  %v200 = vunpack.c.l.b16 %v47
  %v201 = vunpack.c.h.b16 %v47
  %v202 = vunpack.c.l.b16 %v48
  %v203 = vunpack.c.h.b16 %v48
  %v204 = vunpack.c.l.b16 %v49
  %v205 = vunpack.c.h.b16 %v49
  %v206 = vunpack.c.l.b16 %v50
  %v207 = vunpack.c.h.b16 %v50
  %v208 = vunpack.c.l.b16 %v51
  %v209 = vunpack.c.h.b16 %v51
  %v210 = vunpack.c.l.b16 %v52
  %v211 = vunpack.c.h.b16 %v52
  %v212 = vunpack.c.l.b16 %v53
  %v213 = vunpack.c.h.b16 %v53
  %v214 = vunpack.c.l.b16 %v54
  %v215 = vunpack.c.h.b16 %v54
  %v216 = vunpack.c.l.b16 %v55
  %v217 = vunpack.c.h.b16 %v55
  %v218 = vunpack.c.l.b16 %v56
  %v219 = vunpack.c.h.b16 %v56
  %v220 = vunpack.c.l.b16 %v57
  %v221 = vunpack.c.h.b16 %v57
  %v222 = vunpack.c.l.b16 %v58
  %v223 = vunpack.c.h.b16 %v58
  %v224 = vunpack.c.l.b16 %v59
  %v225 = vunpack.c.h.b16 %v59
  %v226 = vunpack.c.l.b16 %v60
  %v227 = vunpack.c.h.b16 %v60
  %v228 = vunpack.c.l.b16 %v61
  %v229 = vunpack.c.h.b16 %v61
  %v230 = vunpack.c.l.b16 %v62
  %v231 = vunpack.c.h.b16 %v62
  %v232 = vunpack.c.l.b16 %v63
  %v233 = vunpack.c.h.b16 %v63
  %v234 = vunpack.c.l.b16 %v64
  %v235 = vunpack.c.h.b16 %v64
  %v236 = vunpack.c.l.b16 %v65
  %v237 = vunpack.c.h.b16 %v65
  %v238 = vunpack.c.l.b16 %v66
  %v239 = vunpack.c.h.b16 %v66
  %v240 = vunpack.c.l.b16 %v67
  %v241 = vunpack.c.h.b16 %v67
  %v242 = vunpack.c.l.b16 %v68
  %v243 = vunpack.c.h.b16 %v68
  %v244 = vunpack.c.l.b16 %v69
  %v245 = vunpack.c.h.b16 %v69
  %v246 = vunpack.c.l.b16 %v70
  %v247 = vunpack.c.h.b16 %v70
  %v248 = vunpack.c.l.b16 %v71
  %v249 = vunpack.c.h.b16 %v71
  %v250 = vunpack.c.l.b16 %v72
  %v251 = vunpack.c.h.b16 %v72
  %v252 = vunpack.c.l.b16 %v73
  %v253 = vunpack.c.h.b16 %v73
  %v254 = vunpack.c.l.b16 %v74
  %v255 = vunpack.c.h.b16 %v74
  %v256 = vunpack.c.l.b16 %v75
  %v257 = vunpack.c.h.b16 %v75
  %v258 = vunpack.c.l.b16 %v76
  %v259 = vunpack.c.h.b16 %v76
  %v260 = vunpack.c.l.b16 %v77
  %v261 = vunpack.c.h.b16 %v77
  %v262 = vunpack.c.l.b16 %v78
  %v263 = vunpack.c.h.b16 %v78
  %v264 = vunpack.c.l.b16 %v79
  %v265 = vunpack.c.h.b16 %v79
  %v266 = vunpack.c.l.b16 %v80
  %v267 = vunpack.c.h.b16 %v80
  %v268 = vunpack.c.l.b16 %v81
  %v269 = vunpack.c.h.b16 %v81
  %v270 = vunpack.c.l.b16 %v82
  %v271 = vunpack.c.h.b16 %v82
  %v272 = vunpack.c.l.b16 %v83
  %v273 = vunpack.c.h.b16 %v83
  %v274 = vunpack.c.l.b16 %v84
  %v275 = vunpack.c.h.b16 %v84
  %v276 = vunpack.c.l.b16 %v85
  %v277 = vunpack.c.h.b16 %v85
  %v278 = vpack.c.b16 %v158, %v150
  %v279 = vpack.c.b16 %v159, %v151
  %v280 = vpack.c.b16 %v160, %v152
  %v281 = vpack.c.b16 %v161, %v153
  %v282 = vpack.c.b16 %v162, %v154
  %v283 = vpack.c.b16 %v163, %v155
  %v284 = vpack.c.b16 %v164, %v156
  %v285 = vpack.c.b16 %v165, %v157
  %v286 = vpack.c.b16 %v174, %v166
  %v287 = vpack.c.b16 %v175, %v167
  %v288 = vpack.c.b16 %v176, %v168
  %v289 = vpack.c.b16 %v177, %v169
  %v290 = vpack.c.b16 %v178, %v170
  %v291 = vpack.c.b16 %v179, %v171
  %v292 = vpack.c.b16 %v180, %v172
  %v293 = vpack.c.b16 %v181, %v173
  %v294 = vpack.c.b16 %v190, %v182
  %v295 = vpack.c.b16 %v191, %v183
  %v296 = vpack.c.b16 %v192, %v184
  %v297 = vpack.c.b16 %v193, %v185
  %v298 = vpack.c.b16 %v194, %v186
  %v299 = vpack.c.b16 %v195, %v187
  %v300 = vpack.c.b16 %v196, %v188
  %v301 = vpack.c.b16 %v197, %v189
  %v302 = vpack.c.b16 %v206, %v198
  %v303 = vpack.c.b16 %v207, %v199
  %v304 = vpack.c.b16 %v208, %v200
  %v305 = vpack.c.b16 %v209, %v201
  %v306 = vpack.c.b16 %v210, %v202
  %v307 = vpack.c.b16 %v211, %v203
  %v308 = vpack.c.b16 %v212, %v204
  %v309 = vpack.c.b16 %v213, %v205
  %v310 = vpack.c.b16 %v222, %v214
  %v311 = vpack.c.b16 %v223, %v215
  %v312 = vpack.c.b16 %v224, %v216
  %v313 = vpack.c.b16 %v225, %v217
  %v314 = vpack.c.b16 %v226, %v218
  %v315 = vpack.c.b16 %v227, %v219
  %v316 = vpack.c.b16 %v228, %v220
  %v317 = vpack.c.b16 %v229, %v221
  %v318 = vpack.c.b16 %v238, %v230
  %v319 = vpack.c.b16 %v239, %v231
  %v320 = vpack.c.b16 %v240, %v232
  %v321 = vpack.c.b16 %v241, %v233
  %v322 = vpack.c.b16 %v242, %v234
  %v323 = vpack.c.b16 %v243, %v235
  %v324 = vpack.c.b16 %v244, %v236
  %v325 = vpack.c.b16 %v245, %v237
  %v326 = vpack.c.b16 %v254, %v246
  %v327 = vpack.c.b16 %v255, %v247
  %v328 = vpack.c.b16 %v256, %v248
  %v329 = vpack.c.b16 %v257, %v249
  %v330 = vpack.c.b16 %v258, %v250
  %v331 = vpack.c.b16 %v259, %v251
  %v332 = vpack.c.b16 %v260, %v252
  %v333 = vpack.c.b16 %v261, %v253
  %v334 = vpack.c.b16 %v270, %v262
  %v335 = vpack.c.b16 %v271, %v263
  %v336 = vpack.c.b16 %v272, %v264
  %v337 = vpack.c.b16 %v273, %v265
  %v338 = vpack.c.b16 %v274, %v266
  %v339 = vpack.c.b16 %v275, %v267
  %v340 = vpack.c.b16 %v276, %v268
  %v341 = vpack.c.b16 %v277, %v269
  %406 = vmatprep.subr.bf16.mxu0 %v335
  %407 = vmatpush1.bf16.msra.mxu0 %v334
  %408 = vmatprep.subr.bf16.mxu0 %v327
  %409 = vmatpush1.bf16.msra.mxu0 %v326
  %410 = vmatprep.subr.bf16.mxu0 %v319
  %411 = vmatpush1.bf16.msra.mxu0 %v318
  %412 = vmatprep.subr.bf16.mxu0 %v311
  %413 = vmatpush1.bf16.msra.mxu0 %v310
  %414 = vmatprep.subr.bf16.mxu0 %v303
  %415 = vmatpush1.bf16.msra.mxu0 %v302
  %416 = vmatprep.subr.bf16.mxu0 %v295
  %417 = vmatpush1.bf16.msra.mxu0 %v294
  %418 = vmatprep.subr.bf16.mxu0 %v287
  %419 = vmatpush1.bf16.msra.mxu0 %v286
  %420 = vmatprep.subr.bf16.mxu0 %v279
  %421 = vmatpush1.bf16.msra.mxu0 %v278
  %422 = vmatprep.subr.bf16.mxu0 0
  %423 = vmatpush2.bf16.msra.mxu0 0
  %424 = vmatprep.subr.bf16.mxu0 0
  %425 = vmatpush2.bf16.msra.mxu0 0
  %426 = vmatprep.subr.bf16.mxu0 0
  %427 = vmatpush2.bf16.msra.mxu0 0
  %428 = vmatprep.subr.bf16.mxu0 0
  %429 = vmatpush2.bf16.msra.mxu0 0
  %430 = vmatprep.subr.bf16.mxu0 0
  %431 = vmatpush2.bf16.msra.mxu0 0
  %432 = vmatprep.subr.bf16.mxu0 0
  %433 = vmatpush2.bf16.msra.mxu0 0
  %434 = vmatprep.subr.bf16.mxu0 0
  %435 = vmatpush2.bf16.msra.mxu0 0
  %436 = vmatprep.subr.bf16.mxu0 0
  %437 = vmatpush2.bf16.msra.mxu0 0
  %438 = vmatprep.mubr.bf16.mxu0 0
  %439 = vmatmul.mubr.bf16.gmra.mxu0 0
  %v440 = vpop.f32.mrf.mxu0
  %v441 = vadd.f32 0.0, %v440
  %v442 = vpop.f32.mrf.mxu0
  %v443 = vadd.f32 0.0, %v442
  %v444 = vpop.f32.mrf.mxu0
  %v445 = vadd.f32 0.0, %v444
  %v446 = vpop.f32.mrf.mxu0
  %v447 = vadd.f32 0.0, %v446
  %448 = vdwg.mxu0
  %449 = vmatprep.subr.bf16.mxu0 %v337
  %450 = vmatpush1.bf16.msra.mxu0 %v336
  %451 = vmatprep.subr.bf16.mxu0 %v329
  %452 = vmatpush1.bf16.msra.mxu0 %v328
  %453 = vmatprep.subr.bf16.mxu0 %v321
  %454 = vmatpush1.bf16.msra.mxu0 %v320
  %455 = vmatprep.subr.bf16.mxu0 %v313
  %456 = vmatpush1.bf16.msra.mxu0 %v312
  %457 = vmatprep.subr.bf16.mxu0 %v305
  %458 = vmatpush1.bf16.msra.mxu0 %v304
  %459 = vmatprep.subr.bf16.mxu0 %v297
  %460 = vmatpush1.bf16.msra.mxu0 %v296
  %461 = vmatprep.subr.bf16.mxu0 %v289
  %462 = vmatpush1.bf16.msra.mxu0 %v288
  %463 = vmatprep.subr.bf16.mxu0 %v281
  %464 = vmatpush1.bf16.msra.mxu0 %v280
  %465 = vmatprep.subr.bf16.mxu0 0
  %466 = vmatpush2.bf16.msra.mxu0 0
  %467 = vmatprep.subr.bf16.mxu0 0
  %468 = vmatpush2.bf16.msra.mxu0 0
  %469 = vmatprep.subr.bf16.mxu0 0
  %470 = vmatpush2.bf16.msra.mxu0 0
  %471 = vmatprep.subr.bf16.mxu0 0
  %472 = vmatpush2.bf16.msra.mxu0 0
  %473 = vmatprep.subr.bf16.mxu0 0
  %474 = vmatpush2.bf16.msra.mxu0 0
  %475 = vmatprep.subr.bf16.mxu0 0
  %476 = vmatpush2.bf16.msra.mxu0 0
  %477 = vmatprep.subr.bf16.mxu0 0
  %478 = vmatpush2.bf16.msra.mxu0 0
  %479 = vmatprep.subr.bf16.mxu0 0
  %480 = vmatpush2.bf16.msra.mxu0 0
  %481 = vmatprep.mubr.bf16.mxu0 0
  %482 = vmatmul.mubr.bf16.gmra.mxu0 0
  %v483 = vpop.f32.mrf.mxu0
  %v484 = vadd.f32 0.0, %v483
  %v485 = vpop.f32.mrf.mxu0
  %v486 = vadd.f32 0.0, %v485
  %v487 = vpop.f32.mrf.mxu0
  %v488 = vadd.f32 0.0, %v487
  %v489 = vpop.f32.mrf.mxu0
  %v490 = vadd.f32 0.0, %v489
  %491 = vdwg.mxu0
  %492 = vmatprep.subr.bf16.mxu0 %v339
  %493 = vmatpush1.bf16.msra.mxu0 %v338
  %494 = vmatprep.subr.bf16.mxu0 %v331
  %495 = vmatpush1.bf16.msra.mxu0 %v330
  %496 = vmatprep.subr.bf16.mxu0 %v323
  %497 = vmatpush1.bf16.msra.mxu0 %v322
  %498 = vmatprep.subr.bf16.mxu0 %v315
  %499 = vmatpush1.bf16.msra.mxu0 %v314
  %500 = vmatprep.subr.bf16.mxu0 %v307
  %501 = vmatpush1.bf16.msra.mxu0 %v306
  %502 = vmatprep.subr.bf16.mxu0 %v299
  %503 = vmatpush1.bf16.msra.mxu0 %v298
  %504 = vmatprep.subr.bf16.mxu0 %v291
  %505 = vmatpush1.bf16.msra.mxu0 %v290
  %506 = vmatprep.subr.bf16.mxu0 %v283
  %507 = vmatpush1.bf16.msra.mxu0 %v282
  %508 = vmatprep.subr.bf16.mxu0 0
  %509 = vmatpush2.bf16.msra.mxu0 0
  %510 = vmatprep.subr.bf16.mxu0 0
  %511 = vmatpush2.bf16.msra.mxu0 0
  %512 = vmatprep.subr.bf16.mxu0 0
  %513 = vmatpush2.bf16.msra.mxu0 0
  %514 = vmatprep.subr.bf16.mxu0 0
  %515 = vmatpush2.bf16.msra.mxu0 0
  %516 = vmatprep.subr.bf16.mxu0 0
  %517 = vmatpush2.bf16.msra.mxu0 0
  %518 = vmatprep.subr.bf16.mxu0 0
  %519 = vmatpush2.bf16.msra.mxu0 0
  %520 = vmatprep.subr.bf16.mxu0 0
  %521 = vmatpush2.bf16.msra.mxu0 0
  %522 = vmatprep.subr.bf16.mxu0 0
  %523 = vmatpush2.bf16.msra.mxu0 0
  %524 = vmatprep.mubr.bf16.mxu0 0
  %525 = vmatmul.mubr.bf16.gmra.mxu0 0
  %v526 = vpop.f32.mrf.mxu0
  %v527 = vadd.f32 0.0, %v526
  %v528 = vpop.f32.mrf.mxu0
  %v529 = vadd.f32 0.0, %v528
  %v530 = vpop.f32.mrf.mxu0
  %v531 = vadd.f32 0.0, %v530
  %v532 = vpop.f32.mrf.mxu0
  %v533 = vadd.f32 0.0, %v532
  %534 = vdwg.mxu0
  %535 = vmatprep.subr.bf16.mxu0 %v341
  %536 = vmatpush1.bf16.msra.mxu0 %v340
  %537 = vmatprep.subr.bf16.mxu0 %v333
  %538 = vmatpush1.bf16.msra.mxu0 %v332
  %539 = vmatprep.subr.bf16.mxu0 %v325
  %540 = vmatpush1.bf16.msra.mxu0 %v324
  %541 = vmatprep.subr.bf16.mxu0 %v317
  %542 = vmatpush1.bf16.msra.mxu0 %v316
  %543 = vmatprep.subr.bf16.mxu0 %v309
  %544 = vmatpush1.bf16.msra.mxu0 %v308
  %545 = vmatprep.subr.bf16.mxu0 %v301
  %546 = vmatpush1.bf16.msra.mxu0 %v300
  %547 = vmatprep.subr.bf16.mxu0 %v293
  %548 = vmatpush1.bf16.msra.mxu0 %v292
  %549 = vmatprep.subr.bf16.mxu0 %v285
  %550 = vmatpush1.bf16.msra.mxu0 %v284
  %551 = vmatprep.subr.bf16.mxu0 0
  %552 = vmatpush2.bf16.msra.mxu0 0
  %553 = vmatprep.subr.bf16.mxu0 0
  %554 = vmatpush2.bf16.msra.mxu0 0
  %555 = vmatprep.subr.bf16.mxu0 0
  %556 = vmatpush2.bf16.msra.mxu0 0
  %557 = vmatprep.subr.bf16.mxu0 0
  %558 = vmatpush2.bf16.msra.mxu0 0
  %559 = vmatprep.subr.bf16.mxu0 0
  %560 = vmatpush2.bf16.msra.mxu0 0
  %561 = vmatprep.subr.bf16.mxu0 0
  %562 = vmatpush2.bf16.msra.mxu0 0
  %563 = vmatprep.subr.bf16.mxu0 0
  %564 = vmatpush2.bf16.msra.mxu0 0
  %565 = vmatprep.subr.bf16.mxu0 0
  %566 = vmatpush2.bf16.msra.mxu0 0
  %567 = vmatprep.mubr.bf16.mxu0 0
  %568 = vmatmul.mubr.bf16.gmra.mxu0 0
  %v569 = vpop.f32.mrf.mxu0
  %v570 = vadd.f32 0.0, %v569
  %v571 = vpop.f32.mrf.mxu0
  %v572 = vadd.f32 0.0, %v571
  %v573 = vpop.f32.mrf.mxu0
  %v574 = vadd.f32 0.0, %v573
  %v575 = vpop.f32.mrf.mxu0
  %v576 = vadd.f32 0.0, %v575
  %577 = vdwg.mxu0
  %v578 = vsel %vm20, %v441, %v527
  %v579 = vsel %vm20, %v443, %v529
  %v580 = vsel %vm20, %v484, %v570
  %v581 = vsel %vm20, %v486, %v572
  %v582 = vsel %vm21, %v445, %v531
  %v583 = vsel %vm21, %v447, %v533
  %v584 = vsel %vm21, %v488, %v574
  %v585 = vsel %vm21, %v490, %v576
  %v586 = vld [vmem:[%s0] sm:$0xff]
  %v587 = vld [vmem:[%s0 + $0x8] sm:$0xff]
  %v588 = vld [vmem:[%s0 + $0x10] sm:$0xff]
  %v589 = vld [vmem:[%s0 + $0x18] sm:$0xff]
  %v590 = vunpack.c.l.bf16 %v586
  %v591 = vunpack.c.h.bf16 %v586
  %v592 = vunpack.c.l.bf16 %v587
  %v593 = vunpack.c.h.bf16 %v587
  %v594 = vunpack.c.l.bf16 %v588
  %v595 = vunpack.c.h.bf16 %v588
  %v596 = vunpack.c.l.bf16 %v589
  %v597 = vunpack.c.h.bf16 %v589
  %v598 = vadd.f32 %v590, %v578
  %v599 = vadd.f32 %v591, %v579
  %v600 = vadd.f32 %v592, %v580
  %v601 = vadd.f32 %v593, %v581
  %v602 = vadd.f32 %v594, %v582
  %v603 = vadd.f32 %v595, %v583
  %v604 = vadd.f32 %v596, %v584
  %v605 = vadd.f32 %v597, %v585
  %v606 = vxor.u32 %v598, 2147483648
  %v607 = vxor.u32 %v602, 2147483648
  %v608 = vmul.f32 %v606, 1.442695
  %v609 = vpow.pop %v608
  %v610 = vmul.f32 %v607, 1.442695
  %v611 = vpow.pop %v610
  %v612 = vadd.f32 %v609, 1.0
  %v613 = vadd.f32 %v611, 1.0
  %v614 = vrcp.pop %v612
  %v615 = vmul.f32 1.0, %v614
  %v616 = vrcp.pop %v613
  %v617 = vmul.f32 1.0, %v616
  %v618 = vxor.u32 %v599, 2147483648
  %v619 = vxor.u32 %v603, 2147483648
  %v620 = vmul.f32 %v618, 1.442695
  %v621 = vpow.pop %v620
  %v622 = vmul.f32 %v619, 1.442695
  %v623 = vpow.pop %v622
  %v624 = vadd.f32 %v621, 1.0
  %v625 = vadd.f32 %v623, 1.0
  %v626 = vrcp.pop %v624
  %v627 = vmul.f32 1.0, %v626
  %v628 = vrcp.pop %v625
  %v629 = vmul.f32 1.0, %v628
  %v630 = vtanh.pop %v600
  %v631 = vtanh.pop %v604
  %v632 = vxor.u32 %v601, 2147483648
  %v633 = vxor.u32 %v605, 2147483648
  %v634 = vmul.f32 %v632, 1.442695
  %v635 = vpow.pop %v634
  %v636 = vmul.f32 %v633, 1.442695
  %v637 = vpow.pop %v636
  %v638 = vadd.f32 %v635, 1.0
  %v639 = vadd.f32 %v637, 1.0
  %v640 = vrcp.pop %v638
  %v641 = vmul.f32 1.0, %v640
  %v642 = vrcp.pop %v639
  %v643 = vmul.f32 1.0, %v642
  %v644 = vmul.f32 %v627, 0.0
  %v645 = vmul.f32 %v629, 0.0
  %v646 = vmul.f32 %v615, %v630
  %v647 = vmul.f32 %v617, %v631
  %v648 = vadd.f32 %v644, %v646
  %v649 = vadd.f32 %v645, %v647
  %v650 = vtanh.pop %v648
  %v651 = vtanh.pop %v649
  %v652 = vmul.f32 %v641, %v650
  %v653 = vmul.f32 %v643, %v651
  %v654 = vsel %vm20, 0, 7
  %v655 = vsel %vm21, 0, 7
  %vm656 = vcmp.gt.s32.totalorder %v15, %v654
  %vm657 = vcmp.gt.s32.totalorder %v16, %v655
  %v658 = vsel %vm656, %v652, 0.0
  %v659 = vsel %vm657, %v653, 0.0
  %v660 = vsel %vm656, %v648, 0.0
  %v661 = vsel %vm657, %v649, 0.0
  %v662 = vpack.c.bf16 %v658, %v658
  %663 = vst [vmem:[%s3] sm:$0xf] %v662
  %v664 = vpack.c.bf16 %v659, %v659
  %s665 = scalar_lea.vmem %s3, 56
  %666 = vst [vmem:[%s665 + $0x4] sm:$0xf] %v664
  %v667 = vpack.c.bf16 %v659, %v658
  %v668 = vld [vmem:[%s2] sm:$0xff]
  %v669 = vld [vmem:[%s2 + $0x8] sm:$0xff]
  %v670 = vld [vmem:[%s2 + $0x10] sm:$0xff]
  %v671 = vld [vmem:[%s2 + $0x18] sm:$0xff]
  %v672 = vld [vmem:[%s2 + $0x20] sm:$0xff]
  %v673 = vld [vmem:[%s2 + $0x28] sm:$0xff]
  %v674 = vld [vmem:[%s2 + $0x30] sm:$0xff]
  %v675 = vld [vmem:[%s2 + $0x38] sm:$0xff]
  %v676 = vld [vmem:[%s2 + $0x40] sm:$0xff]
  %v677 = vld [vmem:[%s2 + $0x48] sm:$0xff]
  %v678 = vld [vmem:[%s2 + $0x50] sm:$0xff]
  %v679 = vld [vmem:[%s2 + $0x58] sm:$0xff]
  %v680 = vld [vmem:[%s2 + $0x60] sm:$0xff]
  %v681 = vld [vmem:[%s2 + $0x68] sm:$0xff]
  %v682 = vld [vmem:[%s2 + $0x70] sm:$0xff]
  %v683 = vld [vmem:[%s2 + $0x78] sm:$0xff]
  %v684 = vld [vmem:[%s2 + $0x80] sm:$0xff]
  %v685 = vld [vmem:[%s2 + $0x88] sm:$0xff]
  %v686 = vld [vmem:[%s2 + $0x90] sm:$0xff]
  %v687 = vld [vmem:[%s2 + $0x98] sm:$0xff]
  %v688 = vld [vmem:[%s2 + $0xa0] sm:$0xff]
  %v689 = vld [vmem:[%s2 + $0xa8] sm:$0xff]
  %v690 = vld [vmem:[%s2 + $0xb0] sm:$0xff]
  %v691 = vld [vmem:[%s2 + $0xb8] sm:$0xff]
  %v692 = vld [vmem:[%s2 + $0xc0] sm:$0xff]
  %v693 = vld [vmem:[%s2 + $0xc8] sm:$0xff]
  %v694 = vld [vmem:[%s2 + $0xd0] sm:$0xff]
  %v695 = vld [vmem:[%s2 + $0xd8] sm:$0xff]
  %v696 = vld [vmem:[%s2 + $0xe0] sm:$0xff]
  %v697 = vld [vmem:[%s2 + $0xe8] sm:$0xff]
  %v698 = vld [vmem:[%s2 + $0xf0] sm:$0xff]
  %v699 = vld [vmem:[%s2 + $0xf8] sm:$0xff]
  %v700 = vld [vmem:[%s2 + $0x100] sm:$0xff]
  %v701 = vld [vmem:[%s2 + $0x108] sm:$0xff]
  %v702 = vld [vmem:[%s2 + $0x110] sm:$0xff]
  %v703 = vld [vmem:[%s2 + $0x118] sm:$0xff]
  %v704 = vld [vmem:[%s2 + $0x120] sm:$0xff]
  %v705 = vld [vmem:[%s2 + $0x128] sm:$0xff]
  %v706 = vld [vmem:[%s2 + $0x130] sm:$0xff]
  %v707 = vld [vmem:[%s2 + $0x138] sm:$0xff]
  %v708 = vld [vmem:[%s2 + $0x140] sm:$0xff]
  %v709 = vld [vmem:[%s2 + $0x148] sm:$0xff]
  %v710 = vld [vmem:[%s2 + $0x150] sm:$0xff]
  %v711 = vld [vmem:[%s2 + $0x158] sm:$0xff]
  %v712 = vld [vmem:[%s2 + $0x160] sm:$0xff]
  %v713 = vld [vmem:[%s2 + $0x168] sm:$0xff]
  %v714 = vld [vmem:[%s2 + $0x170] sm:$0xff]
  %v715 = vld [vmem:[%s2 + $0x178] sm:$0xff]
  %v716 = vld [vmem:[%s2 + $0x180] sm:$0xff]
  %v717 = vld [vmem:[%s2 + $0x188] sm:$0xff]
  %v718 = vld [vmem:[%s2 + $0x190] sm:$0xff]
  %v719 = vld [vmem:[%s2 + $0x198] sm:$0xff]
  %v720 = vld [vmem:[%s2 + $0x1a0] sm:$0xff]
  %v721 = vld [vmem:[%s2 + $0x1a8] sm:$0xff]
  %v722 = vld [vmem:[%s2 + $0x1b0] sm:$0xff]
  %v723 = vld [vmem:[%s2 + $0x1b8] sm:$0xff]
  %v724 = vld [vmem:[%s2 + $0x1c0] sm:$0xff]
  %v725 = vld [vmem:[%s2 + $0x1c8] sm:$0xff]
  %v726 = vld [vmem:[%s2 + $0x1d0] sm:$0xff]
  %v727 = vld [vmem:[%s2 + $0x1d8] sm:$0xff]
  %v728 = vld [vmem:[%s2 + $0x1e0] sm:$0xff]
  %v729 = vld [vmem:[%s2 + $0x1e8] sm:$0xff]
  %v730 = vld [vmem:[%s2 + $0x1f0] sm:$0xff]
  %v731 = vld [vmem:[%s2 + $0x1f8] sm:$0xff]
  %v796 = vunpack.c.l.b16 %v668
  %v797 = vunpack.c.h.b16 %v668
  %v798 = vunpack.c.l.b16 %v669
  %v799 = vunpack.c.h.b16 %v669
  %v800 = vunpack.c.l.b16 %v670
  %v801 = vunpack.c.h.b16 %v670
  %v802 = vunpack.c.l.b16 %v671
  %v803 = vunpack.c.h.b16 %v671
  %v804 = vunpack.c.l.b16 %v672
  %v805 = vunpack.c.h.b16 %v672
  %v806 = vunpack.c.l.b16 %v673
  %v807 = vunpack.c.h.b16 %v673
  %v808 = vunpack.c.l.b16 %v674
  %v809 = vunpack.c.h.b16 %v674
  %v810 = vunpack.c.l.b16 %v675
  %v811 = vunpack.c.h.b16 %v675
  %v812 = vunpack.c.l.b16 %v676
  %v813 = vunpack.c.h.b16 %v676
  %v814 = vunpack.c.l.b16 %v677
  %v815 = vunpack.c.h.b16 %v677
  %v816 = vunpack.c.l.b16 %v678
  %v817 = vunpack.c.h.b16 %v678
  %v818 = vunpack.c.l.b16 %v679
  %v819 = vunpack.c.h.b16 %v679
  %v820 = vunpack.c.l.b16 %v680
  %v821 = vunpack.c.h.b16 %v680
  %v822 = vunpack.c.l.b16 %v681
  %v823 = vunpack.c.h.b16 %v681
  %v824 = vunpack.c.l.b16 %v682
  %v825 = vunpack.c.h.b16 %v682
  %v826 = vunpack.c.l.b16 %v683
  %v827 = vunpack.c.h.b16 %v683
  %v828 = vunpack.c.l.b16 %v684
  %v829 = vunpack.c.h.b16 %v684
  %v830 = vunpack.c.l.b16 %v685
  %v831 = vunpack.c.h.b16 %v685
  %v832 = vunpack.c.l.b16 %v686
  %v833 = vunpack.c.h.b16 %v686
  %v834 = vunpack.c.l.b16 %v687
  %v835 = vunpack.c.h.b16 %v687
  %v836 = vunpack.c.l.b16 %v688
  %v837 = vunpack.c.h.b16 %v688
  %v838 = vunpack.c.l.b16 %v689
  %v839 = vunpack.c.h.b16 %v689
  %v840 = vunpack.c.l.b16 %v690
  %v841 = vunpack.c.h.b16 %v690
  %v842 = vunpack.c.l.b16 %v691
  %v843 = vunpack.c.h.b16 %v691
  %v844 = vunpack.c.l.b16 %v692
  %v845 = vunpack.c.h.b16 %v692
  %v846 = vunpack.c.l.b16 %v693
  %v847 = vunpack.c.h.b16 %v693
  %v848 = vunpack.c.l.b16 %v694
  %v849 = vunpack.c.h.b16 %v694
  %v850 = vunpack.c.l.b16 %v695
  %v851 = vunpack.c.h.b16 %v695
  %v852 = vunpack.c.l.b16 %v696
  %v853 = vunpack.c.h.b16 %v696
  %v854 = vunpack.c.l.b16 %v697
  %v855 = vunpack.c.h.b16 %v697
  %v856 = vunpack.c.l.b16 %v698
  %v857 = vunpack.c.h.b16 %v698
  %v858 = vunpack.c.l.b16 %v699
  %v859 = vunpack.c.h.b16 %v699
  %v860 = vunpack.c.l.b16 %v700
  %v861 = vunpack.c.h.b16 %v700
  %v862 = vunpack.c.l.b16 %v701
  %v863 = vunpack.c.h.b16 %v701
  %v864 = vunpack.c.l.b16 %v702
  %v865 = vunpack.c.h.b16 %v702
  %v866 = vunpack.c.l.b16 %v703
  %v867 = vunpack.c.h.b16 %v703
  %v868 = vunpack.c.l.b16 %v704
  %v869 = vunpack.c.h.b16 %v704
  %v870 = vunpack.c.l.b16 %v705
  %v871 = vunpack.c.h.b16 %v705
  %v872 = vunpack.c.l.b16 %v706
  %v873 = vunpack.c.h.b16 %v706
  %v874 = vunpack.c.l.b16 %v707
  %v875 = vunpack.c.h.b16 %v707
  %v876 = vunpack.c.l.b16 %v708
  %v877 = vunpack.c.h.b16 %v708
  %v878 = vunpack.c.l.b16 %v709
  %v879 = vunpack.c.h.b16 %v709
  %v880 = vunpack.c.l.b16 %v710
  %v881 = vunpack.c.h.b16 %v710
  %v882 = vunpack.c.l.b16 %v711
  %v883 = vunpack.c.h.b16 %v711
  %v884 = vunpack.c.l.b16 %v712
  %v885 = vunpack.c.h.b16 %v712
  %v886 = vunpack.c.l.b16 %v713
  %v887 = vunpack.c.h.b16 %v713
  %v888 = vunpack.c.l.b16 %v714
  %v889 = vunpack.c.h.b16 %v714
  %v890 = vunpack.c.l.b16 %v715
  %v891 = vunpack.c.h.b16 %v715
  %v892 = vunpack.c.l.b16 %v716
  %v893 = vunpack.c.h.b16 %v716
  %v894 = vunpack.c.l.b16 %v717
  %v895 = vunpack.c.h.b16 %v717
  %v896 = vunpack.c.l.b16 %v718
  %v897 = vunpack.c.h.b16 %v718
  %v898 = vunpack.c.l.b16 %v719
  %v899 = vunpack.c.h.b16 %v719
  %v900 = vunpack.c.l.b16 %v720
  %v901 = vunpack.c.h.b16 %v720
  %v902 = vunpack.c.l.b16 %v721
  %v903 = vunpack.c.h.b16 %v721
  %v904 = vunpack.c.l.b16 %v722
  %v905 = vunpack.c.h.b16 %v722
  %v906 = vunpack.c.l.b16 %v723
  %v907 = vunpack.c.h.b16 %v723
  %v908 = vunpack.c.l.b16 %v724
  %v909 = vunpack.c.h.b16 %v724
  %v910 = vunpack.c.l.b16 %v725
  %v911 = vunpack.c.h.b16 %v725
  %v912 = vunpack.c.l.b16 %v726
  %v913 = vunpack.c.h.b16 %v726
  %v914 = vunpack.c.l.b16 %v727
  %v915 = vunpack.c.h.b16 %v727
  %v916 = vunpack.c.l.b16 %v728
  %v917 = vunpack.c.h.b16 %v728
  %v918 = vunpack.c.l.b16 %v729
  %v919 = vunpack.c.h.b16 %v729
  %v920 = vunpack.c.l.b16 %v730
  %v921 = vunpack.c.h.b16 %v730
  %v922 = vunpack.c.l.b16 %v731
  %v923 = vunpack.c.h.b16 %v731
  %v924 = vpack.c.b16 %v804, %v796
  %v925 = vpack.c.b16 %v805, %v797
  %v926 = vpack.c.b16 %v806, %v798
  %v927 = vpack.c.b16 %v807, %v799
  %v928 = vpack.c.b16 %v808, %v800
  %v929 = vpack.c.b16 %v809, %v801
  %v930 = vpack.c.b16 %v810, %v802
  %v931 = vpack.c.b16 %v811, %v803
  %v932 = vpack.c.b16 %v820, %v812
  %v933 = vpack.c.b16 %v821, %v813
  %v934 = vpack.c.b16 %v822, %v814
  %v935 = vpack.c.b16 %v823, %v815
  %v936 = vpack.c.b16 %v824, %v816
  %v937 = vpack.c.b16 %v825, %v817
  %v938 = vpack.c.b16 %v826, %v818
  %v939 = vpack.c.b16 %v827, %v819
  %v940 = vpack.c.b16 %v836, %v828
  %v941 = vpack.c.b16 %v837, %v829
  %v942 = vpack.c.b16 %v838, %v830
  %v943 = vpack.c.b16 %v839, %v831
  %v944 = vpack.c.b16 %v840, %v832
  %v945 = vpack.c.b16 %v841, %v833
  %v946 = vpack.c.b16 %v842, %v834
  %v947 = vpack.c.b16 %v843, %v835
  %v948 = vpack.c.b16 %v852, %v844
  %v949 = vpack.c.b16 %v853, %v845
  %v950 = vpack.c.b16 %v854, %v846
  %v951 = vpack.c.b16 %v855, %v847
  %v952 = vpack.c.b16 %v856, %v848
  %v953 = vpack.c.b16 %v857, %v849
  %v954 = vpack.c.b16 %v858, %v850
  %v955 = vpack.c.b16 %v859, %v851
  %v956 = vpack.c.b16 %v868, %v860
  %v957 = vpack.c.b16 %v869, %v861
  %v958 = vpack.c.b16 %v870, %v862
  %v959 = vpack.c.b16 %v871, %v863
  %v960 = vpack.c.b16 %v872, %v864
  %v961 = vpack.c.b16 %v873, %v865
  %v962 = vpack.c.b16 %v874, %v866
  %v963 = vpack.c.b16 %v875, %v867
  %v964 = vpack.c.b16 %v884, %v876
  %v965 = vpack.c.b16 %v885, %v877
  %v966 = vpack.c.b16 %v886, %v878
  %v967 = vpack.c.b16 %v887, %v879
  %v968 = vpack.c.b16 %v888, %v880
  %v969 = vpack.c.b16 %v889, %v881
  %v970 = vpack.c.b16 %v890, %v882
  %v971 = vpack.c.b16 %v891, %v883
  %v972 = vpack.c.b16 %v900, %v892
  %v973 = vpack.c.b16 %v901, %v893
  %v974 = vpack.c.b16 %v902, %v894
  %v975 = vpack.c.b16 %v903, %v895
  %v976 = vpack.c.b16 %v904, %v896
  %v977 = vpack.c.b16 %v905, %v897
  %v978 = vpack.c.b16 %v906, %v898
  %v979 = vpack.c.b16 %v907, %v899
  %v980 = vpack.c.b16 %v916, %v908
  %v981 = vpack.c.b16 %v917, %v909
  %v982 = vpack.c.b16 %v918, %v910
  %v983 = vpack.c.b16 %v919, %v911
  %v984 = vpack.c.b16 %v920, %v912
  %v985 = vpack.c.b16 %v921, %v913
  %v986 = vpack.c.b16 %v922, %v914
  %v987 = vpack.c.b16 %v923, %v915
  %1052 = vmatprep.subr.bf16.mxu0 %v981
  %1053 = vmatpush1.bf16.msra.mxu0 %v980
  %1054 = vmatprep.subr.bf16.mxu0 %v973
  %1055 = vmatpush1.bf16.msra.mxu0 %v972
  %1056 = vmatprep.subr.bf16.mxu0 %v965
  %1057 = vmatpush1.bf16.msra.mxu0 %v964
  %1058 = vmatprep.subr.bf16.mxu0 %v957
  %1059 = vmatpush1.bf16.msra.mxu0 %v956
  %1060 = vmatprep.subr.bf16.mxu0 %v949
  %1061 = vmatpush1.bf16.msra.mxu0 %v948
  %1062 = vmatprep.subr.bf16.mxu0 %v941
  %1063 = vmatpush1.bf16.msra.mxu0 %v940
  %1064 = vmatprep.subr.bf16.mxu0 %v933
  %1065 = vmatpush1.bf16.msra.mxu0 %v932
  %1066 = vmatprep.subr.bf16.mxu0 %v925
  %1067 = vmatpush1.bf16.msra.mxu0 %v924
  %1068 = vmatprep.subr.bf16.mxu0 0
  %1069 = vmatpush2.bf16.msra.mxu0 0
  %1070 = vmatprep.subr.bf16.mxu0 0
  %1071 = vmatpush2.bf16.msra.mxu0 0
  %1072 = vmatprep.subr.bf16.mxu0 0
  %1073 = vmatpush2.bf16.msra.mxu0 0
  %1074 = vmatprep.subr.bf16.mxu0 0
  %1075 = vmatpush2.bf16.msra.mxu0 0
  %1076 = vmatprep.subr.bf16.mxu0 0
  %1077 = vmatpush2.bf16.msra.mxu0 0
  %1078 = vmatprep.subr.bf16.mxu0 0
  %1079 = vmatpush2.bf16.msra.mxu0 0
  %1080 = vmatprep.subr.bf16.mxu0 0
  %1081 = vmatpush2.bf16.msra.mxu0 0
  %1082 = vmatprep.subr.bf16.mxu0 0
  %1083 = vmatpush2.bf16.msra.mxu0 0
  %1084 = vmatprep.mubr.bf16.mxu0 0
  %1085 = vmatmul.mubr.bf16.gmra.mxu0 %v667
  %v1086 = vpop.f32.mrf.mxu0
  %v1087 = vadd.f32 0.0, %v1086
  %v1088 = vpop.f32.mrf.mxu0
  %v1089 = vadd.f32 0.0, %v1088
  %v1090 = vpop.f32.mrf.mxu0
  %v1091 = vadd.f32 0.0, %v1090
  %v1092 = vpop.f32.mrf.mxu0
  %v1093 = vadd.f32 0.0, %v1092
  %1094 = vdwg.mxu0
  %1095 = vmatprep.subr.bf16.mxu0 %v983
  %1096 = vmatpush1.bf16.msra.mxu0 %v982
  %1097 = vmatprep.subr.bf16.mxu0 %v975
  %1098 = vmatpush1.bf16.msra.mxu0 %v974
  %1099 = vmatprep.subr.bf16.mxu0 %v967
  %1100 = vmatpush1.bf16.msra.mxu0 %v966
  %1101 = vmatprep.subr.bf16.mxu0 %v959
  %1102 = vmatpush1.bf16.msra.mxu0 %v958
  %1103 = vmatprep.subr.bf16.mxu0 %v951
  %1104 = vmatpush1.bf16.msra.mxu0 %v950
  %1105 = vmatprep.subr.bf16.mxu0 %v943
  %1106 = vmatpush1.bf16.msra.mxu0 %v942
  %1107 = vmatprep.subr.bf16.mxu0 %v935
  %1108 = vmatpush1.bf16.msra.mxu0 %v934
  %1109 = vmatprep.subr.bf16.mxu0 %v927
  %1110 = vmatpush1.bf16.msra.mxu0 %v926
  %1111 = vmatprep.subr.bf16.mxu0 0
  %1112 = vmatpush2.bf16.msra.mxu0 0
  %1113 = vmatprep.subr.bf16.mxu0 0
  %1114 = vmatpush2.bf16.msra.mxu0 0
  %1115 = vmatprep.subr.bf16.mxu0 0
  %1116 = vmatpush2.bf16.msra.mxu0 0
  %1117 = vmatprep.subr.bf16.mxu0 0
  %1118 = vmatpush2.bf16.msra.mxu0 0
  %1119 = vmatprep.subr.bf16.mxu0 0
  %1120 = vmatpush2.bf16.msra.mxu0 0
  %1121 = vmatprep.subr.bf16.mxu0 0
  %1122 = vmatpush2.bf16.msra.mxu0 0
  %1123 = vmatprep.subr.bf16.mxu0 0
  %1124 = vmatpush2.bf16.msra.mxu0 0
  %1125 = vmatprep.subr.bf16.mxu0 0
  %1126 = vmatpush2.bf16.msra.mxu0 0
  %1127 = vmatprep.mubr.bf16.mxu0 0
  %1128 = vmatmul.mubr.bf16.gmra.mxu0 %v667
  %v1129 = vpop.f32.mrf.mxu0
  %v1130 = vadd.f32 0.0, %v1129
  %v1131 = vpop.f32.mrf.mxu0
  %v1132 = vadd.f32 0.0, %v1131
  %v1133 = vpop.f32.mrf.mxu0
  %v1134 = vadd.f32 0.0, %v1133
  %v1135 = vpop.f32.mrf.mxu0
  %v1136 = vadd.f32 0.0, %v1135
  %1137 = vdwg.mxu0
  %1138 = vmatprep.subr.bf16.mxu0 %v985
  %1139 = vmatpush1.bf16.msra.mxu0 %v984
  %1140 = vmatprep.subr.bf16.mxu0 %v977
  %1141 = vmatpush1.bf16.msra.mxu0 %v976
  %1142 = vmatprep.subr.bf16.mxu0 %v969
  %1143 = vmatpush1.bf16.msra.mxu0 %v968
  %1144 = vmatprep.subr.bf16.mxu0 %v961
  %1145 = vmatpush1.bf16.msra.mxu0 %v960
  %1146 = vmatprep.subr.bf16.mxu0 %v953
  %1147 = vmatpush1.bf16.msra.mxu0 %v952
  %1148 = vmatprep.subr.bf16.mxu0 %v945
  %1149 = vmatpush1.bf16.msra.mxu0 %v944
  %1150 = vmatprep.subr.bf16.mxu0 %v937
  %1151 = vmatpush1.bf16.msra.mxu0 %v936
  %1152 = vmatprep.subr.bf16.mxu0 %v929
  %1153 = vmatpush1.bf16.msra.mxu0 %v928
  %1154 = vmatprep.subr.bf16.mxu0 0
  %1155 = vmatpush2.bf16.msra.mxu0 0
  %1156 = vmatprep.subr.bf16.mxu0 0
  %1157 = vmatpush2.bf16.msra.mxu0 0
  %1158 = vmatprep.subr.bf16.mxu0 0
  %1159 = vmatpush2.bf16.msra.mxu0 0
  %1160 = vmatprep.subr.bf16.mxu0 0
  %1161 = vmatpush2.bf16.msra.mxu0 0
  %1162 = vmatprep.subr.bf16.mxu0 0
  %1163 = vmatpush2.bf16.msra.mxu0 0
  %1164 = vmatprep.subr.bf16.mxu0 0
  %1165 = vmatpush2.bf16.msra.mxu0 0
  %1166 = vmatprep.subr.bf16.mxu0 0
  %1167 = vmatpush2.bf16.msra.mxu0 0
  %1168 = vmatprep.subr.bf16.mxu0 0
  %1169 = vmatpush2.bf16.msra.mxu0 0
  %1170 = vmatprep.mubr.bf16.mxu0 0
  %1171 = vmatmul.mubr.bf16.gmra.mxu0 %v667
  %v1172 = vpop.f32.mrf.mxu0
  %v1173 = vadd.f32 0.0, %v1172
  %v1174 = vpop.f32.mrf.mxu0
  %v1175 = vadd.f32 0.0, %v1174
  %v1176 = vpop.f32.mrf.mxu0
  %v1177 = vadd.f32 0.0, %v1176
  %v1178 = vpop.f32.mrf.mxu0
  %v1179 = vadd.f32 0.0, %v1178
  %1180 = vdwg.mxu0
  %1181 = vmatprep.subr.bf16.mxu0 %v987
  %1182 = vmatpush1.bf16.msra.mxu0 %v986
  %1183 = vmatprep.subr.bf16.mxu0 %v979
  %1184 = vmatpush1.bf16.msra.mxu0 %v978
  %1185 = vmatprep.subr.bf16.mxu0 %v971
  %1186 = vmatpush1.bf16.msra.mxu0 %v970
  %1187 = vmatprep.subr.bf16.mxu0 %v963
  %1188 = vmatpush1.bf16.msra.mxu0 %v962
  %1189 = vmatprep.subr.bf16.mxu0 %v955
  %1190 = vmatpush1.bf16.msra.mxu0 %v954
  %1191 = vmatprep.subr.bf16.mxu0 %v947
  %1192 = vmatpush1.bf16.msra.mxu0 %v946
  %1193 = vmatprep.subr.bf16.mxu0 %v939
  %1194 = vmatpush1.bf16.msra.mxu0 %v938
  %1195 = vmatprep.subr.bf16.mxu0 %v931
  %1196 = vmatpush1.bf16.msra.mxu0 %v930
  %1197 = vmatprep.subr.bf16.mxu0 0
  %1198 = vmatpush2.bf16.msra.mxu0 0
  %1199 = vmatprep.subr.bf16.mxu0 0
  %1200 = vmatpush2.bf16.msra.mxu0 0
  %1201 = vmatprep.subr.bf16.mxu0 0
  %1202 = vmatpush2.bf16.msra.mxu0 0
  %1203 = vmatprep.subr.bf16.mxu0 0
  %1204 = vmatpush2.bf16.msra.mxu0 0
  %1205 = vmatprep.subr.bf16.mxu0 0
  %1206 = vmatpush2.bf16.msra.mxu0 0
  %1207 = vmatprep.subr.bf16.mxu0 0
  %1208 = vmatpush2.bf16.msra.mxu0 0
  %1209 = vmatprep.subr.bf16.mxu0 0
  %1210 = vmatpush2.bf16.msra.mxu0 0
  %1211 = vmatprep.subr.bf16.mxu0 0
  %1212 = vmatpush2.bf16.msra.mxu0 0
  %1213 = vmatprep.mubr.bf16.mxu0 0
  %1214 = vmatmul.mubr.bf16.gmra.mxu0 %v667
  %v1215 = vpop.f32.mrf.mxu0
  %v1216 = vadd.f32 0.0, %v1215
  %v1217 = vpop.f32.mrf.mxu0
  %v1218 = vadd.f32 0.0, %v1217
  %v1219 = vpop.f32.mrf.mxu0
  %v1220 = vadd.f32 0.0, %v1219
  %v1221 = vpop.f32.mrf.mxu0
  %v1222 = vadd.f32 0.0, %v1221
  %1223 = vdwg.mxu0
  %v1224 = vsel %vm20, %v1087, %v1173
  %v1225 = vsel %vm20, %v1089, %v1175
  %v1226 = vsel %vm20, %v1130, %v1216
  %v1227 = vsel %vm20, %v1132, %v1218
  %v1228 = vsel %vm21, %v1091, %v1177
  %v1229 = vsel %vm21, %v1093, %v1179
  %v1230 = vsel %vm21, %v1134, %v1220
  %v1231 = vsel %vm21, %v1136, %v1222
  %s1232 = scalar_lea.vmem %s0, 32
  %v1233 = vld [vmem:[%s1232] sm:$0xff]
  %v1234 = vld [vmem:[%s1232 + $0x8] sm:$0xff]
  %v1235 = vld [vmem:[%s1232 + $0x10] sm:$0xff]
  %v1236 = vld [vmem:[%s1232 + $0x18] sm:$0xff]
  %v1237 = vunpack.c.l.bf16 %v1233
  %v1238 = vunpack.c.h.bf16 %v1233
  %v1239 = vunpack.c.l.bf16 %v1234
  %v1240 = vunpack.c.h.bf16 %v1234
  %v1241 = vunpack.c.l.bf16 %v1235
  %v1242 = vunpack.c.h.bf16 %v1235
  %v1243 = vunpack.c.l.bf16 %v1236
  %v1244 = vunpack.c.h.bf16 %v1236
  %v1245 = vadd.f32 %v1237, %v1224
  %v1246 = vadd.f32 %v1238, %v1225
  %v1247 = vadd.f32 %v1239, %v1226
  %v1248 = vadd.f32 %v1240, %v1227
  %v1249 = vadd.f32 %v1241, %v1228
  %v1250 = vadd.f32 %v1242, %v1229
  %v1251 = vadd.f32 %v1243, %v1230
  %v1252 = vadd.f32 %v1244, %v1231
  %v1253 = vxor.u32 %v1245, 2147483648
  %v1254 = vxor.u32 %v1249, 2147483648
  %v1255 = vmul.f32 %v1253, 1.442695
  %v1256 = vpow.pop %v1255
  %v1257 = vmul.f32 %v1254, 1.442695
  %v1258 = vpow.pop %v1257
  %v1259 = vadd.f32 %v1256, 1.0
  %v1260 = vadd.f32 %v1258, 1.0
  %v1261 = vrcp.pop %v1259
  %v1262 = vmul.f32 1.0, %v1261
  %v1263 = vrcp.pop %v1260
  %v1264 = vmul.f32 1.0, %v1263
  %v1265 = vxor.u32 %v1246, 2147483648
  %v1266 = vxor.u32 %v1250, 2147483648
  %v1267 = vmul.f32 %v1265, 1.442695
  %v1268 = vpow.pop %v1267
  %v1269 = vmul.f32 %v1266, 1.442695
  %v1270 = vpow.pop %v1269
  %v1271 = vadd.f32 %v1268, 1.0
  %v1272 = vadd.f32 %v1270, 1.0
  %v1273 = vrcp.pop %v1271
  %v1274 = vmul.f32 1.0, %v1273
  %v1275 = vrcp.pop %v1272
  %v1276 = vmul.f32 1.0, %v1275
  %v1277 = vtanh.pop %v1247
  %v1278 = vtanh.pop %v1251
  %v1279 = vxor.u32 %v1248, 2147483648
  %v1280 = vxor.u32 %v1252, 2147483648
  %v1281 = vmul.f32 %v1279, 1.442695
  %v1282 = vpow.pop %v1281
  %v1283 = vmul.f32 %v1280, 1.442695
  %v1284 = vpow.pop %v1283
  %v1285 = vadd.f32 %v1282, 1.0
  %v1286 = vadd.f32 %v1284, 1.0
  %v1287 = vrcp.pop %v1285
  %v1288 = vmul.f32 1.0, %v1287
  %v1289 = vrcp.pop %v1286
  %v1290 = vmul.f32 1.0, %v1289
  %v1291 = vmul.f32 %v1274, %v660
  %v1292 = vmul.f32 %v1276, %v661
  %v1293 = vmul.f32 %v1262, %v1277
  %v1294 = vmul.f32 %v1264, %v1278
  %v1295 = vadd.f32 %v1291, %v1293
  %v1296 = vadd.f32 %v1292, %v1294
  %v1297 = vtanh.pop %v1295
  %v1298 = vtanh.pop %v1296
  %v1299 = vmul.f32 %v1288, %v1297
  %v1300 = vmul.f32 %v1290, %v1298
  %v1301 = vsel %vm20, 1, 6
  %v1302 = vsel %vm21, 1, 6
  %vm1303 = vcmp.gt.s32.totalorder %v15, %v1301
  %vm1304 = vcmp.gt.s32.totalorder %v16, %v1302
  %v1305 = vsel %vm1303, %v1299, %v658
  %v1306 = vsel %vm1304, %v1300, %v659
  %v1307 = vsel %vm1303, %v1295, %v660
  %v1308 = vsel %vm1304, %v1296, %v661
  %v1309 = vpack.c.bf16 %v1305, %v1305
  %s1310 = scalar_lea.vmem %s3, 8
  %1311 = vst [vmem:[%s1310] sm:$0xf] %v1309
  %v1312 = vpack.c.bf16 %v1306, %v1306
  %s1313 = scalar_lea.vmem %s3, 48
  %1314 = vst [vmem:[%s1313 + $0x4] sm:$0xf] %v1312
  %v1315 = vpack.c.bf16 %v1306, %v1305
  %v1316 = vld [vmem:[%s2] sm:$0xff]
  %v1317 = vld [vmem:[%s2 + $0x8] sm:$0xff]
  %v1318 = vld [vmem:[%s2 + $0x10] sm:$0xff]
  %v1319 = vld [vmem:[%s2 + $0x18] sm:$0xff]
  %v1320 = vld [vmem:[%s2 + $0x20] sm:$0xff]
  %v1321 = vld [vmem:[%s2 + $0x28] sm:$0xff]
  %v1322 = vld [vmem:[%s2 + $0x30] sm:$0xff]
  %v1323 = vld [vmem:[%s2 + $0x38] sm:$0xff]
  %v1324 = vld [vmem:[%s2 + $0x40] sm:$0xff]
  %v1325 = vld [vmem:[%s2 + $0x48] sm:$0xff]
  %v1326 = vld [vmem:[%s2 + $0x50] sm:$0xff]
  %v1327 = vld [vmem:[%s2 + $0x58] sm:$0xff]
  %v1328 = vld [vmem:[%s2 + $0x60] sm:$0xff]
  %v1329 = vld [vmem:[%s2 + $0x68] sm:$0xff]
  %v1330 = vld [vmem:[%s2 + $0x70] sm:$0xff]
  %v1331 = vld [vmem:[%s2 + $0x78] sm:$0xff]
  %v1332 = vld [vmem:[%s2 + $0x80] sm:$0xff]
  %v1333 = vld [vmem:[%s2 + $0x88] sm:$0xff]
  %v1334 = vld [vmem:[%s2 + $0x90] sm:$0xff]
  %v1335 = vld [vmem:[%s2 + $0x98] sm:$0xff]
  %v1336 = vld [vmem:[%s2 + $0xa0] sm:$0xff]
  %v1337 = vld [vmem:[%s2 + $0xa8] sm:$0xff]
  %v1338 = vld [vmem:[%s2 + $0xb0] sm:$0xff]
  %v1339 = vld [vmem:[%s2 + $0xb8] sm:$0xff]
  %v1340 = vld [vmem:[%s2 + $0xc0] sm:$0xff]
  %v1341 = vld [vmem:[%s2 + $0xc8] sm:$0xff]
  %v1342 = vld [vmem:[%s2 + $0xd0] sm:$0xff]
  %v1343 = vld [vmem:[%s2 + $0xd8] sm:$0xff]
  %v1344 = vld [vmem:[%s2 + $0xe0] sm:$0xff]
  %v1345 = vld [vmem:[%s2 + $0xe8] sm:$0xff]
  %v1346 = vld [vmem:[%s2 + $0xf0] sm:$0xff]
  %v1347 = vld [vmem:[%s2 + $0xf8] sm:$0xff]
  %v1348 = vld [vmem:[%s2 + $0x100] sm:$0xff]
  %v1349 = vld [vmem:[%s2 + $0x108] sm:$0xff]
  %v1350 = vld [vmem:[%s2 + $0x110] sm:$0xff]
  %v1351 = vld [vmem:[%s2 + $0x118] sm:$0xff]
  %v1352 = vld [vmem:[%s2 + $0x120] sm:$0xff]
  %v1353 = vld [vmem:[%s2 + $0x128] sm:$0xff]
  %v1354 = vld [vmem:[%s2 + $0x130] sm:$0xff]
  %v1355 = vld [vmem:[%s2 + $0x138] sm:$0xff]
  %v1356 = vld [vmem:[%s2 + $0x140] sm:$0xff]
  %v1357 = vld [vmem:[%s2 + $0x148] sm:$0xff]
  %v1358 = vld [vmem:[%s2 + $0x150] sm:$0xff]
  %v1359 = vld [vmem:[%s2 + $0x158] sm:$0xff]
  %v1360 = vld [vmem:[%s2 + $0x160] sm:$0xff]
  %v1361 = vld [vmem:[%s2 + $0x168] sm:$0xff]
  %v1362 = vld [vmem:[%s2 + $0x170] sm:$0xff]
  %v1363 = vld [vmem:[%s2 + $0x178] sm:$0xff]
  %v1364 = vld [vmem:[%s2 + $0x180] sm:$0xff]
  %v1365 = vld [vmem:[%s2 + $0x188] sm:$0xff]
  %v1366 = vld [vmem:[%s2 + $0x190] sm:$0xff]
  %v1367 = vld [vmem:[%s2 + $0x198] sm:$0xff]
  %v1368 = vld [vmem:[%s2 + $0x1a0] sm:$0xff]
  %v1369 = vld [vmem:[%s2 + $0x1a8] sm:$0xff]
  %v1370 = vld [vmem:[%s2 + $0x1b0] sm:$0xff]
  %v1371 = vld [vmem:[%s2 + $0x1b8] sm:$0xff]
  %v1372 = vld [vmem:[%s2 + $0x1c0] sm:$0xff]
  %v1373 = vld [vmem:[%s2 + $0x1c8] sm:$0xff]
  %v1374 = vld [vmem:[%s2 + $0x1d0] sm:$0xff]
  %v1375 = vld [vmem:[%s2 + $0x1d8] sm:$0xff]
  %v1376 = vld [vmem:[%s2 + $0x1e0] sm:$0xff]
  %v1377 = vld [vmem:[%s2 + $0x1e8] sm:$0xff]
  %v1378 = vld [vmem:[%s2 + $0x1f0] sm:$0xff]
  %v1379 = vld [vmem:[%s2 + $0x1f8] sm:$0xff]
  %v1444 = vunpack.c.l.b16 %v1316
  %v1445 = vunpack.c.h.b16 %v1316
  %v1446 = vunpack.c.l.b16 %v1317
  %v1447 = vunpack.c.h.b16 %v1317
  %v1448 = vunpack.c.l.b16 %v1318
  %v1449 = vunpack.c.h.b16 %v1318
  %v1450 = vunpack.c.l.b16 %v1319
  %v1451 = vunpack.c.h.b16 %v1319
  %v1452 = vunpack.c.l.b16 %v1320
  %v1453 = vunpack.c.h.b16 %v1320
  %v1454 = vunpack.c.l.b16 %v1321
  %v1455 = vunpack.c.h.b16 %v1321
  %v1456 = vunpack.c.l.b16 %v1322
  %v1457 = vunpack.c.h.b16 %v1322
  %v1458 = vunpack.c.l.b16 %v1323
  %v1459 = vunpack.c.h.b16 %v1323
  %v1460 = vunpack.c.l.b16 %v1324
  %v1461 = vunpack.c.h.b16 %v1324
  %v1462 = vunpack.c.l.b16 %v1325
  %v1463 = vunpack.c.h.b16 %v1325
  %v1464 = vunpack.c.l.b16 %v1326
  %v1465 = vunpack.c.h.b16 %v1326
  %v1466 = vunpack.c.l.b16 %v1327
  %v1467 = vunpack.c.h.b16 %v1327
  %v1468 = vunpack.c.l.b16 %v1328
  %v1469 = vunpack.c.h.b16 %v1328
  %v1470 = vunpack.c.l.b16 %v1329
  %v1471 = vunpack.c.h.b16 %v1329
  %v1472 = vunpack.c.l.b16 %v1330
  %v1473 = vunpack.c.h.b16 %v1330
  %v1474 = vunpack.c.l.b16 %v1331
  %v1475 = vunpack.c.h.b16 %v1331
  %v1476 = vunpack.c.l.b16 %v1332
  %v1477 = vunpack.c.h.b16 %v1332
  %v1478 = vunpack.c.l.b16 %v1333
  %v1479 = vunpack.c.h.b16 %v1333
  %v1480 = vunpack.c.l.b16 %v1334
  %v1481 = vunpack.c.h.b16 %v1334
  %v1482 = vunpack.c.l.b16 %v1335
  %v1483 = vunpack.c.h.b16 %v1335
  %v1484 = vunpack.c.l.b16 %v1336
  %v1485 = vunpack.c.h.b16 %v1336
  %v1486 = vunpack.c.l.b16 %v1337
  %v1487 = vunpack.c.h.b16 %v1337
  %v1488 = vunpack.c.l.b16 %v1338
  %v1489 = vunpack.c.h.b16 %v1338
  %v1490 = vunpack.c.l.b16 %v1339
  %v1491 = vunpack.c.h.b16 %v1339
  %v1492 = vunpack.c.l.b16 %v1340
  %v1493 = vunpack.c.h.b16 %v1340
  %v1494 = vunpack.c.l.b16 %v1341
  %v1495 = vunpack.c.h.b16 %v1341
  %v1496 = vunpack.c.l.b16 %v1342
  %v1497 = vunpack.c.h.b16 %v1342
  %v1498 = vunpack.c.l.b16 %v1343
  %v1499 = vunpack.c.h.b16 %v1343
  %v1500 = vunpack.c.l.b16 %v1344
  %v1501 = vunpack.c.h.b16 %v1344
  %v1502 = vunpack.c.l.b16 %v1345
  %v1503 = vunpack.c.h.b16 %v1345
  %v1504 = vunpack.c.l.b16 %v1346
  %v1505 = vunpack.c.h.b16 %v1346
  %v1506 = vunpack.c.l.b16 %v1347
  %v1507 = vunpack.c.h.b16 %v1347
  %v1508 = vunpack.c.l.b16 %v1348
  %v1509 = vunpack.c.h.b16 %v1348
  %v1510 = vunpack.c.l.b16 %v1349
  %v1511 = vunpack.c.h.b16 %v1349
  %v1512 = vunpack.c.l.b16 %v1350
  %v1513 = vunpack.c.h.b16 %v1350
  %v1514 = vunpack.c.l.b16 %v1351
  %v1515 = vunpack.c.h.b16 %v1351
  %v1516 = vunpack.c.l.b16 %v1352
  %v1517 = vunpack.c.h.b16 %v1352
  %v1518 = vunpack.c.l.b16 %v1353
  %v1519 = vunpack.c.h.b16 %v1353
  %v1520 = vunpack.c.l.b16 %v1354
  %v1521 = vunpack.c.h.b16 %v1354
  %v1522 = vunpack.c.l.b16 %v1355
  %v1523 = vunpack.c.h.b16 %v1355
  %v1524 = vunpack.c.l.b16 %v1356
  %v1525 = vunpack.c.h.b16 %v1356
  %v1526 = vunpack.c.l.b16 %v1357
  %v1527 = vunpack.c.h.b16 %v1357
  %v1528 = vunpack.c.l.b16 %v1358
  %v1529 = vunpack.c.h.b16 %v1358
  %v1530 = vunpack.c.l.b16 %v1359
  %v1531 = vunpack.c.h.b16 %v1359
  %v1532 = vunpack.c.l.b16 %v1360
  %v1533 = vunpack.c.h.b16 %v1360
  %v1534 = vunpack.c.l.b16 %v1361
  %v1535 = vunpack.c.h.b16 %v1361
  %v1536 = vunpack.c.l.b16 %v1362
  %v1537 = vunpack.c.h.b16 %v1362
  %v1538 = vunpack.c.l.b16 %v1363
  %v1539 = vunpack.c.h.b16 %v1363
  %v1540 = vunpack.c.l.b16 %v1364
  %v1541 = vunpack.c.h.b16 %v1364
  %v1542 = vunpack.c.l.b16 %v1365
  %v1543 = vunpack.c.h.b16 %v1365
  %v1544 = vunpack.c.l.b16 %v1366
  %v1545 = vunpack.c.h.b16 %v1366
  %v1546 = vunpack.c.l.b16 %v1367
  %v1547 = vunpack.c.h.b16 %v1367
  %v1548 = vunpack.c.l.b16 %v1368
  %v1549 = vunpack.c.h.b16 %v1368
  %v1550 = vunpack.c.l.b16 %v1369
  %v1551 = vunpack.c.h.b16 %v1369
  %v1552 = vunpack.c.l.b16 %v1370
  %v1553 = vunpack.c.h.b16 %v1370
  %v1554 = vunpack.c.l.b16 %v1371
  %v1555 = vunpack.c.h.b16 %v1371
  %v1556 = vunpack.c.l.b16 %v1372
  %v1557 = vunpack.c.h.b16 %v1372
  %v1558 = vunpack.c.l.b16 %v1373
  %v1559 = vunpack.c.h.b16 %v1373
  %v1560 = vunpack.c.l.b16 %v1374
  %v1561 = vunpack.c.h.b16 %v1374
  %v1562 = vunpack.c.l.b16 %v1375
  %v1563 = vunpack.c.h.b16 %v1375
  %v1564 = vunpack.c.l.b16 %v1376
  %v1565 = vunpack.c.h.b16 %v1376
  %v1566 = vunpack.c.l.b16 %v1377
  %v1567 = vunpack.c.h.b16 %v1377
  %v1568 = vunpack.c.l.b16 %v1378
  %v1569 = vunpack.c.h.b16 %v1378
  %v1570 = vunpack.c.l.b16 %v1379
  %v1571 = vunpack.c.h.b16 %v1379
  %v1572 = vpack.c.b16 %v1452, %v1444
  %v1573 = vpack.c.b16 %v1453, %v1445
  %v1574 = vpack.c.b16 %v1454, %v1446
  %v1575 = vpack.c.b16 %v1455, %v1447
  %v1576 = vpack.c.b16 %v1456, %v1448
  %v1577 = vpack.c.b16 %v1457, %v1449
  %v1578 = vpack.c.b16 %v1458, %v1450
  %v1579 = vpack.c.b16 %v1459, %v1451
  %v1580 = vpack.c.b16 %v1468, %v1460
  %v1581 = vpack.c.b16 %v1469, %v1461
  %v1582 = vpack.c.b16 %v1470, %v1462
  %v1583 = vpack.c.b16 %v1471, %v1463
  %v1584 = vpack.c.b16 %v1472, %v1464
  %v1585 = vpack.c.b16 %v1473, %v1465
  %v1586 = vpack.c.b16 %v1474, %v1466
  %v1587 = vpack.c.b16 %v1475, %v1467
  %v1588 = vpack.c.b16 %v1484, %v1476
  %v1589 = vpack.c.b16 %v1485, %v1477
  %v1590 = vpack.c.b16 %v1486, %v1478
  %v1591 = vpack.c.b16 %v1487, %v1479
  %v1592 = vpack.c.b16 %v1488, %v1480
  %v1593 = vpack.c.b16 %v1489, %v1481
  %v1594 = vpack.c.b16 %v1490, %v1482
  %v1595 = vpack.c.b16 %v1491, %v1483
  %v1596 = vpack.c.b16 %v1500, %v1492
  %v1597 = vpack.c.b16 %v1501, %v1493
  %v1598 = vpack.c.b16 %v1502, %v1494
  %v1599 = vpack.c.b16 %v1503, %v1495
  %v1600 = vpack.c.b16 %v1504, %v1496
  %v1601 = vpack.c.b16 %v1505, %v1497
  %v1602 = vpack.c.b16 %v1506, %v1498
  %v1603 = vpack.c.b16 %v1507, %v1499
  %v1604 = vpack.c.b16 %v1516, %v1508
  %v1605 = vpack.c.b16 %v1517, %v1509
  %v1606 = vpack.c.b16 %v1518, %v1510
  %v1607 = vpack.c.b16 %v1519, %v1511
  %v1608 = vpack.c.b16 %v1520, %v1512
  %v1609 = vpack.c.b16 %v1521, %v1513
  %v1610 = vpack.c.b16 %v1522, %v1514
  %v1611 = vpack.c.b16 %v1523, %v1515
  %v1612 = vpack.c.b16 %v1532, %v1524
  %v1613 = vpack.c.b16 %v1533, %v1525
  %v1614 = vpack.c.b16 %v1534, %v1526
  %v1615 = vpack.c.b16 %v1535, %v1527
  %v1616 = vpack.c.b16 %v1536, %v1528
  %v1617 = vpack.c.b16 %v1537, %v1529
  %v1618 = vpack.c.b16 %v1538, %v1530
  %v1619 = vpack.c.b16 %v1539, %v1531
  %v1620 = vpack.c.b16 %v1548, %v1540
  %v1621 = vpack.c.b16 %v1549, %v1541
  %v1622 = vpack.c.b16 %v1550, %v1542
  %v1623 = vpack.c.b16 %v1551, %v1543
  %v1624 = vpack.c.b16 %v1552, %v1544
  %v1625 = vpack.c.b16 %v1553, %v1545
  %v1626 = vpack.c.b16 %v1554, %v1546
  %v1627 = vpack.c.b16 %v1555, %v1547
  %v1628 = vpack.c.b16 %v1564, %v1556
  %v1629 = vpack.c.b16 %v1565, %v1557
  %v1630 = vpack.c.b16 %v1566, %v1558
  %v1631 = vpack.c.b16 %v1567, %v1559
  %v1632 = vpack.c.b16 %v1568, %v1560
  %v1633 = vpack.c.b16 %v1569, %v1561
  %v1634 = vpack.c.b16 %v1570, %v1562
  %v1635 = vpack.c.b16 %v1571, %v1563
  %1700 = vmatprep.subr.bf16.mxu0 %v1629
  %1701 = vmatpush1.bf16.msra.mxu0 %v1628
  %1702 = vmatprep.subr.bf16.mxu0 %v1621
  %1703 = vmatpush1.bf16.msra.mxu0 %v1620
  %1704 = vmatprep.subr.bf16.mxu0 %v1613
  %1705 = vmatpush1.bf16.msra.mxu0 %v1612
  %1706 = vmatprep.subr.bf16.mxu0 %v1605
  %1707 = vmatpush1.bf16.msra.mxu0 %v1604
  %1708 = vmatprep.subr.bf16.mxu0 %v1597
  %1709 = vmatpush1.bf16.msra.mxu0 %v1596
  %1710 = vmatprep.subr.bf16.mxu0 %v1589
  %1711 = vmatpush1.bf16.msra.mxu0 %v1588
  %1712 = vmatprep.subr.bf16.mxu0 %v1581
  %1713 = vmatpush1.bf16.msra.mxu0 %v1580
  %1714 = vmatprep.subr.bf16.mxu0 %v1573
  %1715 = vmatpush1.bf16.msra.mxu0 %v1572
  %1716 = vmatprep.subr.bf16.mxu0 0
  %1717 = vmatpush2.bf16.msra.mxu0 0
  %1718 = vmatprep.subr.bf16.mxu0 0
  %1719 = vmatpush2.bf16.msra.mxu0 0
  %1720 = vmatprep.subr.bf16.mxu0 0
  %1721 = vmatpush2.bf16.msra.mxu0 0
  %1722 = vmatprep.subr.bf16.mxu0 0
  %1723 = vmatpush2.bf16.msra.mxu0 0
  %1724 = vmatprep.subr.bf16.mxu0 0
  %1725 = vmatpush2.bf16.msra.mxu0 0
  %1726 = vmatprep.subr.bf16.mxu0 0
  %1727 = vmatpush2.bf16.msra.mxu0 0
  %1728 = vmatprep.subr.bf16.mxu0 0
  %1729 = vmatpush2.bf16.msra.mxu0 0
  %1730 = vmatprep.subr.bf16.mxu0 0
  %1731 = vmatpush2.bf16.msra.mxu0 0
  %1732 = vmatprep.mubr.bf16.mxu0 0
  %1733 = vmatmul.mubr.bf16.gmra.mxu0 %v1315
  %v1734 = vpop.f32.mrf.mxu0
  %v1735 = vadd.f32 0.0, %v1734
  %v1736 = vpop.f32.mrf.mxu0
  %v1737 = vadd.f32 0.0, %v1736
  %v1738 = vpop.f32.mrf.mxu0
  %v1739 = vadd.f32 0.0, %v1738
  %v1740 = vpop.f32.mrf.mxu0
  %v1741 = vadd.f32 0.0, %v1740
  %1742 = vdwg.mxu0
  %1743 = vmatprep.subr.bf16.mxu0 %v1631
  %1744 = vmatpush1.bf16.msra.mxu0 %v1630
  %1745 = vmatprep.subr.bf16.mxu0 %v1623
  %1746 = vmatpush1.bf16.msra.mxu0 %v1622
  %1747 = vmatprep.subr.bf16.mxu0 %v1615
  %1748 = vmatpush1.bf16.msra.mxu0 %v1614
  %1749 = vmatprep.subr.bf16.mxu0 %v1607
  %1750 = vmatpush1.bf16.msra.mxu0 %v1606
  %1751 = vmatprep.subr.bf16.mxu0 %v1599
  %1752 = vmatpush1.bf16.msra.mxu0 %v1598
  %1753 = vmatprep.subr.bf16.mxu0 %v1591
  %1754 = vmatpush1.bf16.msra.mxu0 %v1590
  %1755 = vmatprep.subr.bf16.mxu0 %v1583
  %1756 = vmatpush1.bf16.msra.mxu0 %v1582
  %1757 = vmatprep.subr.bf16.mxu0 %v1575
  %1758 = vmatpush1.bf16.msra.mxu0 %v1574
  %1759 = vmatprep.subr.bf16.mxu0 0
  %1760 = vmatpush2.bf16.msra.mxu0 0
  %1761 = vmatprep.subr.bf16.mxu0 0
  %1762 = vmatpush2.bf16.msra.mxu0 0
  %1763 = vmatprep.subr.bf16.mxu0 0
  %1764 = vmatpush2.bf16.msra.mxu0 0
  %1765 = vmatprep.subr.bf16.mxu0 0
  %1766 = vmatpush2.bf16.msra.mxu0 0
  %1767 = vmatprep.subr.bf16.mxu0 0
  %1768 = vmatpush2.bf16.msra.mxu0 0
  %1769 = vmatprep.subr.bf16.mxu0 0
  %1770 = vmatpush2.bf16.msra.mxu0 0
  %1771 = vmatprep.subr.bf16.mxu0 0
  %1772 = vmatpush2.bf16.msra.mxu0 0
  %1773 = vmatprep.subr.bf16.mxu0 0
  %1774 = vmatpush2.bf16.msra.mxu0 0
  %1775 = vmatprep.mubr.bf16.mxu0 0
  %1776 = vmatmul.mubr.bf16.gmra.mxu0 %v1315
  %v1777 = vpop.f32.mrf.mxu0
  %v1778 = vadd.f32 0.0, %v1777
  %v1779 = vpop.f32.mrf.mxu0
  %v1780 = vadd.f32 0.0, %v1779
  %v1781 = vpop.f32.mrf.mxu0
  %v1782 = vadd.f32 0.0, %v1781
  %v1783 = vpop.f32.mrf.mxu0
  %v1784 = vadd.f32 0.0, %v1783
  %1785 = vdwg.mxu0
  %1786 = vmatprep.subr.bf16.mxu0 %v1633
  %1787 = vmatpush1.bf16.msra.mxu0 %v1632
  %1788 = vmatprep.subr.bf16.mxu0 %v1625
  %1789 = vmatpush1.bf16.msra.mxu0 %v1624
  %1790 = vmatprep.subr.bf16.mxu0 %v1617
  %1791 = vmatpush1.bf16.msra.mxu0 %v1616
  %1792 = vmatprep.subr.bf16.mxu0 %v1609
  %1793 = vmatpush1.bf16.msra.mxu0 %v1608
  %1794 = vmatprep.subr.bf16.mxu0 %v1601
  %1795 = vmatpush1.bf16.msra.mxu0 %v1600
  %1796 = vmatprep.subr.bf16.mxu0 %v1593
  %1797 = vmatpush1.bf16.msra.mxu0 %v1592
  %1798 = vmatprep.subr.bf16.mxu0 %v1585
  %1799 = vmatpush1.bf16.msra.mxu0 %v1584
  %1800 = vmatprep.subr.bf16.mxu0 %v1577
  %1801 = vmatpush1.bf16.msra.mxu0 %v1576
  %1802 = vmatprep.subr.bf16.mxu0 0
  %1803 = vmatpush2.bf16.msra.mxu0 0
  %1804 = vmatprep.subr.bf16.mxu0 0
  %1805 = vmatpush2.bf16.msra.mxu0 0
  %1806 = vmatprep.subr.bf16.mxu0 0
  %1807 = vmatpush2.bf16.msra.mxu0 0
  %1808 = vmatprep.subr.bf16.mxu0 0
  %1809 = vmatpush2.bf16.msra.mxu0 0
  %1810 = vmatprep.subr.bf16.mxu0 0
  %1811 = vmatpush2.bf16.msra.mxu0 0
  %1812 = vmatprep.subr.bf16.mxu0 0
  %1813 = vmatpush2.bf16.msra.mxu0 0
  %1814 = vmatprep.subr.bf16.mxu0 0
  %1815 = vmatpush2.bf16.msra.mxu0 0
  %1816 = vmatprep.subr.bf16.mxu0 0
  %1817 = vmatpush2.bf16.msra.mxu0 0
  %1818 = vmatprep.mubr.bf16.mxu0 0
  %1819 = vmatmul.mubr.bf16.gmra.mxu0 %v1315
  %v1820 = vpop.f32.mrf.mxu0
  %v1821 = vadd.f32 0.0, %v1820
  %v1822 = vpop.f32.mrf.mxu0
  %v1823 = vadd.f32 0.0, %v1822
  %v1824 = vpop.f32.mrf.mxu0
  %v1825 = vadd.f32 0.0, %v1824
  %v1826 = vpop.f32.mrf.mxu0
  %v1827 = vadd.f32 0.0, %v1826
  %1828 = vdwg.mxu0
  %1829 = vmatprep.subr.bf16.mxu0 %v1635
  %1830 = vmatpush1.bf16.msra.mxu0 %v1634
  %1831 = vmatprep.subr.bf16.mxu0 %v1627
  %1832 = vmatpush1.bf16.msra.mxu0 %v1626
  %1833 = vmatprep.subr.bf16.mxu0 %v1619
  %1834 = vmatpush1.bf16.msra.mxu0 %v1618
  %1835 = vmatprep.subr.bf16.mxu0 %v1611
  %1836 = vmatpush1.bf16.msra.mxu0 %v1610
  %1837 = vmatprep.subr.bf16.mxu0 %v1603
  %1838 = vmatpush1.bf16.msra.mxu0 %v1602
  %1839 = vmatprep.subr.bf16.mxu0 %v1595
  %1840 = vmatpush1.bf16.msra.mxu0 %v1594
  %1841 = vmatprep.subr.bf16.mxu0 %v1587
  %1842 = vmatpush1.bf16.msra.mxu0 %v1586
  %1843 = vmatprep.subr.bf16.mxu0 %v1579
  %1844 = vmatpush1.bf16.msra.mxu0 %v1578
  %1845 = vmatprep.subr.bf16.mxu0 0
  %1846 = vmatpush2.bf16.msra.mxu0 0
  %1847 = vmatprep.subr.bf16.mxu0 0
  %1848 = vmatpush2.bf16.msra.mxu0 0
  %1849 = vmatprep.subr.bf16.mxu0 0
  %1850 = vmatpush2.bf16.msra.mxu0 0
  %1851 = vmatprep.subr.bf16.mxu0 0
  %1852 = vmatpush2.bf16.msra.mxu0 0
  %1853 = vmatprep.subr.bf16.mxu0 0
  %1854 = vmatpush2.bf16.msra.mxu0 0
  %1855 = vmatprep.subr.bf16.mxu0 0
  %1856 = vmatpush2.bf16.msra.mxu0 0
  %1857 = vmatprep.subr.bf16.mxu0 0
  %1858 = vmatpush2.bf16.msra.mxu0 0
  %1859 = vmatprep.subr.bf16.mxu0 0
  %1860 = vmatpush2.bf16.msra.mxu0 0
  %1861 = vmatprep.mubr.bf16.mxu0 0
  %1862 = vmatmul.mubr.bf16.gmra.mxu0 %v1315
  %v1863 = vpop.f32.mrf.mxu0
  %v1864 = vadd.f32 0.0, %v1863
  %v1865 = vpop.f32.mrf.mxu0
  %v1866 = vadd.f32 0.0, %v1865
  %v1867 = vpop.f32.mrf.mxu0
  %v1868 = vadd.f32 0.0, %v1867
  %v1869 = vpop.f32.mrf.mxu0
  %v1870 = vadd.f32 0.0, %v1869
  %1871 = vdwg.mxu0
  %v1872 = vsel %vm20, %v1735, %v1821
  %v1873 = vsel %vm20, %v1737, %v1823
  %v1874 = vsel %vm20, %v1778, %v1864
  %v1875 = vsel %vm20, %v1780, %v1866
  %v1876 = vsel %vm21, %v1739, %v1825
  %v1877 = vsel %vm21, %v1741, %v1827
  %v1878 = vsel %vm21, %v1782, %v1868
  %v1879 = vsel %vm21, %v1784, %v1870
  %s1880 = scalar_lea.vmem %s0, 64
  %v1881 = vld [vmem:[%s1880] sm:$0xff]
  %v1882 = vld [vmem:[%s1880 + $0x8] sm:$0xff]
  %v1883 = vld [vmem:[%s1880 + $0x10] sm:$0xff]
  %v1884 = vld [vmem:[%s1880 + $0x18] sm:$0xff]
  %v1885 = vunpack.c.l.bf16 %v1881
  %v1886 = vunpack.c.h.bf16 %v1881
  %v1887 = vunpack.c.l.bf16 %v1882
  %v1888 = vunpack.c.h.bf16 %v1882
  %v1889 = vunpack.c.l.bf16 %v1883
  %v1890 = vunpack.c.h.bf16 %v1883
  %v1891 = vunpack.c.l.bf16 %v1884
  %v1892 = vunpack.c.h.bf16 %v1884
  %v1893 = vadd.f32 %v1885, %v1872
  %v1894 = vadd.f32 %v1886, %v1873
  %v1895 = vadd.f32 %v1887, %v1874
  %v1896 = vadd.f32 %v1888, %v1875
  %v1897 = vadd.f32 %v1889, %v1876
  %v1898 = vadd.f32 %v1890, %v1877
  %v1899 = vadd.f32 %v1891, %v1878
  %v1900 = vadd.f32 %v1892, %v1879
  %v1901 = vxor.u32 %v1893, 2147483648
  %v1902 = vxor.u32 %v1897, 2147483648
  %v1903 = vmul.f32 %v1901, 1.442695
  %v1904 = vpow.pop %v1903
  %v1905 = vmul.f32 %v1902, 1.442695
  %v1906 = vpow.pop %v1905
  %v1907 = vadd.f32 %v1904, 1.0
  %v1908 = vadd.f32 %v1906, 1.0
  %v1909 = vrcp.pop %v1907
  %v1910 = vmul.f32 1.0, %v1909
  %v1911 = vrcp.pop %v1908
  %v1912 = vmul.f32 1.0, %v1911
  %v1913 = vxor.u32 %v1894, 2147483648
  %v1914 = vxor.u32 %v1898, 2147483648
  %v1915 = vmul.f32 %v1913, 1.442695
  %v1916 = vpow.pop %v1915
  %v1917 = vmul.f32 %v1914, 1.442695
  %v1918 = vpow.pop %v1917
  %v1919 = vadd.f32 %v1916, 1.0
  %v1920 = vadd.f32 %v1918, 1.0
  %v1921 = vrcp.pop %v1919
  %v1922 = vmul.f32 1.0, %v1921
  %v1923 = vrcp.pop %v1920
  %v1924 = vmul.f32 1.0, %v1923
  %v1925 = vtanh.pop %v1895
  %v1926 = vtanh.pop %v1899
  %v1927 = vxor.u32 %v1896, 2147483648
  %v1928 = vxor.u32 %v1900, 2147483648
  %v1929 = vmul.f32 %v1927, 1.442695
  %v1930 = vpow.pop %v1929
  %v1931 = vmul.f32 %v1928, 1.442695
  %v1932 = vpow.pop %v1931
  %v1933 = vadd.f32 %v1930, 1.0
  %v1934 = vadd.f32 %v1932, 1.0
  %v1935 = vrcp.pop %v1933
  %v1936 = vmul.f32 1.0, %v1935
  %v1937 = vrcp.pop %v1934
  %v1938 = vmul.f32 1.0, %v1937
  %v1939 = vmul.f32 %v1922, %v1307
  %v1940 = vmul.f32 %v1924, %v1308
  %v1941 = vmul.f32 %v1910, %v1925
  %v1942 = vmul.f32 %v1912, %v1926
  %v1943 = vadd.f32 %v1939, %v1941
  %v1944 = vadd.f32 %v1940, %v1942
  %v1945 = vtanh.pop %v1943
  %v1946 = vtanh.pop %v1944
  %v1947 = vmul.f32 %v1936, %v1945
  %v1948 = vmul.f32 %v1938, %v1946
  %v1949 = vsel %vm20, 2, 5
  %v1950 = vsel %vm21, 2, 5
  %vm1951 = vcmp.gt.s32.totalorder %v15, %v1949
  %vm1952 = vcmp.gt.s32.totalorder %v16, %v1950
  %v1953 = vsel %vm1951, %v1947, %v1305
  %v1954 = vsel %vm1952, %v1948, %v1306
  %v1955 = vsel %vm1951, %v1943, %v1307
  %v1956 = vsel %vm1952, %v1944, %v1308
  %v1957 = vpack.c.bf16 %v1953, %v1953
  %s1958 = scalar_lea.vmem %s3, 16
  %1959 = vst [vmem:[%s1958] sm:$0xf] %v1957
  %v1960 = vpack.c.bf16 %v1954, %v1954
  %s1961 = scalar_lea.vmem %s3, 40
  %1962 = vst [vmem:[%s1961 + $0x4] sm:$0xf] %v1960
  %v1963 = vpack.c.bf16 %v1954, %v1953
  %v1964 = vld [vmem:[%s2] sm:$0xff]
  %v1965 = vld [vmem:[%s2 + $0x8] sm:$0xff]
  %v1966 = vld [vmem:[%s2 + $0x10] sm:$0xff]
  %v1967 = vld [vmem:[%s2 + $0x18] sm:$0xff]
  %v1968 = vld [vmem:[%s2 + $0x20] sm:$0xff]
  %v1969 = vld [vmem:[%s2 + $0x28] sm:$0xff]
  %v1970 = vld [vmem:[%s2 + $0x30] sm:$0xff]
  %v1971 = vld [vmem:[%s2 + $0x38] sm:$0xff]
  %v1972 = vld [vmem:[%s2 + $0x40] sm:$0xff]
  %v1973 = vld [vmem:[%s2 + $0x48] sm:$0xff]
  %v1974 = vld [vmem:[%s2 + $0x50] sm:$0xff]
  %v1975 = vld [vmem:[%s2 + $0x58] sm:$0xff]
  %v1976 = vld [vmem:[%s2 + $0x60] sm:$0xff]
  %v1977 = vld [vmem:[%s2 + $0x68] sm:$0xff]
  %v1978 = vld [vmem:[%s2 + $0x70] sm:$0xff]
  %v1979 = vld [vmem:[%s2 + $0x78] sm:$0xff]
  %v1980 = vld [vmem:[%s2 + $0x80] sm:$0xff]
  %v1981 = vld [vmem:[%s2 + $0x88] sm:$0xff]
  %v1982 = vld [vmem:[%s2 + $0x90] sm:$0xff]
  %v1983 = vld [vmem:[%s2 + $0x98] sm:$0xff]
  %v1984 = vld [vmem:[%s2 + $0xa0] sm:$0xff]
  %v1985 = vld [vmem:[%s2 + $0xa8] sm:$0xff]
  %v1986 = vld [vmem:[%s2 + $0xb0] sm:$0xff]
  %v1987 = vld [vmem:[%s2 + $0xb8] sm:$0xff]
  %v1988 = vld [vmem:[%s2 + $0xc0] sm:$0xff]
  %v1989 = vld [vmem:[%s2 + $0xc8] sm:$0xff]
  %v1990 = vld [vmem:[%s2 + $0xd0] sm:$0xff]
  %v1991 = vld [vmem:[%s2 + $0xd8] sm:$0xff]
  %v1992 = vld [vmem:[%s2 + $0xe0] sm:$0xff]
  %v1993 = vld [vmem:[%s2 + $0xe8] sm:$0xff]
  %v1994 = vld [vmem:[%s2 + $0xf0] sm:$0xff]
  %v1995 = vld [vmem:[%s2 + $0xf8] sm:$0xff]
  %v1996 = vld [vmem:[%s2 + $0x100] sm:$0xff]
  %v1997 = vld [vmem:[%s2 + $0x108] sm:$0xff]
  %v1998 = vld [vmem:[%s2 + $0x110] sm:$0xff]
  %v1999 = vld [vmem:[%s2 + $0x118] sm:$0xff]
  %v2000 = vld [vmem:[%s2 + $0x120] sm:$0xff]
  %v2001 = vld [vmem:[%s2 + $0x128] sm:$0xff]
  %v2002 = vld [vmem:[%s2 + $0x130] sm:$0xff]
  %v2003 = vld [vmem:[%s2 + $0x138] sm:$0xff]
  %v2004 = vld [vmem:[%s2 + $0x140] sm:$0xff]
  %v2005 = vld [vmem:[%s2 + $0x148] sm:$0xff]
  %v2006 = vld [vmem:[%s2 + $0x150] sm:$0xff]
  %v2007 = vld [vmem:[%s2 + $0x158] sm:$0xff]
  %v2008 = vld [vmem:[%s2 + $0x160] sm:$0xff]
  %v2009 = vld [vmem:[%s2 + $0x168] sm:$0xff]
  %v2010 = vld [vmem:[%s2 + $0x170] sm:$0xff]
  %v2011 = vld [vmem:[%s2 + $0x178] sm:$0xff]
  %v2012 = vld [vmem:[%s2 + $0x180] sm:$0xff]
  %v2013 = vld [vmem:[%s2 + $0x188] sm:$0xff]
  %v2014 = vld [vmem:[%s2 + $0x190] sm:$0xff]
  %v2015 = vld [vmem:[%s2 + $0x198] sm:$0xff]
  %v2016 = vld [vmem:[%s2 + $0x1a0] sm:$0xff]
  %v2017 = vld [vmem:[%s2 + $0x1a8] sm:$0xff]
  %v2018 = vld [vmem:[%s2 + $0x1b0] sm:$0xff]
  %v2019 = vld [vmem:[%s2 + $0x1b8] sm:$0xff]
  %v2020 = vld [vmem:[%s2 + $0x1c0] sm:$0xff]
  %v2021 = vld [vmem:[%s2 + $0x1c8] sm:$0xff]
  %v2022 = vld [vmem:[%s2 + $0x1d0] sm:$0xff]
  %v2023 = vld [vmem:[%s2 + $0x1d8] sm:$0xff]
  %v2024 = vld [vmem:[%s2 + $0x1e0] sm:$0xff]
  %v2025 = vld [vmem:[%s2 + $0x1e8] sm:$0xff]
  %v2026 = vld [vmem:[%s2 + $0x1f0] sm:$0xff]
  %v2027 = vld [vmem:[%s2 + $0x1f8] sm:$0xff]
  %v2092 = vunpack.c.l.b16 %v1964
  %v2093 = vunpack.c.h.b16 %v1964
  %v2094 = vunpack.c.l.b16 %v1965
  %v2095 = vunpack.c.h.b16 %v1965
  %v2096 = vunpack.c.l.b16 %v1966
  %v2097 = vunpack.c.h.b16 %v1966
  %v2098 = vunpack.c.l.b16 %v1967
  %v2099 = vunpack.c.h.b16 %v1967
  %v2100 = vunpack.c.l.b16 %v1968
  %v2101 = vunpack.c.h.b16 %v1968
  %v2102 = vunpack.c.l.b16 %v1969
  %v2103 = vunpack.c.h.b16 %v1969
  %v2104 = vunpack.c.l.b16 %v1970
  %v2105 = vunpack.c.h.b16 %v1970
  %v2106 = vunpack.c.l.b16 %v1971
  %v2107 = vunpack.c.h.b16 %v1971
  %v2108 = vunpack.c.l.b16 %v1972
  %v2109 = vunpack.c.h.b16 %v1972
  %v2110 = vunpack.c.l.b16 %v1973
  %v2111 = vunpack.c.h.b16 %v1973
  %v2112 = vunpack.c.l.b16 %v1974
  %v2113 = vunpack.c.h.b16 %v1974
  %v2114 = vunpack.c.l.b16 %v1975
  %v2115 = vunpack.c.h.b16 %v1975
  %v2116 = vunpack.c.l.b16 %v1976
  %v2117 = vunpack.c.h.b16 %v1976
  %v2118 = vunpack.c.l.b16 %v1977
  %v2119 = vunpack.c.h.b16 %v1977
  %v2120 = vunpack.c.l.b16 %v1978
  %v2121 = vunpack.c.h.b16 %v1978
  %v2122 = vunpack.c.l.b16 %v1979
  %v2123 = vunpack.c.h.b16 %v1979
  %v2124 = vunpack.c.l.b16 %v1980
  %v2125 = vunpack.c.h.b16 %v1980
  %v2126 = vunpack.c.l.b16 %v1981
  %v2127 = vunpack.c.h.b16 %v1981
  %v2128 = vunpack.c.l.b16 %v1982
  %v2129 = vunpack.c.h.b16 %v1982
  %v2130 = vunpack.c.l.b16 %v1983
  %v2131 = vunpack.c.h.b16 %v1983
  %v2132 = vunpack.c.l.b16 %v1984
  %v2133 = vunpack.c.h.b16 %v1984
  %v2134 = vunpack.c.l.b16 %v1985
  %v2135 = vunpack.c.h.b16 %v1985
  %v2136 = vunpack.c.l.b16 %v1986
  %v2137 = vunpack.c.h.b16 %v1986
  %v2138 = vunpack.c.l.b16 %v1987
  %v2139 = vunpack.c.h.b16 %v1987
  %v2140 = vunpack.c.l.b16 %v1988
  %v2141 = vunpack.c.h.b16 %v1988
  %v2142 = vunpack.c.l.b16 %v1989
  %v2143 = vunpack.c.h.b16 %v1989
  %v2144 = vunpack.c.l.b16 %v1990
  %v2145 = vunpack.c.h.b16 %v1990
  %v2146 = vunpack.c.l.b16 %v1991
  %v2147 = vunpack.c.h.b16 %v1991
  %v2148 = vunpack.c.l.b16 %v1992
  %v2149 = vunpack.c.h.b16 %v1992
  %v2150 = vunpack.c.l.b16 %v1993
  %v2151 = vunpack.c.h.b16 %v1993
  %v2152 = vunpack.c.l.b16 %v1994
  %v2153 = vunpack.c.h.b16 %v1994
  %v2154 = vunpack.c.l.b16 %v1995
  %v2155 = vunpack.c.h.b16 %v1995
  %v2156 = vunpack.c.l.b16 %v1996
  %v2157 = vunpack.c.h.b16 %v1996
  %v2158 = vunpack.c.l.b16 %v1997
  %v2159 = vunpack.c.h.b16 %v1997
  %v2160 = vunpack.c.l.b16 %v1998
  %v2161 = vunpack.c.h.b16 %v1998
  %v2162 = vunpack.c.l.b16 %v1999
  %v2163 = vunpack.c.h.b16 %v1999
  %v2164 = vunpack.c.l.b16 %v2000
  %v2165 = vunpack.c.h.b16 %v2000
  %v2166 = vunpack.c.l.b16 %v2001
  %v2167 = vunpack.c.h.b16 %v2001
  %v2168 = vunpack.c.l.b16 %v2002
  %v2169 = vunpack.c.h.b16 %v2002
  %v2170 = vunpack.c.l.b16 %v2003
  %v2171 = vunpack.c.h.b16 %v2003
  %v2172 = vunpack.c.l.b16 %v2004
  %v2173 = vunpack.c.h.b16 %v2004
  %v2174 = vunpack.c.l.b16 %v2005
  %v2175 = vunpack.c.h.b16 %v2005
  %v2176 = vunpack.c.l.b16 %v2006
  %v2177 = vunpack.c.h.b16 %v2006
  %v2178 = vunpack.c.l.b16 %v2007
  %v2179 = vunpack.c.h.b16 %v2007
  %v2180 = vunpack.c.l.b16 %v2008
  %v2181 = vunpack.c.h.b16 %v2008
  %v2182 = vunpack.c.l.b16 %v2009
  %v2183 = vunpack.c.h.b16 %v2009
  %v2184 = vunpack.c.l.b16 %v2010
  %v2185 = vunpack.c.h.b16 %v2010
  %v2186 = vunpack.c.l.b16 %v2011
  %v2187 = vunpack.c.h.b16 %v2011
  %v2188 = vunpack.c.l.b16 %v2012
  %v2189 = vunpack.c.h.b16 %v2012
  %v2190 = vunpack.c.l.b16 %v2013
  %v2191 = vunpack.c.h.b16 %v2013
  %v2192 = vunpack.c.l.b16 %v2014
  %v2193 = vunpack.c.h.b16 %v2014
  %v2194 = vunpack.c.l.b16 %v2015
  %v2195 = vunpack.c.h.b16 %v2015
  %v2196 = vunpack.c.l.b16 %v2016
  %v2197 = vunpack.c.h.b16 %v2016
  %v2198 = vunpack.c.l.b16 %v2017
  %v2199 = vunpack.c.h.b16 %v2017
  %v2200 = vunpack.c.l.b16 %v2018
  %v2201 = vunpack.c.h.b16 %v2018
  %v2202 = vunpack.c.l.b16 %v2019
  %v2203 = vunpack.c.h.b16 %v2019
  %v2204 = vunpack.c.l.b16 %v2020
  %v2205 = vunpack.c.h.b16 %v2020
  %v2206 = vunpack.c.l.b16 %v2021
  %v2207 = vunpack.c.h.b16 %v2021
  %v2208 = vunpack.c.l.b16 %v2022
  %v2209 = vunpack.c.h.b16 %v2022
  %v2210 = vunpack.c.l.b16 %v2023
  %v2211 = vunpack.c.h.b16 %v2023
  %v2212 = vunpack.c.l.b16 %v2024
  %v2213 = vunpack.c.h.b16 %v2024
  %v2214 = vunpack.c.l.b16 %v2025
  %v2215 = vunpack.c.h.b16 %v2025
  %v2216 = vunpack.c.l.b16 %v2026
  %v2217 = vunpack.c.h.b16 %v2026
  %v2218 = vunpack.c.l.b16 %v2027
  %v2219 = vunpack.c.h.b16 %v2027
  %v2220 = vpack.c.b16 %v2100, %v2092
  %v2221 = vpack.c.b16 %v2101, %v2093
  %v2222 = vpack.c.b16 %v2102, %v2094
  %v2223 = vpack.c.b16 %v2103, %v2095
  %v2224 = vpack.c.b16 %v2104, %v2096
  %v2225 = vpack.c.b16 %v2105, %v2097
  %v2226 = vpack.c.b16 %v2106, %v2098
  %v2227 = vpack.c.b16 %v2107, %v2099
  %v2228 = vpack.c.b16 %v2116, %v2108
  %v2229 = vpack.c.b16 %v2117, %v2109
  %v2230 = vpack.c.b16 %v2118, %v2110
  %v2231 = vpack.c.b16 %v2119, %v2111
  %v2232 = vpack.c.b16 %v2120, %v2112
  %v2233 = vpack.c.b16 %v2121, %v2113
  %v2234 = vpack.c.b16 %v2122, %v2114
  %v2235 = vpack.c.b16 %v2123, %v2115
  %v2236 = vpack.c.b16 %v2132, %v2124
  %v2237 = vpack.c.b16 %v2133, %v2125
  %v2238 = vpack.c.b16 %v2134, %v2126
  %v2239 = vpack.c.b16 %v2135, %v2127
  %v2240 = vpack.c.b16 %v2136, %v2128
  %v2241 = vpack.c.b16 %v2137, %v2129
  %v2242 = vpack.c.b16 %v2138, %v2130
  %v2243 = vpack.c.b16 %v2139, %v2131
  %v2244 = vpack.c.b16 %v2148, %v2140
  %v2245 = vpack.c.b16 %v2149, %v2141
  %v2246 = vpack.c.b16 %v2150, %v2142
  %v2247 = vpack.c.b16 %v2151, %v2143
  %v2248 = vpack.c.b16 %v2152, %v2144
  %v2249 = vpack.c.b16 %v2153, %v2145
  %v2250 = vpack.c.b16 %v2154, %v2146
  %v2251 = vpack.c.b16 %v2155, %v2147
  %v2252 = vpack.c.b16 %v2164, %v2156
  %v2253 = vpack.c.b16 %v2165, %v2157
  %v2254 = vpack.c.b16 %v2166, %v2158
  %v2255 = vpack.c.b16 %v2167, %v2159
  %v2256 = vpack.c.b16 %v2168, %v2160
  %v2257 = vpack.c.b16 %v2169, %v2161
  %v2258 = vpack.c.b16 %v2170, %v2162
  %v2259 = vpack.c.b16 %v2171, %v2163
  %v2260 = vpack.c.b16 %v2180, %v2172
  %v2261 = vpack.c.b16 %v2181, %v2173
  %v2262 = vpack.c.b16 %v2182, %v2174
  %v2263 = vpack.c.b16 %v2183, %v2175
  %v2264 = vpack.c.b16 %v2184, %v2176
  %v2265 = vpack.c.b16 %v2185, %v2177
  %v2266 = vpack.c.b16 %v2186, %v2178
  %v2267 = vpack.c.b16 %v2187, %v2179
  %v2268 = vpack.c.b16 %v2196, %v2188
  %v2269 = vpack.c.b16 %v2197, %v2189
  %v2270 = vpack.c.b16 %v2198, %v2190
  %v2271 = vpack.c.b16 %v2199, %v2191
  %v2272 = vpack.c.b16 %v2200, %v2192
  %v2273 = vpack.c.b16 %v2201, %v2193
  %v2274 = vpack.c.b16 %v2202, %v2194
  %v2275 = vpack.c.b16 %v2203, %v2195
  %v2276 = vpack.c.b16 %v2212, %v2204
  %v2277 = vpack.c.b16 %v2213, %v2205
  %v2278 = vpack.c.b16 %v2214, %v2206
  %v2279 = vpack.c.b16 %v2215, %v2207
  %v2280 = vpack.c.b16 %v2216, %v2208
  %v2281 = vpack.c.b16 %v2217, %v2209
  %v2282 = vpack.c.b16 %v2218, %v2210
  %v2283 = vpack.c.b16 %v2219, %v2211
  %2348 = vmatprep.subr.bf16.mxu0 %v2277
  %2349 = vmatpush1.bf16.msra.mxu0 %v2276
  %2350 = vmatprep.subr.bf16.mxu0 %v2269
  %2351 = vmatpush1.bf16.msra.mxu0 %v2268
  %2352 = vmatprep.subr.bf16.mxu0 %v2261
  %2353 = vmatpush1.bf16.msra.mxu0 %v2260
  %2354 = vmatprep.subr.bf16.mxu0 %v2253
  %2355 = vmatpush1.bf16.msra.mxu0 %v2252
  %2356 = vmatprep.subr.bf16.mxu0 %v2245
  %2357 = vmatpush1.bf16.msra.mxu0 %v2244
  %2358 = vmatprep.subr.bf16.mxu0 %v2237
  %2359 = vmatpush1.bf16.msra.mxu0 %v2236
  %2360 = vmatprep.subr.bf16.mxu0 %v2229
  %2361 = vmatpush1.bf16.msra.mxu0 %v2228
  %2362 = vmatprep.subr.bf16.mxu0 %v2221
  %2363 = vmatpush1.bf16.msra.mxu0 %v2220
  %2364 = vmatprep.subr.bf16.mxu0 0
  %2365 = vmatpush2.bf16.msra.mxu0 0
  %2366 = vmatprep.subr.bf16.mxu0 0
  %2367 = vmatpush2.bf16.msra.mxu0 0
  %2368 = vmatprep.subr.bf16.mxu0 0
  %2369 = vmatpush2.bf16.msra.mxu0 0
  %2370 = vmatprep.subr.bf16.mxu0 0
  %2371 = vmatpush2.bf16.msra.mxu0 0
  %2372 = vmatprep.subr.bf16.mxu0 0
  %2373 = vmatpush2.bf16.msra.mxu0 0
  %2374 = vmatprep.subr.bf16.mxu0 0
  %2375 = vmatpush2.bf16.msra.mxu0 0
  %2376 = vmatprep.subr.bf16.mxu0 0
  %2377 = vmatpush2.bf16.msra.mxu0 0
  %2378 = vmatprep.subr.bf16.mxu0 0
  %2379 = vmatpush2.bf16.msra.mxu0 0
  %2380 = vmatprep.mubr.bf16.mxu0 0
  %2381 = vmatmul.mubr.bf16.gmra.mxu0 %v1963
  %v2382 = vpop.f32.mrf.mxu0
  %v2383 = vadd.f32 0.0, %v2382
  %v2384 = vpop.f32.mrf.mxu0
  %v2385 = vadd.f32 0.0, %v2384
  %v2386 = vpop.f32.mrf.mxu0
  %v2387 = vadd.f32 0.0, %v2386
  %v2388 = vpop.f32.mrf.mxu0
  %v2389 = vadd.f32 0.0, %v2388
  %2390 = vdwg.mxu0
  %2391 = vmatprep.subr.bf16.mxu0 %v2279
  %2392 = vmatpush1.bf16.msra.mxu0 %v2278
  %2393 = vmatprep.subr.bf16.mxu0 %v2271
  %2394 = vmatpush1.bf16.msra.mxu0 %v2270
  %2395 = vmatprep.subr.bf16.mxu0 %v2263
  %2396 = vmatpush1.bf16.msra.mxu0 %v2262
  %2397 = vmatprep.subr.bf16.mxu0 %v2255
  %2398 = vmatpush1.bf16.msra.mxu0 %v2254
  %2399 = vmatprep.subr.bf16.mxu0 %v2247
  %2400 = vmatpush1.bf16.msra.mxu0 %v2246
  %2401 = vmatprep.subr.bf16.mxu0 %v2239
  %2402 = vmatpush1.bf16.msra.mxu0 %v2238
  %2403 = vmatprep.subr.bf16.mxu0 %v2231
  %2404 = vmatpush1.bf16.msra.mxu0 %v2230
  %2405 = vmatprep.subr.bf16.mxu0 %v2223
  %2406 = vmatpush1.bf16.msra.mxu0 %v2222
  %2407 = vmatprep.subr.bf16.mxu0 0
  %2408 = vmatpush2.bf16.msra.mxu0 0
  %2409 = vmatprep.subr.bf16.mxu0 0
  %2410 = vmatpush2.bf16.msra.mxu0 0
  %2411 = vmatprep.subr.bf16.mxu0 0
  %2412 = vmatpush2.bf16.msra.mxu0 0
  %2413 = vmatprep.subr.bf16.mxu0 0
  %2414 = vmatpush2.bf16.msra.mxu0 0
  %2415 = vmatprep.subr.bf16.mxu0 0
  %2416 = vmatpush2.bf16.msra.mxu0 0
  %2417 = vmatprep.subr.bf16.mxu0 0
  %2418 = vmatpush2.bf16.msra.mxu0 0
  %2419 = vmatprep.subr.bf16.mxu0 0
  %2420 = vmatpush2.bf16.msra.mxu0 0
  %2421 = vmatprep.subr.bf16.mxu0 0
  %2422 = vmatpush2.bf16.msra.mxu0 0
  %2423 = vmatprep.mubr.bf16.mxu0 0
  %2424 = vmatmul.mubr.bf16.gmra.mxu0 %v1963
  %v2425 = vpop.f32.mrf.mxu0
  %v2426 = vadd.f32 0.0, %v2425
  %v2427 = vpop.f32.mrf.mxu0
  %v2428 = vadd.f32 0.0, %v2427
  %v2429 = vpop.f32.mrf.mxu0
  %v2430 = vadd.f32 0.0, %v2429
  %v2431 = vpop.f32.mrf.mxu0
  %v2432 = vadd.f32 0.0, %v2431
  %2433 = vdwg.mxu0
  %2434 = vmatprep.subr.bf16.mxu0 %v2281
  %2435 = vmatpush1.bf16.msra.mxu0 %v2280
  %2436 = vmatprep.subr.bf16.mxu0 %v2273
  %2437 = vmatpush1.bf16.msra.mxu0 %v2272
  %2438 = vmatprep.subr.bf16.mxu0 %v2265
  %2439 = vmatpush1.bf16.msra.mxu0 %v2264
  %2440 = vmatprep.subr.bf16.mxu0 %v2257
  %2441 = vmatpush1.bf16.msra.mxu0 %v2256
  %2442 = vmatprep.subr.bf16.mxu0 %v2249
  %2443 = vmatpush1.bf16.msra.mxu0 %v2248
  %2444 = vmatprep.subr.bf16.mxu0 %v2241
  %2445 = vmatpush1.bf16.msra.mxu0 %v2240
  %2446 = vmatprep.subr.bf16.mxu0 %v2233
  %2447 = vmatpush1.bf16.msra.mxu0 %v2232
  %2448 = vmatprep.subr.bf16.mxu0 %v2225
  %2449 = vmatpush1.bf16.msra.mxu0 %v2224
  %2450 = vmatprep.subr.bf16.mxu0 0
  %2451 = vmatpush2.bf16.msra.mxu0 0
  %2452 = vmatprep.subr.bf16.mxu0 0
  %2453 = vmatpush2.bf16.msra.mxu0 0
  %2454 = vmatprep.subr.bf16.mxu0 0
  %2455 = vmatpush2.bf16.msra.mxu0 0
  %2456 = vmatprep.subr.bf16.mxu0 0
  %2457 = vmatpush2.bf16.msra.mxu0 0
  %2458 = vmatprep.subr.bf16.mxu0 0
  %2459 = vmatpush2.bf16.msra.mxu0 0
  %2460 = vmatprep.subr.bf16.mxu0 0
  %2461 = vmatpush2.bf16.msra.mxu0 0
  %2462 = vmatprep.subr.bf16.mxu0 0
  %2463 = vmatpush2.bf16.msra.mxu0 0
  %2464 = vmatprep.subr.bf16.mxu0 0
  %2465 = vmatpush2.bf16.msra.mxu0 0
  %2466 = vmatprep.mubr.bf16.mxu0 0
  %2467 = vmatmul.mubr.bf16.gmra.mxu0 %v1963
  %v2468 = vpop.f32.mrf.mxu0
  %v2469 = vadd.f32 0.0, %v2468
  %v2470 = vpop.f32.mrf.mxu0
  %v2471 = vadd.f32 0.0, %v2470
  %v2472 = vpop.f32.mrf.mxu0
  %v2473 = vadd.f32 0.0, %v2472
  %v2474 = vpop.f32.mrf.mxu0
  %v2475 = vadd.f32 0.0, %v2474
  %2476 = vdwg.mxu0
  %2477 = vmatprep.subr.bf16.mxu0 %v2283
  %2478 = vmatpush1.bf16.msra.mxu0 %v2282
  %2479 = vmatprep.subr.bf16.mxu0 %v2275
  %2480 = vmatpush1.bf16.msra.mxu0 %v2274
  %2481 = vmatprep.subr.bf16.mxu0 %v2267
  %2482 = vmatpush1.bf16.msra.mxu0 %v2266
  %2483 = vmatprep.subr.bf16.mxu0 %v2259
  %2484 = vmatpush1.bf16.msra.mxu0 %v2258
  %2485 = vmatprep.subr.bf16.mxu0 %v2251
  %2486 = vmatpush1.bf16.msra.mxu0 %v2250
  %2487 = vmatprep.subr.bf16.mxu0 %v2243
  %2488 = vmatpush1.bf16.msra.mxu0 %v2242
  %2489 = vmatprep.subr.bf16.mxu0 %v2235
  %2490 = vmatpush1.bf16.msra.mxu0 %v2234
  %2491 = vmatprep.subr.bf16.mxu0 %v2227
  %2492 = vmatpush1.bf16.msra.mxu0 %v2226
  %2493 = vmatprep.subr.bf16.mxu0 0
  %2494 = vmatpush2.bf16.msra.mxu0 0
  %2495 = vmatprep.subr.bf16.mxu0 0
  %2496 = vmatpush2.bf16.msra.mxu0 0
  %2497 = vmatprep.subr.bf16.mxu0 0
  %2498 = vmatpush2.bf16.msra.mxu0 0
  %2499 = vmatprep.subr.bf16.mxu0 0
  %2500 = vmatpush2.bf16.msra.mxu0 0
  %2501 = vmatprep.subr.bf16.mxu0 0
  %2502 = vmatpush2.bf16.msra.mxu0 0
  %2503 = vmatprep.subr.bf16.mxu0 0
  %2504 = vmatpush2.bf16.msra.mxu0 0
  %2505 = vmatprep.subr.bf16.mxu0 0
  %2506 = vmatpush2.bf16.msra.mxu0 0
  %2507 = vmatprep.subr.bf16.mxu0 0
  %2508 = vmatpush2.bf16.msra.mxu0 0
  %2509 = vmatprep.mubr.bf16.mxu0 0
  %2510 = vmatmul.mubr.bf16.gmra.mxu0 %v1963
  %v2511 = vpop.f32.mrf.mxu0
  %v2512 = vadd.f32 0.0, %v2511
  %v2513 = vpop.f32.mrf.mxu0
  %v2514 = vadd.f32 0.0, %v2513
  %v2515 = vpop.f32.mrf.mxu0
  %v2516 = vadd.f32 0.0, %v2515
  %v2517 = vpop.f32.mrf.mxu0
  %v2518 = vadd.f32 0.0, %v2517
  %2519 = vdwg.mxu0
  %v2520 = vsel %vm20, %v2383, %v2469
  %v2521 = vsel %vm20, %v2385, %v2471
  %v2522 = vsel %vm20, %v2426, %v2512
  %v2523 = vsel %vm20, %v2428, %v2514
  %v2524 = vsel %vm21, %v2387, %v2473
  %v2525 = vsel %vm21, %v2389, %v2475
  %v2526 = vsel %vm21, %v2430, %v2516
  %v2527 = vsel %vm21, %v2432, %v2518
  %s2528 = scalar_lea.vmem %s0, 96
  %v2529 = vld [vmem:[%s2528] sm:$0xff]
  %v2530 = vld [vmem:[%s2528 + $0x8] sm:$0xff]
  %v2531 = vld [vmem:[%s2528 + $0x10] sm:$0xff]
  %v2532 = vld [vmem:[%s2528 + $0x18] sm:$0xff]
  %v2533 = vunpack.c.l.bf16 %v2529
  %v2534 = vunpack.c.h.bf16 %v2529
  %v2535 = vunpack.c.l.bf16 %v2530
  %v2536 = vunpack.c.h.bf16 %v2530
  %v2537 = vunpack.c.l.bf16 %v2531
  %v2538 = vunpack.c.h.bf16 %v2531
  %v2539 = vunpack.c.l.bf16 %v2532
  %v2540 = vunpack.c.h.bf16 %v2532
  %v2541 = vadd.f32 %v2533, %v2520
  %v2542 = vadd.f32 %v2534, %v2521
  %v2543 = vadd.f32 %v2535, %v2522
  %v2544 = vadd.f32 %v2536, %v2523
  %v2545 = vadd.f32 %v2537, %v2524
  %v2546 = vadd.f32 %v2538, %v2525
  %v2547 = vadd.f32 %v2539, %v2526
  %v2548 = vadd.f32 %v2540, %v2527
  %v2549 = vxor.u32 %v2541, 2147483648
  %v2550 = vxor.u32 %v2545, 2147483648
  %v2551 = vmul.f32 %v2549, 1.442695
  %v2552 = vpow.pop %v2551
  %v2553 = vmul.f32 %v2550, 1.442695
  %v2554 = vpow.pop %v2553
  %v2555 = vadd.f32 %v2552, 1.0
  %v2556 = vadd.f32 %v2554, 1.0
  %v2557 = vrcp.pop %v2555
  %v2558 = vmul.f32 1.0, %v2557
  %v2559 = vrcp.pop %v2556
  %v2560 = vmul.f32 1.0, %v2559
  %v2561 = vxor.u32 %v2542, 2147483648
  %v2562 = vxor.u32 %v2546, 2147483648
  %v2563 = vmul.f32 %v2561, 1.442695
  %v2564 = vpow.pop %v2563
  %v2565 = vmul.f32 %v2562, 1.442695
  %v2566 = vpow.pop %v2565
  %v2567 = vadd.f32 %v2564, 1.0
  %v2568 = vadd.f32 %v2566, 1.0
  %v2569 = vrcp.pop %v2567
  %v2570 = vmul.f32 1.0, %v2569
  %v2571 = vrcp.pop %v2568
  %v2572 = vmul.f32 1.0, %v2571
  %v2573 = vtanh.pop %v2543
  %v2574 = vtanh.pop %v2547
  %v2575 = vxor.u32 %v2544, 2147483648
  %v2576 = vxor.u32 %v2548, 2147483648
  %v2577 = vmul.f32 %v2575, 1.442695
  %v2578 = vpow.pop %v2577
  %v2579 = vmul.f32 %v2576, 1.442695
  %v2580 = vpow.pop %v2579
  %v2581 = vadd.f32 %v2578, 1.0
  %v2582 = vadd.f32 %v2580, 1.0
  %v2583 = vrcp.pop %v2581
  %v2584 = vmul.f32 1.0, %v2583
  %v2585 = vrcp.pop %v2582
  %v2586 = vmul.f32 1.0, %v2585
  %v2587 = vmul.f32 %v2570, %v1955
  %v2588 = vmul.f32 %v2572, %v1956
  %v2589 = vmul.f32 %v2558, %v2573
  %v2590 = vmul.f32 %v2560, %v2574
  %v2591 = vadd.f32 %v2587, %v2589
  %v2592 = vadd.f32 %v2588, %v2590
  %v2593 = vtanh.pop %v2591
  %v2594 = vtanh.pop %v2592
  %v2595 = vmul.f32 %v2584, %v2593
  %v2596 = vmul.f32 %v2586, %v2594
  %v2597 = vsel %vm20, 3, 4
  %v2598 = vsel %vm21, 3, 4
  %vm2599 = vcmp.gt.s32.totalorder %v15, %v2597
  %vm2600 = vcmp.gt.s32.totalorder %v16, %v2598
  %v2601 = vsel %vm2599, %v2595, %v1953
  %v2602 = vsel %vm2600, %v2596, %v1954
  %v2603 = vsel %vm2599, %v2591, %v1955
  %v2604 = vsel %vm2600, %v2592, %v1956
  %v2605 = vpack.c.bf16 %v2601, %v2601
  %s2606 = scalar_lea.vmem %s3, 24
  %2607 = vst [vmem:[%s2606] sm:$0xf] %v2605
  %v2608 = vpack.c.bf16 %v2602, %v2602
  %s2609 = scalar_lea.vmem %s3, 32
  %2610 = vst [vmem:[%s2609 + $0x4] sm:$0xf] %v2608
  %v2611 = vpack.c.bf16 %v2602, %v2601
  %v2612 = vld [vmem:[%s2] sm:$0xff]
  %v2613 = vld [vmem:[%s2 + $0x8] sm:$0xff]
  %v2614 = vld [vmem:[%s2 + $0x10] sm:$0xff]
  %v2615 = vld [vmem:[%s2 + $0x18] sm:$0xff]
  %v2616 = vld [vmem:[%s2 + $0x20] sm:$0xff]
  %v2617 = vld [vmem:[%s2 + $0x28] sm:$0xff]
  %v2618 = vld [vmem:[%s2 + $0x30] sm:$0xff]
  %v2619 = vld [vmem:[%s2 + $0x38] sm:$0xff]
  %v2620 = vld [vmem:[%s2 + $0x40] sm:$0xff]
  %v2621 = vld [vmem:[%s2 + $0x48] sm:$0xff]
  %v2622 = vld [vmem:[%s2 + $0x50] sm:$0xff]
  %v2623 = vld [vmem:[%s2 + $0x58] sm:$0xff]
  %v2624 = vld [vmem:[%s2 + $0x60] sm:$0xff]
  %v2625 = vld [vmem:[%s2 + $0x68] sm:$0xff]
  %v2626 = vld [vmem:[%s2 + $0x70] sm:$0xff]
  %v2627 = vld [vmem:[%s2 + $0x78] sm:$0xff]
  %v2628 = vld [vmem:[%s2 + $0x80] sm:$0xff]
  %v2629 = vld [vmem:[%s2 + $0x88] sm:$0xff]
  %v2630 = vld [vmem:[%s2 + $0x90] sm:$0xff]
  %v2631 = vld [vmem:[%s2 + $0x98] sm:$0xff]
  %v2632 = vld [vmem:[%s2 + $0xa0] sm:$0xff]
  %v2633 = vld [vmem:[%s2 + $0xa8] sm:$0xff]
  %v2634 = vld [vmem:[%s2 + $0xb0] sm:$0xff]
  %v2635 = vld [vmem:[%s2 + $0xb8] sm:$0xff]
  %v2636 = vld [vmem:[%s2 + $0xc0] sm:$0xff]
  %v2637 = vld [vmem:[%s2 + $0xc8] sm:$0xff]
  %v2638 = vld [vmem:[%s2 + $0xd0] sm:$0xff]
  %v2639 = vld [vmem:[%s2 + $0xd8] sm:$0xff]
  %v2640 = vld [vmem:[%s2 + $0xe0] sm:$0xff]
  %v2641 = vld [vmem:[%s2 + $0xe8] sm:$0xff]
  %v2642 = vld [vmem:[%s2 + $0xf0] sm:$0xff]
  %v2643 = vld [vmem:[%s2 + $0xf8] sm:$0xff]
  %v2644 = vld [vmem:[%s2 + $0x100] sm:$0xff]
  %v2645 = vld [vmem:[%s2 + $0x108] sm:$0xff]
  %v2646 = vld [vmem:[%s2 + $0x110] sm:$0xff]
  %v2647 = vld [vmem:[%s2 + $0x118] sm:$0xff]
  %v2648 = vld [vmem:[%s2 + $0x120] sm:$0xff]
  %v2649 = vld [vmem:[%s2 + $0x128] sm:$0xff]
  %v2650 = vld [vmem:[%s2 + $0x130] sm:$0xff]
  %v2651 = vld [vmem:[%s2 + $0x138] sm:$0xff]
  %v2652 = vld [vmem:[%s2 + $0x140] sm:$0xff]
  %v2653 = vld [vmem:[%s2 + $0x148] sm:$0xff]
  %v2654 = vld [vmem:[%s2 + $0x150] sm:$0xff]
  %v2655 = vld [vmem:[%s2 + $0x158] sm:$0xff]
  %v2656 = vld [vmem:[%s2 + $0x160] sm:$0xff]
  %v2657 = vld [vmem:[%s2 + $0x168] sm:$0xff]
  %v2658 = vld [vmem:[%s2 + $0x170] sm:$0xff]
  %v2659 = vld [vmem:[%s2 + $0x178] sm:$0xff]
  %v2660 = vld [vmem:[%s2 + $0x180] sm:$0xff]
  %v2661 = vld [vmem:[%s2 + $0x188] sm:$0xff]
  %v2662 = vld [vmem:[%s2 + $0x190] sm:$0xff]
  %v2663 = vld [vmem:[%s2 + $0x198] sm:$0xff]
  %v2664 = vld [vmem:[%s2 + $0x1a0] sm:$0xff]
  %v2665 = vld [vmem:[%s2 + $0x1a8] sm:$0xff]
  %v2666 = vld [vmem:[%s2 + $0x1b0] sm:$0xff]
  %v2667 = vld [vmem:[%s2 + $0x1b8] sm:$0xff]
  %v2668 = vld [vmem:[%s2 + $0x1c0] sm:$0xff]
  %v2669 = vld [vmem:[%s2 + $0x1c8] sm:$0xff]
  %v2670 = vld [vmem:[%s2 + $0x1d0] sm:$0xff]
  %v2671 = vld [vmem:[%s2 + $0x1d8] sm:$0xff]
  %v2672 = vld [vmem:[%s2 + $0x1e0] sm:$0xff]
  %v2673 = vld [vmem:[%s2 + $0x1e8] sm:$0xff]
  %v2674 = vld [vmem:[%s2 + $0x1f0] sm:$0xff]
  %v2675 = vld [vmem:[%s2 + $0x1f8] sm:$0xff]
  %v2740 = vunpack.c.l.b16 %v2612
  %v2741 = vunpack.c.h.b16 %v2612
  %v2742 = vunpack.c.l.b16 %v2613
  %v2743 = vunpack.c.h.b16 %v2613
  %v2744 = vunpack.c.l.b16 %v2614
  %v2745 = vunpack.c.h.b16 %v2614
  %v2746 = vunpack.c.l.b16 %v2615
  %v2747 = vunpack.c.h.b16 %v2615
  %v2748 = vunpack.c.l.b16 %v2616
  %v2749 = vunpack.c.h.b16 %v2616
  %v2750 = vunpack.c.l.b16 %v2617
  %v2751 = vunpack.c.h.b16 %v2617
  %v2752 = vunpack.c.l.b16 %v2618
  %v2753 = vunpack.c.h.b16 %v2618
  %v2754 = vunpack.c.l.b16 %v2619
  %v2755 = vunpack.c.h.b16 %v2619
  %v2756 = vunpack.c.l.b16 %v2620
  %v2757 = vunpack.c.h.b16 %v2620
  %v2758 = vunpack.c.l.b16 %v2621
  %v2759 = vunpack.c.h.b16 %v2621
  %v2760 = vunpack.c.l.b16 %v2622
  %v2761 = vunpack.c.h.b16 %v2622
  %v2762 = vunpack.c.l.b16 %v2623
  %v2763 = vunpack.c.h.b16 %v2623
  %v2764 = vunpack.c.l.b16 %v2624
  %v2765 = vunpack.c.h.b16 %v2624
  %v2766 = vunpack.c.l.b16 %v2625
  %v2767 = vunpack.c.h.b16 %v2625
  %v2768 = vunpack.c.l.b16 %v2626
  %v2769 = vunpack.c.h.b16 %v2626
  %v2770 = vunpack.c.l.b16 %v2627
  %v2771 = vunpack.c.h.b16 %v2627
  %v2772 = vunpack.c.l.b16 %v2628
  %v2773 = vunpack.c.h.b16 %v2628
  %v2774 = vunpack.c.l.b16 %v2629
  %v2775 = vunpack.c.h.b16 %v2629
  %v2776 = vunpack.c.l.b16 %v2630
  %v2777 = vunpack.c.h.b16 %v2630
  %v2778 = vunpack.c.l.b16 %v2631
  %v2779 = vunpack.c.h.b16 %v2631
  %v2780 = vunpack.c.l.b16 %v2632
  %v2781 = vunpack.c.h.b16 %v2632
  %v2782 = vunpack.c.l.b16 %v2633
  %v2783 = vunpack.c.h.b16 %v2633
  %v2784 = vunpack.c.l.b16 %v2634
  %v2785 = vunpack.c.h.b16 %v2634
  %v2786 = vunpack.c.l.b16 %v2635
  %v2787 = vunpack.c.h.b16 %v2635
  %v2788 = vunpack.c.l.b16 %v2636
  %v2789 = vunpack.c.h.b16 %v2636
  %v2790 = vunpack.c.l.b16 %v2637
  %v2791 = vunpack.c.h.b16 %v2637
  %v2792 = vunpack.c.l.b16 %v2638
  %v2793 = vunpack.c.h.b16 %v2638
  %v2794 = vunpack.c.l.b16 %v2639
  %v2795 = vunpack.c.h.b16 %v2639
  %v2796 = vunpack.c.l.b16 %v2640
  %v2797 = vunpack.c.h.b16 %v2640
  %v2798 = vunpack.c.l.b16 %v2641
  %v2799 = vunpack.c.h.b16 %v2641
  %v2800 = vunpack.c.l.b16 %v2642
  %v2801 = vunpack.c.h.b16 %v2642
  %v2802 = vunpack.c.l.b16 %v2643
  %v2803 = vunpack.c.h.b16 %v2643
  %v2804 = vunpack.c.l.b16 %v2644
  %v2805 = vunpack.c.h.b16 %v2644
  %v2806 = vunpack.c.l.b16 %v2645
  %v2807 = vunpack.c.h.b16 %v2645
  %v2808 = vunpack.c.l.b16 %v2646
  %v2809 = vunpack.c.h.b16 %v2646
  %v2810 = vunpack.c.l.b16 %v2647
  %v2811 = vunpack.c.h.b16 %v2647
  %v2812 = vunpack.c.l.b16 %v2648
  %v2813 = vunpack.c.h.b16 %v2648
  %v2814 = vunpack.c.l.b16 %v2649
  %v2815 = vunpack.c.h.b16 %v2649
  %v2816 = vunpack.c.l.b16 %v2650
  %v2817 = vunpack.c.h.b16 %v2650
  %v2818 = vunpack.c.l.b16 %v2651
  %v2819 = vunpack.c.h.b16 %v2651
  %v2820 = vunpack.c.l.b16 %v2652
  %v2821 = vunpack.c.h.b16 %v2652
  %v2822 = vunpack.c.l.b16 %v2653
  %v2823 = vunpack.c.h.b16 %v2653
  %v2824 = vunpack.c.l.b16 %v2654
  %v2825 = vunpack.c.h.b16 %v2654
  %v2826 = vunpack.c.l.b16 %v2655
  %v2827 = vunpack.c.h.b16 %v2655
  %v2828 = vunpack.c.l.b16 %v2656
  %v2829 = vunpack.c.h.b16 %v2656
  %v2830 = vunpack.c.l.b16 %v2657
  %v2831 = vunpack.c.h.b16 %v2657
  %v2832 = vunpack.c.l.b16 %v2658
  %v2833 = vunpack.c.h.b16 %v2658
  %v2834 = vunpack.c.l.b16 %v2659
  %v2835 = vunpack.c.h.b16 %v2659
  %v2836 = vunpack.c.l.b16 %v2660
  %v2837 = vunpack.c.h.b16 %v2660
  %v2838 = vunpack.c.l.b16 %v2661
  %v2839 = vunpack.c.h.b16 %v2661
  %v2840 = vunpack.c.l.b16 %v2662
  %v2841 = vunpack.c.h.b16 %v2662
  %v2842 = vunpack.c.l.b16 %v2663
  %v2843 = vunpack.c.h.b16 %v2663
  %v2844 = vunpack.c.l.b16 %v2664
  %v2845 = vunpack.c.h.b16 %v2664
  %v2846 = vunpack.c.l.b16 %v2665
  %v2847 = vunpack.c.h.b16 %v2665
  %v2848 = vunpack.c.l.b16 %v2666
  %v2849 = vunpack.c.h.b16 %v2666
  %v2850 = vunpack.c.l.b16 %v2667
  %v2851 = vunpack.c.h.b16 %v2667
  %v2852 = vunpack.c.l.b16 %v2668
  %v2853 = vunpack.c.h.b16 %v2668
  %v2854 = vunpack.c.l.b16 %v2669
  %v2855 = vunpack.c.h.b16 %v2669
  %v2856 = vunpack.c.l.b16 %v2670
  %v2857 = vunpack.c.h.b16 %v2670
  %v2858 = vunpack.c.l.b16 %v2671
  %v2859 = vunpack.c.h.b16 %v2671
  %v2860 = vunpack.c.l.b16 %v2672
  %v2861 = vunpack.c.h.b16 %v2672
  %v2862 = vunpack.c.l.b16 %v2673
  %v2863 = vunpack.c.h.b16 %v2673
  %v2864 = vunpack.c.l.b16 %v2674
  %v2865 = vunpack.c.h.b16 %v2674
  %v2866 = vunpack.c.l.b16 %v2675
  %v2867 = vunpack.c.h.b16 %v2675
  %v2868 = vpack.c.b16 %v2748, %v2740
  %v2869 = vpack.c.b16 %v2749, %v2741
  %v2870 = vpack.c.b16 %v2750, %v2742
  %v2871 = vpack.c.b16 %v2751, %v2743
  %v2872 = vpack.c.b16 %v2752, %v2744
  %v2873 = vpack.c.b16 %v2753, %v2745
  %v2874 = vpack.c.b16 %v2754, %v2746
  %v2875 = vpack.c.b16 %v2755, %v2747
  %v2876 = vpack.c.b16 %v2764, %v2756
  %v2877 = vpack.c.b16 %v2765, %v2757
  %v2878 = vpack.c.b16 %v2766, %v2758
  %v2879 = vpack.c.b16 %v2767, %v2759
  %v2880 = vpack.c.b16 %v2768, %v2760
  %v2881 = vpack.c.b16 %v2769, %v2761
  %v2882 = vpack.c.b16 %v2770, %v2762
  %v2883 = vpack.c.b16 %v2771, %v2763
  %v2884 = vpack.c.b16 %v2780, %v2772
  %v2885 = vpack.c.b16 %v2781, %v2773
  %v2886 = vpack.c.b16 %v2782, %v2774
  %v2887 = vpack.c.b16 %v2783, %v2775
  %v2888 = vpack.c.b16 %v2784, %v2776
  %v2889 = vpack.c.b16 %v2785, %v2777
  %v2890 = vpack.c.b16 %v2786, %v2778
  %v2891 = vpack.c.b16 %v2787, %v2779
  %v2892 = vpack.c.b16 %v2796, %v2788
  %v2893 = vpack.c.b16 %v2797, %v2789
  %v2894 = vpack.c.b16 %v2798, %v2790
  %v2895 = vpack.c.b16 %v2799, %v2791
  %v2896 = vpack.c.b16 %v2800, %v2792
  %v2897 = vpack.c.b16 %v2801, %v2793
  %v2898 = vpack.c.b16 %v2802, %v2794
  %v2899 = vpack.c.b16 %v2803, %v2795
  %v2900 = vpack.c.b16 %v2812, %v2804
  %v2901 = vpack.c.b16 %v2813, %v2805
  %v2902 = vpack.c.b16 %v2814, %v2806
  %v2903 = vpack.c.b16 %v2815, %v2807
  %v2904 = vpack.c.b16 %v2816, %v2808
  %v2905 = vpack.c.b16 %v2817, %v2809
  %v2906 = vpack.c.b16 %v2818, %v2810
  %v2907 = vpack.c.b16 %v2819, %v2811
  %v2908 = vpack.c.b16 %v2828, %v2820
  %v2909 = vpack.c.b16 %v2829, %v2821
  %v2910 = vpack.c.b16 %v2830, %v2822
  %v2911 = vpack.c.b16 %v2831, %v2823
  %v2912 = vpack.c.b16 %v2832, %v2824
  %v2913 = vpack.c.b16 %v2833, %v2825
  %v2914 = vpack.c.b16 %v2834, %v2826
  %v2915 = vpack.c.b16 %v2835, %v2827
  %v2916 = vpack.c.b16 %v2844, %v2836
  %v2917 = vpack.c.b16 %v2845, %v2837
  %v2918 = vpack.c.b16 %v2846, %v2838
  %v2919 = vpack.c.b16 %v2847, %v2839
  %v2920 = vpack.c.b16 %v2848, %v2840
  %v2921 = vpack.c.b16 %v2849, %v2841
  %v2922 = vpack.c.b16 %v2850, %v2842
  %v2923 = vpack.c.b16 %v2851, %v2843
  %v2924 = vpack.c.b16 %v2860, %v2852
  %v2925 = vpack.c.b16 %v2861, %v2853
  %v2926 = vpack.c.b16 %v2862, %v2854
  %v2927 = vpack.c.b16 %v2863, %v2855
  %v2928 = vpack.c.b16 %v2864, %v2856
  %v2929 = vpack.c.b16 %v2865, %v2857
  %v2930 = vpack.c.b16 %v2866, %v2858
  %v2931 = vpack.c.b16 %v2867, %v2859
  %2996 = vmatprep.subr.bf16.mxu0 %v2925
  %2997 = vmatpush1.bf16.msra.mxu0 %v2924
  %2998 = vmatprep.subr.bf16.mxu0 %v2917
  %2999 = vmatpush1.bf16.msra.mxu0 %v2916
  %3000 = vmatprep.subr.bf16.mxu0 %v2909
  %3001 = vmatpush1.bf16.msra.mxu0 %v2908
  %3002 = vmatprep.subr.bf16.mxu0 %v2901
  %3003 = vmatpush1.bf16.msra.mxu0 %v2900
  %3004 = vmatprep.subr.bf16.mxu0 %v2893
  %3005 = vmatpush1.bf16.msra.mxu0 %v2892
  %3006 = vmatprep.subr.bf16.mxu0 %v2885
  %3007 = vmatpush1.bf16.msra.mxu0 %v2884
  %3008 = vmatprep.subr.bf16.mxu0 %v2877
  %3009 = vmatpush1.bf16.msra.mxu0 %v2876
  %3010 = vmatprep.subr.bf16.mxu0 %v2869
  %3011 = vmatpush1.bf16.msra.mxu0 %v2868
  %3012 = vmatprep.subr.bf16.mxu0 0
  %3013 = vmatpush2.bf16.msra.mxu0 0
  %3014 = vmatprep.subr.bf16.mxu0 0
  %3015 = vmatpush2.bf16.msra.mxu0 0
  %3016 = vmatprep.subr.bf16.mxu0 0
  %3017 = vmatpush2.bf16.msra.mxu0 0
  %3018 = vmatprep.subr.bf16.mxu0 0
  %3019 = vmatpush2.bf16.msra.mxu0 0
  %3020 = vmatprep.subr.bf16.mxu0 0
  %3021 = vmatpush2.bf16.msra.mxu0 0
  %3022 = vmatprep.subr.bf16.mxu0 0
  %3023 = vmatpush2.bf16.msra.mxu0 0
  %3024 = vmatprep.subr.bf16.mxu0 0
  %3025 = vmatpush2.bf16.msra.mxu0 0
  %3026 = vmatprep.subr.bf16.mxu0 0
  %3027 = vmatpush2.bf16.msra.mxu0 0
  %3028 = vmatprep.mubr.bf16.mxu0 0
  %3029 = vmatmul.mubr.bf16.gmra.mxu0 %v2611
  %v3030 = vpop.f32.mrf.mxu0
  %v3031 = vadd.f32 0.0, %v3030
  %v3032 = vpop.f32.mrf.mxu0
  %v3033 = vadd.f32 0.0, %v3032
  %v3034 = vpop.f32.mrf.mxu0
  %v3035 = vadd.f32 0.0, %v3034
  %v3036 = vpop.f32.mrf.mxu0
  %v3037 = vadd.f32 0.0, %v3036
  %3038 = vdwg.mxu0
  %3039 = vmatprep.subr.bf16.mxu0 %v2927
  %3040 = vmatpush1.bf16.msra.mxu0 %v2926
  %3041 = vmatprep.subr.bf16.mxu0 %v2919
  %3042 = vmatpush1.bf16.msra.mxu0 %v2918
  %3043 = vmatprep.subr.bf16.mxu0 %v2911
  %3044 = vmatpush1.bf16.msra.mxu0 %v2910
  %3045 = vmatprep.subr.bf16.mxu0 %v2903
  %3046 = vmatpush1.bf16.msra.mxu0 %v2902
  %3047 = vmatprep.subr.bf16.mxu0 %v2895
  %3048 = vmatpush1.bf16.msra.mxu0 %v2894
  %3049 = vmatprep.subr.bf16.mxu0 %v2887
  %3050 = vmatpush1.bf16.msra.mxu0 %v2886
  %3051 = vmatprep.subr.bf16.mxu0 %v2879
  %3052 = vmatpush1.bf16.msra.mxu0 %v2878
  %3053 = vmatprep.subr.bf16.mxu0 %v2871
  %3054 = vmatpush1.bf16.msra.mxu0 %v2870
  %3055 = vmatprep.subr.bf16.mxu0 0
  %3056 = vmatpush2.bf16.msra.mxu0 0
  %3057 = vmatprep.subr.bf16.mxu0 0
  %3058 = vmatpush2.bf16.msra.mxu0 0
  %3059 = vmatprep.subr.bf16.mxu0 0
  %3060 = vmatpush2.bf16.msra.mxu0 0
  %3061 = vmatprep.subr.bf16.mxu0 0
  %3062 = vmatpush2.bf16.msra.mxu0 0
  %3063 = vmatprep.subr.bf16.mxu0 0
  %3064 = vmatpush2.bf16.msra.mxu0 0
  %3065 = vmatprep.subr.bf16.mxu0 0
  %3066 = vmatpush2.bf16.msra.mxu0 0
  %3067 = vmatprep.subr.bf16.mxu0 0
  %3068 = vmatpush2.bf16.msra.mxu0 0
  %3069 = vmatprep.subr.bf16.mxu0 0
  %3070 = vmatpush2.bf16.msra.mxu0 0
  %3071 = vmatprep.mubr.bf16.mxu0 0
  %3072 = vmatmul.mubr.bf16.gmra.mxu0 %v2611
  %v3073 = vpop.f32.mrf.mxu0
  %v3074 = vadd.f32 0.0, %v3073
  %v3075 = vpop.f32.mrf.mxu0
  %v3076 = vadd.f32 0.0, %v3075
  %v3077 = vpop.f32.mrf.mxu0
  %v3078 = vadd.f32 0.0, %v3077
  %v3079 = vpop.f32.mrf.mxu0
  %v3080 = vadd.f32 0.0, %v3079
  %3081 = vdwg.mxu0
  %3082 = vmatprep.subr.bf16.mxu0 %v2929
  %3083 = vmatpush1.bf16.msra.mxu0 %v2928
  %3084 = vmatprep.subr.bf16.mxu0 %v2921
  %3085 = vmatpush1.bf16.msra.mxu0 %v2920
  %3086 = vmatprep.subr.bf16.mxu0 %v2913
  %3087 = vmatpush1.bf16.msra.mxu0 %v2912
  %3088 = vmatprep.subr.bf16.mxu0 %v2905
  %3089 = vmatpush1.bf16.msra.mxu0 %v2904
  %3090 = vmatprep.subr.bf16.mxu0 %v2897
  %3091 = vmatpush1.bf16.msra.mxu0 %v2896
  %3092 = vmatprep.subr.bf16.mxu0 %v2889
  %3093 = vmatpush1.bf16.msra.mxu0 %v2888
  %3094 = vmatprep.subr.bf16.mxu0 %v2881
  %3095 = vmatpush1.bf16.msra.mxu0 %v2880
  %3096 = vmatprep.subr.bf16.mxu0 %v2873
  %3097 = vmatpush1.bf16.msra.mxu0 %v2872
  %3098 = vmatprep.subr.bf16.mxu0 0
  %3099 = vmatpush2.bf16.msra.mxu0 0
  %3100 = vmatprep.subr.bf16.mxu0 0
  %3101 = vmatpush2.bf16.msra.mxu0 0
  %3102 = vmatprep.subr.bf16.mxu0 0
  %3103 = vmatpush2.bf16.msra.mxu0 0
  %3104 = vmatprep.subr.bf16.mxu0 0
  %3105 = vmatpush2.bf16.msra.mxu0 0
  %3106 = vmatprep.subr.bf16.mxu0 0
  %3107 = vmatpush2.bf16.msra.mxu0 0
  %3108 = vmatprep.subr.bf16.mxu0 0
  %3109 = vmatpush2.bf16.msra.mxu0 0
  %3110 = vmatprep.subr.bf16.mxu0 0
  %3111 = vmatpush2.bf16.msra.mxu0 0
  %3112 = vmatprep.subr.bf16.mxu0 0
  %3113 = vmatpush2.bf16.msra.mxu0 0
  %3114 = vmatprep.mubr.bf16.mxu0 0
  %3115 = vmatmul.mubr.bf16.gmra.mxu0 %v2611
  %v3116 = vpop.f32.mrf.mxu0
  %v3117 = vadd.f32 0.0, %v3116
  %v3118 = vpop.f32.mrf.mxu0
  %v3119 = vadd.f32 0.0, %v3118
  %v3120 = vpop.f32.mrf.mxu0
  %v3121 = vadd.f32 0.0, %v3120
  %v3122 = vpop.f32.mrf.mxu0
  %v3123 = vadd.f32 0.0, %v3122
  %3124 = vdwg.mxu0
  %3125 = vmatprep.subr.bf16.mxu0 %v2931
  %3126 = vmatpush1.bf16.msra.mxu0 %v2930
  %3127 = vmatprep.subr.bf16.mxu0 %v2923
  %3128 = vmatpush1.bf16.msra.mxu0 %v2922
  %3129 = vmatprep.subr.bf16.mxu0 %v2915
  %3130 = vmatpush1.bf16.msra.mxu0 %v2914
  %3131 = vmatprep.subr.bf16.mxu0 %v2907
  %3132 = vmatpush1.bf16.msra.mxu0 %v2906
  %3133 = vmatprep.subr.bf16.mxu0 %v2899
  %3134 = vmatpush1.bf16.msra.mxu0 %v2898
  %3135 = vmatprep.subr.bf16.mxu0 %v2891
  %3136 = vmatpush1.bf16.msra.mxu0 %v2890
  %3137 = vmatprep.subr.bf16.mxu0 %v2883
  %3138 = vmatpush1.bf16.msra.mxu0 %v2882
  %3139 = vmatprep.subr.bf16.mxu0 %v2875
  %3140 = vmatpush1.bf16.msra.mxu0 %v2874
  %3141 = vmatprep.subr.bf16.mxu0 0
  %3142 = vmatpush2.bf16.msra.mxu0 0
  %3143 = vmatprep.subr.bf16.mxu0 0
  %3144 = vmatpush2.bf16.msra.mxu0 0
  %3145 = vmatprep.subr.bf16.mxu0 0
  %3146 = vmatpush2.bf16.msra.mxu0 0
  %3147 = vmatprep.subr.bf16.mxu0 0
  %3148 = vmatpush2.bf16.msra.mxu0 0
  %3149 = vmatprep.subr.bf16.mxu0 0
  %3150 = vmatpush2.bf16.msra.mxu0 0
  %3151 = vmatprep.subr.bf16.mxu0 0
  %3152 = vmatpush2.bf16.msra.mxu0 0
  %3153 = vmatprep.subr.bf16.mxu0 0
  %3154 = vmatpush2.bf16.msra.mxu0 0
  %3155 = vmatprep.subr.bf16.mxu0 0
  %3156 = vmatpush2.bf16.msra.mxu0 0
  %3157 = vmatprep.mubr.bf16.mxu0 0
  %3158 = vmatmul.mubr.bf16.gmra.mxu0 %v2611
  %v3159 = vpop.f32.mrf.mxu0
  %v3160 = vadd.f32 0.0, %v3159
  %v3161 = vpop.f32.mrf.mxu0
  %v3162 = vadd.f32 0.0, %v3161
  %v3163 = vpop.f32.mrf.mxu0
  %v3164 = vadd.f32 0.0, %v3163
  %v3165 = vpop.f32.mrf.mxu0
  %v3166 = vadd.f32 0.0, %v3165
  %3167 = vdwg.mxu0
  %v3168 = vsel %vm20, %v3031, %v3117
  %v3169 = vsel %vm20, %v3033, %v3119
  %v3170 = vsel %vm20, %v3074, %v3160
  %v3171 = vsel %vm20, %v3076, %v3162
  %v3172 = vsel %vm21, %v3035, %v3121
  %v3173 = vsel %vm21, %v3037, %v3123
  %v3174 = vsel %vm21, %v3078, %v3164
  %v3175 = vsel %vm21, %v3080, %v3166
  %s3176 = scalar_lea.vmem %s0, 128
  %v3177 = vld [vmem:[%s3176] sm:$0xff]
  %v3178 = vld [vmem:[%s3176 + $0x8] sm:$0xff]
  %v3179 = vld [vmem:[%s3176 + $0x10] sm:$0xff]
  %v3180 = vld [vmem:[%s3176 + $0x18] sm:$0xff]
  %v3181 = vunpack.c.l.bf16 %v3177
  %v3182 = vunpack.c.h.bf16 %v3177
  %v3183 = vunpack.c.l.bf16 %v3178
  %v3184 = vunpack.c.h.bf16 %v3178
  %v3185 = vunpack.c.l.bf16 %v3179
  %v3186 = vunpack.c.h.bf16 %v3179
  %v3187 = vunpack.c.l.bf16 %v3180
  %v3188 = vunpack.c.h.bf16 %v3180
  %v3189 = vadd.f32 %v3181, %v3168
  %v3190 = vadd.f32 %v3182, %v3169
  %v3191 = vadd.f32 %v3183, %v3170
  %v3192 = vadd.f32 %v3184, %v3171
  %v3193 = vadd.f32 %v3185, %v3172
  %v3194 = vadd.f32 %v3186, %v3173
  %v3195 = vadd.f32 %v3187, %v3174
  %v3196 = vadd.f32 %v3188, %v3175
  %v3197 = vxor.u32 %v3189, 2147483648
  %v3198 = vxor.u32 %v3193, 2147483648
  %v3199 = vmul.f32 %v3197, 1.442695
  %v3200 = vpow.pop %v3199
  %v3201 = vmul.f32 %v3198, 1.442695
  %v3202 = vpow.pop %v3201
  %v3203 = vadd.f32 %v3200, 1.0
  %v3204 = vadd.f32 %v3202, 1.0
  %v3205 = vrcp.pop %v3203
  %v3206 = vmul.f32 1.0, %v3205
  %v3207 = vrcp.pop %v3204
  %v3208 = vmul.f32 1.0, %v3207
  %v3209 = vxor.u32 %v3190, 2147483648
  %v3210 = vxor.u32 %v3194, 2147483648
  %v3211 = vmul.f32 %v3209, 1.442695
  %v3212 = vpow.pop %v3211
  %v3213 = vmul.f32 %v3210, 1.442695
  %v3214 = vpow.pop %v3213
  %v3215 = vadd.f32 %v3212, 1.0
  %v3216 = vadd.f32 %v3214, 1.0
  %v3217 = vrcp.pop %v3215
  %v3218 = vmul.f32 1.0, %v3217
  %v3219 = vrcp.pop %v3216
  %v3220 = vmul.f32 1.0, %v3219
  %v3221 = vtanh.pop %v3191
  %v3222 = vtanh.pop %v3195
  %v3223 = vxor.u32 %v3192, 2147483648
  %v3224 = vxor.u32 %v3196, 2147483648
  %v3225 = vmul.f32 %v3223, 1.442695
  %v3226 = vpow.pop %v3225
  %v3227 = vmul.f32 %v3224, 1.442695
  %v3228 = vpow.pop %v3227
  %v3229 = vadd.f32 %v3226, 1.0
  %v3230 = vadd.f32 %v3228, 1.0
  %v3231 = vrcp.pop %v3229
  %v3232 = vmul.f32 1.0, %v3231
  %v3233 = vrcp.pop %v3230
  %v3234 = vmul.f32 1.0, %v3233
  %v3235 = vmul.f32 %v3218, %v2603
  %v3236 = vmul.f32 %v3220, %v2604
  %v3237 = vmul.f32 %v3206, %v3221
  %v3238 = vmul.f32 %v3208, %v3222
  %v3239 = vadd.f32 %v3235, %v3237
  %v3240 = vadd.f32 %v3236, %v3238
  %v3241 = vtanh.pop %v3239
  %v3242 = vtanh.pop %v3240
  %v3243 = vmul.f32 %v3232, %v3241
  %v3244 = vmul.f32 %v3234, %v3242
  %v3245 = vsel %vm20, 4, 3
  %v3246 = vsel %vm21, 4, 3
  %vm3247 = vcmp.gt.s32.totalorder %v15, %v3245
  %vm3248 = vcmp.gt.s32.totalorder %v16, %v3246
  %v3249 = vsel %vm3247, %v3243, %v2601
  %v3250 = vsel %vm3248, %v3244, %v2602
  %v3251 = vsel %vm3247, %v3239, %v2603
  %v3252 = vsel %vm3248, %v3240, %v2604
  %v3253 = vpack.c.bf16 %v3249, %v3249
  %3254 = vst [vmem:[%s2609] sm:$0xf] %v3253
  %v3255 = vpack.c.bf16 %v3250, %v3250
  %3256 = vst [vmem:[%s2606 + $0x4] sm:$0xf] %v3255
  %v3257 = vpack.c.bf16 %v3250, %v3249
  %v3258 = vld [vmem:[%s2] sm:$0xff]
  %v3259 = vld [vmem:[%s2 + $0x8] sm:$0xff]
  %v3260 = vld [vmem:[%s2 + $0x10] sm:$0xff]
  %v3261 = vld [vmem:[%s2 + $0x18] sm:$0xff]
  %v3262 = vld [vmem:[%s2 + $0x20] sm:$0xff]
  %v3263 = vld [vmem:[%s2 + $0x28] sm:$0xff]
  %v3264 = vld [vmem:[%s2 + $0x30] sm:$0xff]
  %v3265 = vld [vmem:[%s2 + $0x38] sm:$0xff]
  %v3266 = vld [vmem:[%s2 + $0x40] sm:$0xff]
  %v3267 = vld [vmem:[%s2 + $0x48] sm:$0xff]
  %v3268 = vld [vmem:[%s2 + $0x50] sm:$0xff]
  %v3269 = vld [vmem:[%s2 + $0x58] sm:$0xff]
  %v3270 = vld [vmem:[%s2 + $0x60] sm:$0xff]
  %v3271 = vld [vmem:[%s2 + $0x68] sm:$0xff]
  %v3272 = vld [vmem:[%s2 + $0x70] sm:$0xff]
  %v3273 = vld [vmem:[%s2 + $0x78] sm:$0xff]
  %v3274 = vld [vmem:[%s2 + $0x80] sm:$0xff]
  %v3275 = vld [vmem:[%s2 + $0x88] sm:$0xff]
  %v3276 = vld [vmem:[%s2 + $0x90] sm:$0xff]
  %v3277 = vld [vmem:[%s2 + $0x98] sm:$0xff]
  %v3278 = vld [vmem:[%s2 + $0xa0] sm:$0xff]
  %v3279 = vld [vmem:[%s2 + $0xa8] sm:$0xff]
  %v3280 = vld [vmem:[%s2 + $0xb0] sm:$0xff]
  %v3281 = vld [vmem:[%s2 + $0xb8] sm:$0xff]
  %v3282 = vld [vmem:[%s2 + $0xc0] sm:$0xff]
  %v3283 = vld [vmem:[%s2 + $0xc8] sm:$0xff]
  %v3284 = vld [vmem:[%s2 + $0xd0] sm:$0xff]
  %v3285 = vld [vmem:[%s2 + $0xd8] sm:$0xff]
  %v3286 = vld [vmem:[%s2 + $0xe0] sm:$0xff]
  %v3287 = vld [vmem:[%s2 + $0xe8] sm:$0xff]
  %v3288 = vld [vmem:[%s2 + $0xf0] sm:$0xff]
  %v3289 = vld [vmem:[%s2 + $0xf8] sm:$0xff]
  %v3290 = vld [vmem:[%s2 + $0x100] sm:$0xff]
  %v3291 = vld [vmem:[%s2 + $0x108] sm:$0xff]
  %v3292 = vld [vmem:[%s2 + $0x110] sm:$0xff]
  %v3293 = vld [vmem:[%s2 + $0x118] sm:$0xff]
  %v3294 = vld [vmem:[%s2 + $0x120] sm:$0xff]
  %v3295 = vld [vmem:[%s2 + $0x128] sm:$0xff]
  %v3296 = vld [vmem:[%s2 + $0x130] sm:$0xff]
  %v3297 = vld [vmem:[%s2 + $0x138] sm:$0xff]
  %v3298 = vld [vmem:[%s2 + $0x140] sm:$0xff]
  %v3299 = vld [vmem:[%s2 + $0x148] sm:$0xff]
  %v3300 = vld [vmem:[%s2 + $0x150] sm:$0xff]
  %v3301 = vld [vmem:[%s2 + $0x158] sm:$0xff]
  %v3302 = vld [vmem:[%s2 + $0x160] sm:$0xff]
  %v3303 = vld [vmem:[%s2 + $0x168] sm:$0xff]
  %v3304 = vld [vmem:[%s2 + $0x170] sm:$0xff]
  %v3305 = vld [vmem:[%s2 + $0x178] sm:$0xff]
  %v3306 = vld [vmem:[%s2 + $0x180] sm:$0xff]
  %v3307 = vld [vmem:[%s2 + $0x188] sm:$0xff]
  %v3308 = vld [vmem:[%s2 + $0x190] sm:$0xff]
  %v3309 = vld [vmem:[%s2 + $0x198] sm:$0xff]
  %v3310 = vld [vmem:[%s2 + $0x1a0] sm:$0xff]
  %v3311 = vld [vmem:[%s2 + $0x1a8] sm:$0xff]
  %v3312 = vld [vmem:[%s2 + $0x1b0] sm:$0xff]
  %v3313 = vld [vmem:[%s2 + $0x1b8] sm:$0xff]
  %v3314 = vld [vmem:[%s2 + $0x1c0] sm:$0xff]
  %v3315 = vld [vmem:[%s2 + $0x1c8] sm:$0xff]
  %v3316 = vld [vmem:[%s2 + $0x1d0] sm:$0xff]
  %v3317 = vld [vmem:[%s2 + $0x1d8] sm:$0xff]
  %v3318 = vld [vmem:[%s2 + $0x1e0] sm:$0xff]
  %v3319 = vld [vmem:[%s2 + $0x1e8] sm:$0xff]
  %v3320 = vld [vmem:[%s2 + $0x1f0] sm:$0xff]
  %v3321 = vld [vmem:[%s2 + $0x1f8] sm:$0xff]
  %v3386 = vunpack.c.l.b16 %v3258
  %v3387 = vunpack.c.h.b16 %v3258
  %v3388 = vunpack.c.l.b16 %v3259
  %v3389 = vunpack.c.h.b16 %v3259
  %v3390 = vunpack.c.l.b16 %v3260
  %v3391 = vunpack.c.h.b16 %v3260
  %v3392 = vunpack.c.l.b16 %v3261
  %v3393 = vunpack.c.h.b16 %v3261
  %v3394 = vunpack.c.l.b16 %v3262
  %v3395 = vunpack.c.h.b16 %v3262
  %v3396 = vunpack.c.l.b16 %v3263
  %v3397 = vunpack.c.h.b16 %v3263
  %v3398 = vunpack.c.l.b16 %v3264
  %v3399 = vunpack.c.h.b16 %v3264
  %v3400 = vunpack.c.l.b16 %v3265
  %v3401 = vunpack.c.h.b16 %v3265
  %v3402 = vunpack.c.l.b16 %v3266
  %v3403 = vunpack.c.h.b16 %v3266
  %v3404 = vunpack.c.l.b16 %v3267
  %v3405 = vunpack.c.h.b16 %v3267
  %v3406 = vunpack.c.l.b16 %v3268
  %v3407 = vunpack.c.h.b16 %v3268
  %v3408 = vunpack.c.l.b16 %v3269
  %v3409 = vunpack.c.h.b16 %v3269
  %v3410 = vunpack.c.l.b16 %v3270
  %v3411 = vunpack.c.h.b16 %v3270
  %v3412 = vunpack.c.l.b16 %v3271
  %v3413 = vunpack.c.h.b16 %v3271
  %v3414 = vunpack.c.l.b16 %v3272
  %v3415 = vunpack.c.h.b16 %v3272
  %v3416 = vunpack.c.l.b16 %v3273
  %v3417 = vunpack.c.h.b16 %v3273
  %v3418 = vunpack.c.l.b16 %v3274
  %v3419 = vunpack.c.h.b16 %v3274
  %v3420 = vunpack.c.l.b16 %v3275
  %v3421 = vunpack.c.h.b16 %v3275
  %v3422 = vunpack.c.l.b16 %v3276
  %v3423 = vunpack.c.h.b16 %v3276
  %v3424 = vunpack.c.l.b16 %v3277
  %v3425 = vunpack.c.h.b16 %v3277
  %v3426 = vunpack.c.l.b16 %v3278
  %v3427 = vunpack.c.h.b16 %v3278
  %v3428 = vunpack.c.l.b16 %v3279
  %v3429 = vunpack.c.h.b16 %v3279
  %v3430 = vunpack.c.l.b16 %v3280
  %v3431 = vunpack.c.h.b16 %v3280
  %v3432 = vunpack.c.l.b16 %v3281
  %v3433 = vunpack.c.h.b16 %v3281
  %v3434 = vunpack.c.l.b16 %v3282
  %v3435 = vunpack.c.h.b16 %v3282
  %v3436 = vunpack.c.l.b16 %v3283
  %v3437 = vunpack.c.h.b16 %v3283
  %v3438 = vunpack.c.l.b16 %v3284
  %v3439 = vunpack.c.h.b16 %v3284
  %v3440 = vunpack.c.l.b16 %v3285
  %v3441 = vunpack.c.h.b16 %v3285
  %v3442 = vunpack.c.l.b16 %v3286
  %v3443 = vunpack.c.h.b16 %v3286
  %v3444 = vunpack.c.l.b16 %v3287
  %v3445 = vunpack.c.h.b16 %v3287
  %v3446 = vunpack.c.l.b16 %v3288
  %v3447 = vunpack.c.h.b16 %v3288
  %v3448 = vunpack.c.l.b16 %v3289
  %v3449 = vunpack.c.h.b16 %v3289
  %v3450 = vunpack.c.l.b16 %v3290
  %v3451 = vunpack.c.h.b16 %v3290
  %v3452 = vunpack.c.l.b16 %v3291
  %v3453 = vunpack.c.h.b16 %v3291
  %v3454 = vunpack.c.l.b16 %v3292
  %v3455 = vunpack.c.h.b16 %v3292
  %v3456 = vunpack.c.l.b16 %v3293
  %v3457 = vunpack.c.h.b16 %v3293
  %v3458 = vunpack.c.l.b16 %v3294
  %v3459 = vunpack.c.h.b16 %v3294
  %v3460 = vunpack.c.l.b16 %v3295
  %v3461 = vunpack.c.h.b16 %v3295
  %v3462 = vunpack.c.l.b16 %v3296
  %v3463 = vunpack.c.h.b16 %v3296
  %v3464 = vunpack.c.l.b16 %v3297
  %v3465 = vunpack.c.h.b16 %v3297
  %v3466 = vunpack.c.l.b16 %v3298
  %v3467 = vunpack.c.h.b16 %v3298
  %v3468 = vunpack.c.l.b16 %v3299
  %v3469 = vunpack.c.h.b16 %v3299
  %v3470 = vunpack.c.l.b16 %v3300
  %v3471 = vunpack.c.h.b16 %v3300
  %v3472 = vunpack.c.l.b16 %v3301
  %v3473 = vunpack.c.h.b16 %v3301
  %v3474 = vunpack.c.l.b16 %v3302
  %v3475 = vunpack.c.h.b16 %v3302
  %v3476 = vunpack.c.l.b16 %v3303
  %v3477 = vunpack.c.h.b16 %v3303
  %v3478 = vunpack.c.l.b16 %v3304
  %v3479 = vunpack.c.h.b16 %v3304
  %v3480 = vunpack.c.l.b16 %v3305
  %v3481 = vunpack.c.h.b16 %v3305
  %v3482 = vunpack.c.l.b16 %v3306
  %v3483 = vunpack.c.h.b16 %v3306
  %v3484 = vunpack.c.l.b16 %v3307
  %v3485 = vunpack.c.h.b16 %v3307
  %v3486 = vunpack.c.l.b16 %v3308
  %v3487 = vunpack.c.h.b16 %v3308
  %v3488 = vunpack.c.l.b16 %v3309
  %v3489 = vunpack.c.h.b16 %v3309
  %v3490 = vunpack.c.l.b16 %v3310
  %v3491 = vunpack.c.h.b16 %v3310
  %v3492 = vunpack.c.l.b16 %v3311
  %v3493 = vunpack.c.h.b16 %v3311
  %v3494 = vunpack.c.l.b16 %v3312
  %v3495 = vunpack.c.h.b16 %v3312
  %v3496 = vunpack.c.l.b16 %v3313
  %v3497 = vunpack.c.h.b16 %v3313
  %v3498 = vunpack.c.l.b16 %v3314
  %v3499 = vunpack.c.h.b16 %v3314
  %v3500 = vunpack.c.l.b16 %v3315
  %v3501 = vunpack.c.h.b16 %v3315
  %v3502 = vunpack.c.l.b16 %v3316
  %v3503 = vunpack.c.h.b16 %v3316
  %v3504 = vunpack.c.l.b16 %v3317
  %v3505 = vunpack.c.h.b16 %v3317
  %v3506 = vunpack.c.l.b16 %v3318
  %v3507 = vunpack.c.h.b16 %v3318
  %v3508 = vunpack.c.l.b16 %v3319
  %v3509 = vunpack.c.h.b16 %v3319
  %v3510 = vunpack.c.l.b16 %v3320
  %v3511 = vunpack.c.h.b16 %v3320
  %v3512 = vunpack.c.l.b16 %v3321
  %v3513 = vunpack.c.h.b16 %v3321
  %v3514 = vpack.c.b16 %v3394, %v3386
  %v3515 = vpack.c.b16 %v3395, %v3387
  %v3516 = vpack.c.b16 %v3396, %v3388
  %v3517 = vpack.c.b16 %v3397, %v3389
  %v3518 = vpack.c.b16 %v3398, %v3390
  %v3519 = vpack.c.b16 %v3399, %v3391
  %v3520 = vpack.c.b16 %v3400, %v3392
  %v3521 = vpack.c.b16 %v3401, %v3393
  %v3522 = vpack.c.b16 %v3410, %v3402
  %v3523 = vpack.c.b16 %v3411, %v3403
  %v3524 = vpack.c.b16 %v3412, %v3404
  %v3525 = vpack.c.b16 %v3413, %v3405
  %v3526 = vpack.c.b16 %v3414, %v3406
  %v3527 = vpack.c.b16 %v3415, %v3407
  %v3528 = vpack.c.b16 %v3416, %v3408
  %v3529 = vpack.c.b16 %v3417, %v3409
  %v3530 = vpack.c.b16 %v3426, %v3418
  %v3531 = vpack.c.b16 %v3427, %v3419
  %v3532 = vpack.c.b16 %v3428, %v3420
  %v3533 = vpack.c.b16 %v3429, %v3421
  %v3534 = vpack.c.b16 %v3430, %v3422
  %v3535 = vpack.c.b16 %v3431, %v3423
  %v3536 = vpack.c.b16 %v3432, %v3424
  %v3537 = vpack.c.b16 %v3433, %v3425
  %v3538 = vpack.c.b16 %v3442, %v3434
  %v3539 = vpack.c.b16 %v3443, %v3435
  %v3540 = vpack.c.b16 %v3444, %v3436
  %v3541 = vpack.c.b16 %v3445, %v3437
  %v3542 = vpack.c.b16 %v3446, %v3438
  %v3543 = vpack.c.b16 %v3447, %v3439
  %v3544 = vpack.c.b16 %v3448, %v3440
  %v3545 = vpack.c.b16 %v3449, %v3441
  %v3546 = vpack.c.b16 %v3458, %v3450
  %v3547 = vpack.c.b16 %v3459, %v3451
  %v3548 = vpack.c.b16 %v3460, %v3452
  %v3549 = vpack.c.b16 %v3461, %v3453
  %v3550 = vpack.c.b16 %v3462, %v3454
  %v3551 = vpack.c.b16 %v3463, %v3455
  %v3552 = vpack.c.b16 %v3464, %v3456
  %v3553 = vpack.c.b16 %v3465, %v3457
  %v3554 = vpack.c.b16 %v3474, %v3466
  %v3555 = vpack.c.b16 %v3475, %v3467
  %v3556 = vpack.c.b16 %v3476, %v3468
  %v3557 = vpack.c.b16 %v3477, %v3469
  %v3558 = vpack.c.b16 %v3478, %v3470
  %v3559 = vpack.c.b16 %v3479, %v3471
  %v3560 = vpack.c.b16 %v3480, %v3472
  %v3561 = vpack.c.b16 %v3481, %v3473
  %v3562 = vpack.c.b16 %v3490, %v3482
  %v3563 = vpack.c.b16 %v3491, %v3483
  %v3564 = vpack.c.b16 %v3492, %v3484
  %v3565 = vpack.c.b16 %v3493, %v3485
  %v3566 = vpack.c.b16 %v3494, %v3486
  %v3567 = vpack.c.b16 %v3495, %v3487
  %v3568 = vpack.c.b16 %v3496, %v3488
  %v3569 = vpack.c.b16 %v3497, %v3489
  %v3570 = vpack.c.b16 %v3506, %v3498
  %v3571 = vpack.c.b16 %v3507, %v3499
  %v3572 = vpack.c.b16 %v3508, %v3500
  %v3573 = vpack.c.b16 %v3509, %v3501
  %v3574 = vpack.c.b16 %v3510, %v3502
  %v3575 = vpack.c.b16 %v3511, %v3503
  %v3576 = vpack.c.b16 %v3512, %v3504
  %v3577 = vpack.c.b16 %v3513, %v3505
  %3642 = vmatprep.subr.bf16.mxu0 %v3571
  %3643 = vmatpush1.bf16.msra.mxu0 %v3570
  %3644 = vmatprep.subr.bf16.mxu0 %v3563
  %3645 = vmatpush1.bf16.msra.mxu0 %v3562
  %3646 = vmatprep.subr.bf16.mxu0 %v3555
  %3647 = vmatpush1.bf16.msra.mxu0 %v3554
  %3648 = vmatprep.subr.bf16.mxu0 %v3547
  %3649 = vmatpush1.bf16.msra.mxu0 %v3546
  %3650 = vmatprep.subr.bf16.mxu0 %v3539
  %3651 = vmatpush1.bf16.msra.mxu0 %v3538
  %3652 = vmatprep.subr.bf16.mxu0 %v3531
  %3653 = vmatpush1.bf16.msra.mxu0 %v3530
  %3654 = vmatprep.subr.bf16.mxu0 %v3523
  %3655 = vmatpush1.bf16.msra.mxu0 %v3522
  %3656 = vmatprep.subr.bf16.mxu0 %v3515
  %3657 = vmatpush1.bf16.msra.mxu0 %v3514
  %3658 = vmatprep.subr.bf16.mxu0 0
  %3659 = vmatpush2.bf16.msra.mxu0 0
  %3660 = vmatprep.subr.bf16.mxu0 0
  %3661 = vmatpush2.bf16.msra.mxu0 0
  %3662 = vmatprep.subr.bf16.mxu0 0
  %3663 = vmatpush2.bf16.msra.mxu0 0
  %3664 = vmatprep.subr.bf16.mxu0 0
  %3665 = vmatpush2.bf16.msra.mxu0 0
  %3666 = vmatprep.subr.bf16.mxu0 0
  %3667 = vmatpush2.bf16.msra.mxu0 0
  %3668 = vmatprep.subr.bf16.mxu0 0
  %3669 = vmatpush2.bf16.msra.mxu0 0
  %3670 = vmatprep.subr.bf16.mxu0 0
  %3671 = vmatpush2.bf16.msra.mxu0 0
  %3672 = vmatprep.subr.bf16.mxu0 0
  %3673 = vmatpush2.bf16.msra.mxu0 0
  %3674 = vmatprep.mubr.bf16.mxu0 0
  %3675 = vmatmul.mubr.bf16.gmra.mxu0 %v3257
  %v3676 = vpop.f32.mrf.mxu0
  %v3677 = vadd.f32 0.0, %v3676
  %v3678 = vpop.f32.mrf.mxu0
  %v3679 = vadd.f32 0.0, %v3678
  %v3680 = vpop.f32.mrf.mxu0
  %v3681 = vadd.f32 0.0, %v3680
  %v3682 = vpop.f32.mrf.mxu0
  %v3683 = vadd.f32 0.0, %v3682
  %3684 = vdwg.mxu0
  %3685 = vmatprep.subr.bf16.mxu0 %v3573
  %3686 = vmatpush1.bf16.msra.mxu0 %v3572
  %3687 = vmatprep.subr.bf16.mxu0 %v3565
  %3688 = vmatpush1.bf16.msra.mxu0 %v3564
  %3689 = vmatprep.subr.bf16.mxu0 %v3557
  %3690 = vmatpush1.bf16.msra.mxu0 %v3556
  %3691 = vmatprep.subr.bf16.mxu0 %v3549
  %3692 = vmatpush1.bf16.msra.mxu0 %v3548
  %3693 = vmatprep.subr.bf16.mxu0 %v3541
  %3694 = vmatpush1.bf16.msra.mxu0 %v3540
  %3695 = vmatprep.subr.bf16.mxu0 %v3533
  %3696 = vmatpush1.bf16.msra.mxu0 %v3532
  %3697 = vmatprep.subr.bf16.mxu0 %v3525
  %3698 = vmatpush1.bf16.msra.mxu0 %v3524
  %3699 = vmatprep.subr.bf16.mxu0 %v3517
  %3700 = vmatpush1.bf16.msra.mxu0 %v3516
  %3701 = vmatprep.subr.bf16.mxu0 0
  %3702 = vmatpush2.bf16.msra.mxu0 0
  %3703 = vmatprep.subr.bf16.mxu0 0
  %3704 = vmatpush2.bf16.msra.mxu0 0
  %3705 = vmatprep.subr.bf16.mxu0 0
  %3706 = vmatpush2.bf16.msra.mxu0 0
  %3707 = vmatprep.subr.bf16.mxu0 0
  %3708 = vmatpush2.bf16.msra.mxu0 0
  %3709 = vmatprep.subr.bf16.mxu0 0
  %3710 = vmatpush2.bf16.msra.mxu0 0
  %3711 = vmatprep.subr.bf16.mxu0 0
  %3712 = vmatpush2.bf16.msra.mxu0 0
  %3713 = vmatprep.subr.bf16.mxu0 0
  %3714 = vmatpush2.bf16.msra.mxu0 0
  %3715 = vmatprep.subr.bf16.mxu0 0
  %3716 = vmatpush2.bf16.msra.mxu0 0
  %3717 = vmatprep.mubr.bf16.mxu0 0
  %3718 = vmatmul.mubr.bf16.gmra.mxu0 %v3257
  %v3719 = vpop.f32.mrf.mxu0
  %v3720 = vadd.f32 0.0, %v3719
  %v3721 = vpop.f32.mrf.mxu0
  %v3722 = vadd.f32 0.0, %v3721
  %v3723 = vpop.f32.mrf.mxu0
  %v3724 = vadd.f32 0.0, %v3723
  %v3725 = vpop.f32.mrf.mxu0
  %v3726 = vadd.f32 0.0, %v3725
  %3727 = vdwg.mxu0
  %3728 = vmatprep.subr.bf16.mxu0 %v3575
  %3729 = vmatpush1.bf16.msra.mxu0 %v3574
  %3730 = vmatprep.subr.bf16.mxu0 %v3567
  %3731 = vmatpush1.bf16.msra.mxu0 %v3566
  %3732 = vmatprep.subr.bf16.mxu0 %v3559
  %3733 = vmatpush1.bf16.msra.mxu0 %v3558
  %3734 = vmatprep.subr.bf16.mxu0 %v3551
  %3735 = vmatpush1.bf16.msra.mxu0 %v3550
  %3736 = vmatprep.subr.bf16.mxu0 %v3543
  %3737 = vmatpush1.bf16.msra.mxu0 %v3542
  %3738 = vmatprep.subr.bf16.mxu0 %v3535
  %3739 = vmatpush1.bf16.msra.mxu0 %v3534
  %3740 = vmatprep.subr.bf16.mxu0 %v3527
  %3741 = vmatpush1.bf16.msra.mxu0 %v3526
  %3742 = vmatprep.subr.bf16.mxu0 %v3519
  %3743 = vmatpush1.bf16.msra.mxu0 %v3518
  %3744 = vmatprep.subr.bf16.mxu0 0
  %3745 = vmatpush2.bf16.msra.mxu0 0
  %3746 = vmatprep.subr.bf16.mxu0 0
  %3747 = vmatpush2.bf16.msra.mxu0 0
  %3748 = vmatprep.subr.bf16.mxu0 0
  %3749 = vmatpush2.bf16.msra.mxu0 0
  %3750 = vmatprep.subr.bf16.mxu0 0
  %3751 = vmatpush2.bf16.msra.mxu0 0
  %3752 = vmatprep.subr.bf16.mxu0 0
  %3753 = vmatpush2.bf16.msra.mxu0 0
  %3754 = vmatprep.subr.bf16.mxu0 0
  %3755 = vmatpush2.bf16.msra.mxu0 0
  %3756 = vmatprep.subr.bf16.mxu0 0
  %3757 = vmatpush2.bf16.msra.mxu0 0
  %3758 = vmatprep.subr.bf16.mxu0 0
  %3759 = vmatpush2.bf16.msra.mxu0 0
  %3760 = vmatprep.mubr.bf16.mxu0 0
  %3761 = vmatmul.mubr.bf16.gmra.mxu0 %v3257
  %v3762 = vpop.f32.mrf.mxu0
  %v3763 = vadd.f32 0.0, %v3762
  %v3764 = vpop.f32.mrf.mxu0
  %v3765 = vadd.f32 0.0, %v3764
  %v3766 = vpop.f32.mrf.mxu0
  %v3767 = vadd.f32 0.0, %v3766
  %v3768 = vpop.f32.mrf.mxu0
  %v3769 = vadd.f32 0.0, %v3768
  %3770 = vdwg.mxu0
  %3771 = vmatprep.subr.bf16.mxu0 %v3577
  %3772 = vmatpush1.bf16.msra.mxu0 %v3576
  %3773 = vmatprep.subr.bf16.mxu0 %v3569
  %3774 = vmatpush1.bf16.msra.mxu0 %v3568
  %3775 = vmatprep.subr.bf16.mxu0 %v3561
  %3776 = vmatpush1.bf16.msra.mxu0 %v3560
  %3777 = vmatprep.subr.bf16.mxu0 %v3553
  %3778 = vmatpush1.bf16.msra.mxu0 %v3552
  %3779 = vmatprep.subr.bf16.mxu0 %v3545
  %3780 = vmatpush1.bf16.msra.mxu0 %v3544
  %3781 = vmatprep.subr.bf16.mxu0 %v3537
  %3782 = vmatpush1.bf16.msra.mxu0 %v3536
  %3783 = vmatprep.subr.bf16.mxu0 %v3529
  %3784 = vmatpush1.bf16.msra.mxu0 %v3528
  %3785 = vmatprep.subr.bf16.mxu0 %v3521
  %3786 = vmatpush1.bf16.msra.mxu0 %v3520
  %3787 = vmatprep.subr.bf16.mxu0 0
  %3788 = vmatpush2.bf16.msra.mxu0 0
  %3789 = vmatprep.subr.bf16.mxu0 0
  %3790 = vmatpush2.bf16.msra.mxu0 0
  %3791 = vmatprep.subr.bf16.mxu0 0
  %3792 = vmatpush2.bf16.msra.mxu0 0
  %3793 = vmatprep.subr.bf16.mxu0 0
  %3794 = vmatpush2.bf16.msra.mxu0 0
  %3795 = vmatprep.subr.bf16.mxu0 0
  %3796 = vmatpush2.bf16.msra.mxu0 0
  %3797 = vmatprep.subr.bf16.mxu0 0
  %3798 = vmatpush2.bf16.msra.mxu0 0
  %3799 = vmatprep.subr.bf16.mxu0 0
  %3800 = vmatpush2.bf16.msra.mxu0 0
  %3801 = vmatprep.subr.bf16.mxu0 0
  %3802 = vmatpush2.bf16.msra.mxu0 0
  %3803 = vmatprep.mubr.bf16.mxu0 0
  %3804 = vmatmul.mubr.bf16.gmra.mxu0 %v3257
  %v3805 = vpop.f32.mrf.mxu0
  %v3806 = vadd.f32 0.0, %v3805
  %v3807 = vpop.f32.mrf.mxu0
  %v3808 = vadd.f32 0.0, %v3807
  %v3809 = vpop.f32.mrf.mxu0
  %v3810 = vadd.f32 0.0, %v3809
  %v3811 = vpop.f32.mrf.mxu0
  %v3812 = vadd.f32 0.0, %v3811
  %3813 = vdwg.mxu0
  %v3814 = vsel %vm20, %v3677, %v3763
  %v3815 = vsel %vm20, %v3679, %v3765
  %v3816 = vsel %vm20, %v3720, %v3806
  %v3817 = vsel %vm20, %v3722, %v3808
  %v3818 = vsel %vm21, %v3681, %v3767
  %v3819 = vsel %vm21, %v3683, %v3769
  %v3820 = vsel %vm21, %v3724, %v3810
  %v3821 = vsel %vm21, %v3726, %v3812
  %s3822 = scalar_lea.vmem %s0, 160
  %v3823 = vld [vmem:[%s3822] sm:$0xff]
  %v3824 = vld [vmem:[%s3822 + $0x8] sm:$0xff]
  %v3825 = vld [vmem:[%s3822 + $0x10] sm:$0xff]
  %v3826 = vld [vmem:[%s3822 + $0x18] sm:$0xff]
  %v3827 = vunpack.c.l.bf16 %v3823
  %v3828 = vunpack.c.h.bf16 %v3823
  %v3829 = vunpack.c.l.bf16 %v3824
  %v3830 = vunpack.c.h.bf16 %v3824
  %v3831 = vunpack.c.l.bf16 %v3825
  %v3832 = vunpack.c.h.bf16 %v3825
  %v3833 = vunpack.c.l.bf16 %v3826
  %v3834 = vunpack.c.h.bf16 %v3826
  %v3835 = vadd.f32 %v3827, %v3814
  %v3836 = vadd.f32 %v3828, %v3815
  %v3837 = vadd.f32 %v3829, %v3816
  %v3838 = vadd.f32 %v3830, %v3817
  %v3839 = vadd.f32 %v3831, %v3818
  %v3840 = vadd.f32 %v3832, %v3819
  %v3841 = vadd.f32 %v3833, %v3820
  %v3842 = vadd.f32 %v3834, %v3821
  %v3843 = vxor.u32 %v3835, 2147483648
  %v3844 = vxor.u32 %v3839, 2147483648
  %v3845 = vmul.f32 %v3843, 1.442695
  %v3846 = vpow.pop %v3845
  %v3847 = vmul.f32 %v3844, 1.442695
  %v3848 = vpow.pop %v3847
  %v3849 = vadd.f32 %v3846, 1.0
  %v3850 = vadd.f32 %v3848, 1.0
  %v3851 = vrcp.pop %v3849
  %v3852 = vmul.f32 1.0, %v3851
  %v3853 = vrcp.pop %v3850
  %v3854 = vmul.f32 1.0, %v3853
  %v3855 = vxor.u32 %v3836, 2147483648
  %v3856 = vxor.u32 %v3840, 2147483648
  %v3857 = vmul.f32 %v3855, 1.442695
  %v3858 = vpow.pop %v3857
  %v3859 = vmul.f32 %v3856, 1.442695
  %v3860 = vpow.pop %v3859
  %v3861 = vadd.f32 %v3858, 1.0
  %v3862 = vadd.f32 %v3860, 1.0
  %v3863 = vrcp.pop %v3861
  %v3864 = vmul.f32 1.0, %v3863
  %v3865 = vrcp.pop %v3862
  %v3866 = vmul.f32 1.0, %v3865
  %v3867 = vtanh.pop %v3837
  %v3868 = vtanh.pop %v3841
  %v3869 = vxor.u32 %v3838, 2147483648
  %v3870 = vxor.u32 %v3842, 2147483648
  %v3871 = vmul.f32 %v3869, 1.442695
  %v3872 = vpow.pop %v3871
  %v3873 = vmul.f32 %v3870, 1.442695
  %v3874 = vpow.pop %v3873
  %v3875 = vadd.f32 %v3872, 1.0
  %v3876 = vadd.f32 %v3874, 1.0
  %v3877 = vrcp.pop %v3875
  %v3878 = vmul.f32 1.0, %v3877
  %v3879 = vrcp.pop %v3876
  %v3880 = vmul.f32 1.0, %v3879
  %v3881 = vmul.f32 %v3864, %v3251
  %v3882 = vmul.f32 %v3866, %v3252
  %v3883 = vmul.f32 %v3852, %v3867
  %v3884 = vmul.f32 %v3854, %v3868
  %v3885 = vadd.f32 %v3881, %v3883
  %v3886 = vadd.f32 %v3882, %v3884
  %v3887 = vtanh.pop %v3885
  %v3888 = vtanh.pop %v3886
  %v3889 = vmul.f32 %v3878, %v3887
  %v3890 = vmul.f32 %v3880, %v3888
  %v3891 = vsel %vm20, 5, 2
  %v3892 = vsel %vm21, 5, 2
  %vm3893 = vcmp.gt.s32.totalorder %v15, %v3891
  %vm3894 = vcmp.gt.s32.totalorder %v16, %v3892
  %v3895 = vsel %vm3893, %v3889, %v3249
  %v3896 = vsel %vm3894, %v3890, %v3250
  %v3897 = vsel %vm3893, %v3885, %v3251
  %v3898 = vsel %vm3894, %v3886, %v3252
  %v3899 = vpack.c.bf16 %v3895, %v3895
  %3900 = vst [vmem:[%s1961] sm:$0xf] %v3899
  %v3901 = vpack.c.bf16 %v3896, %v3896
  %3902 = vst [vmem:[%s1958 + $0x4] sm:$0xf] %v3901
  %v3903 = vpack.c.bf16 %v3896, %v3895
  %v3904 = vld [vmem:[%s2] sm:$0xff]
  %v3905 = vld [vmem:[%s2 + $0x8] sm:$0xff]
  %v3906 = vld [vmem:[%s2 + $0x10] sm:$0xff]
  %v3907 = vld [vmem:[%s2 + $0x18] sm:$0xff]
  %v3908 = vld [vmem:[%s2 + $0x20] sm:$0xff]
  %v3909 = vld [vmem:[%s2 + $0x28] sm:$0xff]
  %v3910 = vld [vmem:[%s2 + $0x30] sm:$0xff]
  %v3911 = vld [vmem:[%s2 + $0x38] sm:$0xff]
  %v3912 = vld [vmem:[%s2 + $0x40] sm:$0xff]
  %v3913 = vld [vmem:[%s2 + $0x48] sm:$0xff]
  %v3914 = vld [vmem:[%s2 + $0x50] sm:$0xff]
  %v3915 = vld [vmem:[%s2 + $0x58] sm:$0xff]
  %v3916 = vld [vmem:[%s2 + $0x60] sm:$0xff]
  %v3917 = vld [vmem:[%s2 + $0x68] sm:$0xff]
  %v3918 = vld [vmem:[%s2 + $0x70] sm:$0xff]
  %v3919 = vld [vmem:[%s2 + $0x78] sm:$0xff]
  %v3920 = vld [vmem:[%s2 + $0x80] sm:$0xff]
  %v3921 = vld [vmem:[%s2 + $0x88] sm:$0xff]
  %v3922 = vld [vmem:[%s2 + $0x90] sm:$0xff]
  %v3923 = vld [vmem:[%s2 + $0x98] sm:$0xff]
  %v3924 = vld [vmem:[%s2 + $0xa0] sm:$0xff]
  %v3925 = vld [vmem:[%s2 + $0xa8] sm:$0xff]
  %v3926 = vld [vmem:[%s2 + $0xb0] sm:$0xff]
  %v3927 = vld [vmem:[%s2 + $0xb8] sm:$0xff]
  %v3928 = vld [vmem:[%s2 + $0xc0] sm:$0xff]
  %v3929 = vld [vmem:[%s2 + $0xc8] sm:$0xff]
  %v3930 = vld [vmem:[%s2 + $0xd0] sm:$0xff]
  %v3931 = vld [vmem:[%s2 + $0xd8] sm:$0xff]
  %v3932 = vld [vmem:[%s2 + $0xe0] sm:$0xff]
  %v3933 = vld [vmem:[%s2 + $0xe8] sm:$0xff]
  %v3934 = vld [vmem:[%s2 + $0xf0] sm:$0xff]
  %v3935 = vld [vmem:[%s2 + $0xf8] sm:$0xff]
  %v3936 = vld [vmem:[%s2 + $0x100] sm:$0xff]
  %v3937 = vld [vmem:[%s2 + $0x108] sm:$0xff]
  %v3938 = vld [vmem:[%s2 + $0x110] sm:$0xff]
  %v3939 = vld [vmem:[%s2 + $0x118] sm:$0xff]
  %v3940 = vld [vmem:[%s2 + $0x120] sm:$0xff]
  %v3941 = vld [vmem:[%s2 + $0x128] sm:$0xff]
  %v3942 = vld [vmem:[%s2 + $0x130] sm:$0xff]
  %v3943 = vld [vmem:[%s2 + $0x138] sm:$0xff]
  %v3944 = vld [vmem:[%s2 + $0x140] sm:$0xff]
  %v3945 = vld [vmem:[%s2 + $0x148] sm:$0xff]
  %v3946 = vld [vmem:[%s2 + $0x150] sm:$0xff]
  %v3947 = vld [vmem:[%s2 + $0x158] sm:$0xff]
  %v3948 = vld [vmem:[%s2 + $0x160] sm:$0xff]
  %v3949 = vld [vmem:[%s2 + $0x168] sm:$0xff]
  %v3950 = vld [vmem:[%s2 + $0x170] sm:$0xff]
  %v3951 = vld [vmem:[%s2 + $0x178] sm:$0xff]
  %v3952 = vld [vmem:[%s2 + $0x180] sm:$0xff]
  %v3953 = vld [vmem:[%s2 + $0x188] sm:$0xff]
  %v3954 = vld [vmem:[%s2 + $0x190] sm:$0xff]
  %v3955 = vld [vmem:[%s2 + $0x198] sm:$0xff]
  %v3956 = vld [vmem:[%s2 + $0x1a0] sm:$0xff]
  %v3957 = vld [vmem:[%s2 + $0x1a8] sm:$0xff]
  %v3958 = vld [vmem:[%s2 + $0x1b0] sm:$0xff]
  %v3959 = vld [vmem:[%s2 + $0x1b8] sm:$0xff]
  %v3960 = vld [vmem:[%s2 + $0x1c0] sm:$0xff]
  %v3961 = vld [vmem:[%s2 + $0x1c8] sm:$0xff]
  %v3962 = vld [vmem:[%s2 + $0x1d0] sm:$0xff]
  %v3963 = vld [vmem:[%s2 + $0x1d8] sm:$0xff]
  %v3964 = vld [vmem:[%s2 + $0x1e0] sm:$0xff]
  %v3965 = vld [vmem:[%s2 + $0x1e8] sm:$0xff]
  %v3966 = vld [vmem:[%s2 + $0x1f0] sm:$0xff]
  %v3967 = vld [vmem:[%s2 + $0x1f8] sm:$0xff]
  %v4032 = vunpack.c.l.b16 %v3904
  %v4033 = vunpack.c.h.b16 %v3904
  %v4034 = vunpack.c.l.b16 %v3905
  %v4035 = vunpack.c.h.b16 %v3905
  %v4036 = vunpack.c.l.b16 %v3906
  %v4037 = vunpack.c.h.b16 %v3906
  %v4038 = vunpack.c.l.b16 %v3907
  %v4039 = vunpack.c.h.b16 %v3907
  %v4040 = vunpack.c.l.b16 %v3908
  %v4041 = vunpack.c.h.b16 %v3908
  %v4042 = vunpack.c.l.b16 %v3909
  %v4043 = vunpack.c.h.b16 %v3909
  %v4044 = vunpack.c.l.b16 %v3910
  %v4045 = vunpack.c.h.b16 %v3910
  %v4046 = vunpack.c.l.b16 %v3911
  %v4047 = vunpack.c.h.b16 %v3911
  %v4048 = vunpack.c.l.b16 %v3912
  %v4049 = vunpack.c.h.b16 %v3912
  %v4050 = vunpack.c.l.b16 %v3913
  %v4051 = vunpack.c.h.b16 %v3913
  %v4052 = vunpack.c.l.b16 %v3914
  %v4053 = vunpack.c.h.b16 %v3914
  %v4054 = vunpack.c.l.b16 %v3915
  %v4055 = vunpack.c.h.b16 %v3915
  %v4056 = vunpack.c.l.b16 %v3916
  %v4057 = vunpack.c.h.b16 %v3916
  %v4058 = vunpack.c.l.b16 %v3917
  %v4059 = vunpack.c.h.b16 %v3917
  %v4060 = vunpack.c.l.b16 %v3918
  %v4061 = vunpack.c.h.b16 %v3918
  %v4062 = vunpack.c.l.b16 %v3919
  %v4063 = vunpack.c.h.b16 %v3919
  %v4064 = vunpack.c.l.b16 %v3920
  %v4065 = vunpack.c.h.b16 %v3920
  %v4066 = vunpack.c.l.b16 %v3921
  %v4067 = vunpack.c.h.b16 %v3921
  %v4068 = vunpack.c.l.b16 %v3922
  %v4069 = vunpack.c.h.b16 %v3922
  %v4070 = vunpack.c.l.b16 %v3923
  %v4071 = vunpack.c.h.b16 %v3923
  %v4072 = vunpack.c.l.b16 %v3924
  %v4073 = vunpack.c.h.b16 %v3924
  %v4074 = vunpack.c.l.b16 %v3925
  %v4075 = vunpack.c.h.b16 %v3925
  %v4076 = vunpack.c.l.b16 %v3926
  %v4077 = vunpack.c.h.b16 %v3926
  %v4078 = vunpack.c.l.b16 %v3927
  %v4079 = vunpack.c.h.b16 %v3927
  %v4080 = vunpack.c.l.b16 %v3928
  %v4081 = vunpack.c.h.b16 %v3928
  %v4082 = vunpack.c.l.b16 %v3929
  %v4083 = vunpack.c.h.b16 %v3929
  %v4084 = vunpack.c.l.b16 %v3930
  %v4085 = vunpack.c.h.b16 %v3930
  %v4086 = vunpack.c.l.b16 %v3931
  %v4087 = vunpack.c.h.b16 %v3931
  %v4088 = vunpack.c.l.b16 %v3932
  %v4089 = vunpack.c.h.b16 %v3932
  %v4090 = vunpack.c.l.b16 %v3933
  %v4091 = vunpack.c.h.b16 %v3933
  %v4092 = vunpack.c.l.b16 %v3934
  %v4093 = vunpack.c.h.b16 %v3934
  %v4094 = vunpack.c.l.b16 %v3935
  %v4095 = vunpack.c.h.b16 %v3935
  %v4096 = vunpack.c.l.b16 %v3936
  %v4097 = vunpack.c.h.b16 %v3936
  %v4098 = vunpack.c.l.b16 %v3937
  %v4099 = vunpack.c.h.b16 %v3937
  %v4100 = vunpack.c.l.b16 %v3938
  %v4101 = vunpack.c.h.b16 %v3938
  %v4102 = vunpack.c.l.b16 %v3939
  %v4103 = vunpack.c.h.b16 %v3939
  %v4104 = vunpack.c.l.b16 %v3940
  %v4105 = vunpack.c.h.b16 %v3940
  %v4106 = vunpack.c.l.b16 %v3941
  %v4107 = vunpack.c.h.b16 %v3941
  %v4108 = vunpack.c.l.b16 %v3942
  %v4109 = vunpack.c.h.b16 %v3942
  %v4110 = vunpack.c.l.b16 %v3943
  %v4111 = vunpack.c.h.b16 %v3943
  %v4112 = vunpack.c.l.b16 %v3944
  %v4113 = vunpack.c.h.b16 %v3944
  %v4114 = vunpack.c.l.b16 %v3945
  %v4115 = vunpack.c.h.b16 %v3945
  %v4116 = vunpack.c.l.b16 %v3946
  %v4117 = vunpack.c.h.b16 %v3946
  %v4118 = vunpack.c.l.b16 %v3947
  %v4119 = vunpack.c.h.b16 %v3947
  %v4120 = vunpack.c.l.b16 %v3948
  %v4121 = vunpack.c.h.b16 %v3948
  %v4122 = vunpack.c.l.b16 %v3949
  %v4123 = vunpack.c.h.b16 %v3949
  %v4124 = vunpack.c.l.b16 %v3950
  %v4125 = vunpack.c.h.b16 %v3950
  %v4126 = vunpack.c.l.b16 %v3951
  %v4127 = vunpack.c.h.b16 %v3951
  %v4128 = vunpack.c.l.b16 %v3952
  %v4129 = vunpack.c.h.b16 %v3952
  %v4130 = vunpack.c.l.b16 %v3953
  %v4131 = vunpack.c.h.b16 %v3953
  %v4132 = vunpack.c.l.b16 %v3954
  %v4133 = vunpack.c.h.b16 %v3954
  %v4134 = vunpack.c.l.b16 %v3955
  %v4135 = vunpack.c.h.b16 %v3955
  %v4136 = vunpack.c.l.b16 %v3956
  %v4137 = vunpack.c.h.b16 %v3956
  %v4138 = vunpack.c.l.b16 %v3957
  %v4139 = vunpack.c.h.b16 %v3957
  %v4140 = vunpack.c.l.b16 %v3958
  %v4141 = vunpack.c.h.b16 %v3958
  %v4142 = vunpack.c.l.b16 %v3959
  %v4143 = vunpack.c.h.b16 %v3959
  %v4144 = vunpack.c.l.b16 %v3960
  %v4145 = vunpack.c.h.b16 %v3960
  %v4146 = vunpack.c.l.b16 %v3961
  %v4147 = vunpack.c.h.b16 %v3961
  %v4148 = vunpack.c.l.b16 %v3962
  %v4149 = vunpack.c.h.b16 %v3962
  %v4150 = vunpack.c.l.b16 %v3963
  %v4151 = vunpack.c.h.b16 %v3963
  %v4152 = vunpack.c.l.b16 %v3964
  %v4153 = vunpack.c.h.b16 %v3964
  %v4154 = vunpack.c.l.b16 %v3965
  %v4155 = vunpack.c.h.b16 %v3965
  %v4156 = vunpack.c.l.b16 %v3966
  %v4157 = vunpack.c.h.b16 %v3966
  %v4158 = vunpack.c.l.b16 %v3967
  %v4159 = vunpack.c.h.b16 %v3967
  %v4160 = vpack.c.b16 %v4040, %v4032
  %v4161 = vpack.c.b16 %v4041, %v4033
  %v4162 = vpack.c.b16 %v4042, %v4034
  %v4163 = vpack.c.b16 %v4043, %v4035
  %v4164 = vpack.c.b16 %v4044, %v4036
  %v4165 = vpack.c.b16 %v4045, %v4037
  %v4166 = vpack.c.b16 %v4046, %v4038
  %v4167 = vpack.c.b16 %v4047, %v4039
  %v4168 = vpack.c.b16 %v4056, %v4048
  %v4169 = vpack.c.b16 %v4057, %v4049
  %v4170 = vpack.c.b16 %v4058, %v4050
  %v4171 = vpack.c.b16 %v4059, %v4051
  %v4172 = vpack.c.b16 %v4060, %v4052
  %v4173 = vpack.c.b16 %v4061, %v4053
  %v4174 = vpack.c.b16 %v4062, %v4054
  %v4175 = vpack.c.b16 %v4063, %v4055
  %v4176 = vpack.c.b16 %v4072, %v4064
  %v4177 = vpack.c.b16 %v4073, %v4065
  %v4178 = vpack.c.b16 %v4074, %v4066
  %v4179 = vpack.c.b16 %v4075, %v4067
  %v4180 = vpack.c.b16 %v4076, %v4068
  %v4181 = vpack.c.b16 %v4077, %v4069
  %v4182 = vpack.c.b16 %v4078, %v4070
  %v4183 = vpack.c.b16 %v4079, %v4071
  %v4184 = vpack.c.b16 %v4088, %v4080
  %v4185 = vpack.c.b16 %v4089, %v4081
  %v4186 = vpack.c.b16 %v4090, %v4082
  %v4187 = vpack.c.b16 %v4091, %v4083
  %v4188 = vpack.c.b16 %v4092, %v4084
  %v4189 = vpack.c.b16 %v4093, %v4085
  %v4190 = vpack.c.b16 %v4094, %v4086
  %v4191 = vpack.c.b16 %v4095, %v4087
  %v4192 = vpack.c.b16 %v4104, %v4096
  %v4193 = vpack.c.b16 %v4105, %v4097
  %v4194 = vpack.c.b16 %v4106, %v4098
  %v4195 = vpack.c.b16 %v4107, %v4099
  %v4196 = vpack.c.b16 %v4108, %v4100
  %v4197 = vpack.c.b16 %v4109, %v4101
  %v4198 = vpack.c.b16 %v4110, %v4102
  %v4199 = vpack.c.b16 %v4111, %v4103
  %v4200 = vpack.c.b16 %v4120, %v4112
  %v4201 = vpack.c.b16 %v4121, %v4113
  %v4202 = vpack.c.b16 %v4122, %v4114
  %v4203 = vpack.c.b16 %v4123, %v4115
  %v4204 = vpack.c.b16 %v4124, %v4116
  %v4205 = vpack.c.b16 %v4125, %v4117
  %v4206 = vpack.c.b16 %v4126, %v4118
  %v4207 = vpack.c.b16 %v4127, %v4119
  %v4208 = vpack.c.b16 %v4136, %v4128
  %v4209 = vpack.c.b16 %v4137, %v4129
  %v4210 = vpack.c.b16 %v4138, %v4130
  %v4211 = vpack.c.b16 %v4139, %v4131
  %v4212 = vpack.c.b16 %v4140, %v4132
  %v4213 = vpack.c.b16 %v4141, %v4133
  %v4214 = vpack.c.b16 %v4142, %v4134
  %v4215 = vpack.c.b16 %v4143, %v4135
  %v4216 = vpack.c.b16 %v4152, %v4144
  %v4217 = vpack.c.b16 %v4153, %v4145
  %v4218 = vpack.c.b16 %v4154, %v4146
  %v4219 = vpack.c.b16 %v4155, %v4147
  %v4220 = vpack.c.b16 %v4156, %v4148
  %v4221 = vpack.c.b16 %v4157, %v4149
  %v4222 = vpack.c.b16 %v4158, %v4150
  %v4223 = vpack.c.b16 %v4159, %v4151
  %4288 = vmatprep.subr.bf16.mxu0 %v4217
  %4289 = vmatpush1.bf16.msra.mxu0 %v4216
  %4290 = vmatprep.subr.bf16.mxu0 %v4209
  %4291 = vmatpush1.bf16.msra.mxu0 %v4208
  %4292 = vmatprep.subr.bf16.mxu0 %v4201
  %4293 = vmatpush1.bf16.msra.mxu0 %v4200
  %4294 = vmatprep.subr.bf16.mxu0 %v4193
  %4295 = vmatpush1.bf16.msra.mxu0 %v4192
  %4296 = vmatprep.subr.bf16.mxu0 %v4185
  %4297 = vmatpush1.bf16.msra.mxu0 %v4184
  %4298 = vmatprep.subr.bf16.mxu0 %v4177
  %4299 = vmatpush1.bf16.msra.mxu0 %v4176
  %4300 = vmatprep.subr.bf16.mxu0 %v4169
  %4301 = vmatpush1.bf16.msra.mxu0 %v4168
  %4302 = vmatprep.subr.bf16.mxu0 %v4161
  %4303 = vmatpush1.bf16.msra.mxu0 %v4160
  %4304 = vmatprep.subr.bf16.mxu0 0
  %4305 = vmatpush2.bf16.msra.mxu0 0
  %4306 = vmatprep.subr.bf16.mxu0 0
  %4307 = vmatpush2.bf16.msra.mxu0 0
  %4308 = vmatprep.subr.bf16.mxu0 0
  %4309 = vmatpush2.bf16.msra.mxu0 0
  %4310 = vmatprep.subr.bf16.mxu0 0
  %4311 = vmatpush2.bf16.msra.mxu0 0
  %4312 = vmatprep.subr.bf16.mxu0 0
  %4313 = vmatpush2.bf16.msra.mxu0 0
  %4314 = vmatprep.subr.bf16.mxu0 0
  %4315 = vmatpush2.bf16.msra.mxu0 0
  %4316 = vmatprep.subr.bf16.mxu0 0
  %4317 = vmatpush2.bf16.msra.mxu0 0
  %4318 = vmatprep.subr.bf16.mxu0 0
  %4319 = vmatpush2.bf16.msra.mxu0 0
  %4320 = vmatprep.mubr.bf16.mxu0 0
  %4321 = vmatmul.mubr.bf16.gmra.mxu0 %v3903
  %v4322 = vpop.f32.mrf.mxu0
  %v4323 = vadd.f32 0.0, %v4322
  %v4324 = vpop.f32.mrf.mxu0
  %v4325 = vadd.f32 0.0, %v4324
  %v4326 = vpop.f32.mrf.mxu0
  %v4327 = vadd.f32 0.0, %v4326
  %v4328 = vpop.f32.mrf.mxu0
  %v4329 = vadd.f32 0.0, %v4328
  %4330 = vdwg.mxu0
  %4331 = vmatprep.subr.bf16.mxu0 %v4219
  %4332 = vmatpush1.bf16.msra.mxu0 %v4218
  %4333 = vmatprep.subr.bf16.mxu0 %v4211
  %4334 = vmatpush1.bf16.msra.mxu0 %v4210
  %4335 = vmatprep.subr.bf16.mxu0 %v4203
  %4336 = vmatpush1.bf16.msra.mxu0 %v4202
  %4337 = vmatprep.subr.bf16.mxu0 %v4195
  %4338 = vmatpush1.bf16.msra.mxu0 %v4194
  %4339 = vmatprep.subr.bf16.mxu0 %v4187
  %4340 = vmatpush1.bf16.msra.mxu0 %v4186
  %4341 = vmatprep.subr.bf16.mxu0 %v4179
  %4342 = vmatpush1.bf16.msra.mxu0 %v4178
  %4343 = vmatprep.subr.bf16.mxu0 %v4171
  %4344 = vmatpush1.bf16.msra.mxu0 %v4170
  %4345 = vmatprep.subr.bf16.mxu0 %v4163
  %4346 = vmatpush1.bf16.msra.mxu0 %v4162
  %4347 = vmatprep.subr.bf16.mxu0 0
  %4348 = vmatpush2.bf16.msra.mxu0 0
  %4349 = vmatprep.subr.bf16.mxu0 0
  %4350 = vmatpush2.bf16.msra.mxu0 0
  %4351 = vmatprep.subr.bf16.mxu0 0
  %4352 = vmatpush2.bf16.msra.mxu0 0
  %4353 = vmatprep.subr.bf16.mxu0 0
  %4354 = vmatpush2.bf16.msra.mxu0 0
  %4355 = vmatprep.subr.bf16.mxu0 0
  %4356 = vmatpush2.bf16.msra.mxu0 0
  %4357 = vmatprep.subr.bf16.mxu0 0
  %4358 = vmatpush2.bf16.msra.mxu0 0
  %4359 = vmatprep.subr.bf16.mxu0 0
  %4360 = vmatpush2.bf16.msra.mxu0 0
  %4361 = vmatprep.subr.bf16.mxu0 0
  %4362 = vmatpush2.bf16.msra.mxu0 0
  %4363 = vmatprep.mubr.bf16.mxu0 0
  %4364 = vmatmul.mubr.bf16.gmra.mxu0 %v3903
  %v4365 = vpop.f32.mrf.mxu0
  %v4366 = vadd.f32 0.0, %v4365
  %v4367 = vpop.f32.mrf.mxu0
  %v4368 = vadd.f32 0.0, %v4367
  %v4369 = vpop.f32.mrf.mxu0
  %v4370 = vadd.f32 0.0, %v4369
  %v4371 = vpop.f32.mrf.mxu0
  %v4372 = vadd.f32 0.0, %v4371
  %4373 = vdwg.mxu0
  %4374 = vmatprep.subr.bf16.mxu0 %v4221
  %4375 = vmatpush1.bf16.msra.mxu0 %v4220
  %4376 = vmatprep.subr.bf16.mxu0 %v4213
  %4377 = vmatpush1.bf16.msra.mxu0 %v4212
  %4378 = vmatprep.subr.bf16.mxu0 %v4205
  %4379 = vmatpush1.bf16.msra.mxu0 %v4204
  %4380 = vmatprep.subr.bf16.mxu0 %v4197
  %4381 = vmatpush1.bf16.msra.mxu0 %v4196
  %4382 = vmatprep.subr.bf16.mxu0 %v4189
  %4383 = vmatpush1.bf16.msra.mxu0 %v4188
  %4384 = vmatprep.subr.bf16.mxu0 %v4181
  %4385 = vmatpush1.bf16.msra.mxu0 %v4180
  %4386 = vmatprep.subr.bf16.mxu0 %v4173
  %4387 = vmatpush1.bf16.msra.mxu0 %v4172
  %4388 = vmatprep.subr.bf16.mxu0 %v4165
  %4389 = vmatpush1.bf16.msra.mxu0 %v4164
  %4390 = vmatprep.subr.bf16.mxu0 0
  %4391 = vmatpush2.bf16.msra.mxu0 0
  %4392 = vmatprep.subr.bf16.mxu0 0
  %4393 = vmatpush2.bf16.msra.mxu0 0
  %4394 = vmatprep.subr.bf16.mxu0 0
  %4395 = vmatpush2.bf16.msra.mxu0 0
  %4396 = vmatprep.subr.bf16.mxu0 0
  %4397 = vmatpush2.bf16.msra.mxu0 0
  %4398 = vmatprep.subr.bf16.mxu0 0
  %4399 = vmatpush2.bf16.msra.mxu0 0
  %4400 = vmatprep.subr.bf16.mxu0 0
  %4401 = vmatpush2.bf16.msra.mxu0 0
  %4402 = vmatprep.subr.bf16.mxu0 0
  %4403 = vmatpush2.bf16.msra.mxu0 0
  %4404 = vmatprep.subr.bf16.mxu0 0
  %4405 = vmatpush2.bf16.msra.mxu0 0
  %4406 = vmatprep.mubr.bf16.mxu0 0
  %4407 = vmatmul.mubr.bf16.gmra.mxu0 %v3903
  %v4408 = vpop.f32.mrf.mxu0
  %v4409 = vadd.f32 0.0, %v4408
  %v4410 = vpop.f32.mrf.mxu0
  %v4411 = vadd.f32 0.0, %v4410
  %v4412 = vpop.f32.mrf.mxu0
  %v4413 = vadd.f32 0.0, %v4412
  %v4414 = vpop.f32.mrf.mxu0
  %v4415 = vadd.f32 0.0, %v4414
  %4416 = vdwg.mxu0
  %4417 = vmatprep.subr.bf16.mxu0 %v4223
  %4418 = vmatpush1.bf16.msra.mxu0 %v4222
  %4419 = vmatprep.subr.bf16.mxu0 %v4215
  %4420 = vmatpush1.bf16.msra.mxu0 %v4214
  %4421 = vmatprep.subr.bf16.mxu0 %v4207
  %4422 = vmatpush1.bf16.msra.mxu0 %v4206
  %4423 = vmatprep.subr.bf16.mxu0 %v4199
  %4424 = vmatpush1.bf16.msra.mxu0 %v4198
  %4425 = vmatprep.subr.bf16.mxu0 %v4191
  %4426 = vmatpush1.bf16.msra.mxu0 %v4190
  %4427 = vmatprep.subr.bf16.mxu0 %v4183
  %4428 = vmatpush1.bf16.msra.mxu0 %v4182
  %4429 = vmatprep.subr.bf16.mxu0 %v4175
  %4430 = vmatpush1.bf16.msra.mxu0 %v4174
  %4431 = vmatprep.subr.bf16.mxu0 %v4167
  %4432 = vmatpush1.bf16.msra.mxu0 %v4166
  %4433 = vmatprep.subr.bf16.mxu0 0
  %4434 = vmatpush2.bf16.msra.mxu0 0
  %4435 = vmatprep.subr.bf16.mxu0 0
  %4436 = vmatpush2.bf16.msra.mxu0 0
  %4437 = vmatprep.subr.bf16.mxu0 0
  %4438 = vmatpush2.bf16.msra.mxu0 0
  %4439 = vmatprep.subr.bf16.mxu0 0
  %4440 = vmatpush2.bf16.msra.mxu0 0
  %4441 = vmatprep.subr.bf16.mxu0 0
  %4442 = vmatpush2.bf16.msra.mxu0 0
  %4443 = vmatprep.subr.bf16.mxu0 0
  %4444 = vmatpush2.bf16.msra.mxu0 0
  %4445 = vmatprep.subr.bf16.mxu0 0
  %4446 = vmatpush2.bf16.msra.mxu0 0
  %4447 = vmatprep.subr.bf16.mxu0 0
  %4448 = vmatpush2.bf16.msra.mxu0 0
  %4449 = vmatprep.mubr.bf16.mxu0 0
  %4450 = vmatmul.mubr.bf16.gmra.mxu0 %v3903
  %v4451 = vpop.f32.mrf.mxu0
  %v4452 = vadd.f32 0.0, %v4451
  %v4453 = vpop.f32.mrf.mxu0
  %v4454 = vadd.f32 0.0, %v4453
  %v4455 = vpop.f32.mrf.mxu0
  %v4456 = vadd.f32 0.0, %v4455
  %v4457 = vpop.f32.mrf.mxu0
  %v4458 = vadd.f32 0.0, %v4457
  %4459 = vdwg.mxu0
  %v4460 = vsel %vm20, %v4323, %v4409
  %v4461 = vsel %vm20, %v4325, %v4411
  %v4462 = vsel %vm20, %v4366, %v4452
  %v4463 = vsel %vm20, %v4368, %v4454
  %v4464 = vsel %vm21, %v4327, %v4413
  %v4465 = vsel %vm21, %v4329, %v4415
  %v4466 = vsel %vm21, %v4370, %v4456
  %v4467 = vsel %vm21, %v4372, %v4458
  %s4468 = scalar_lea.vmem %s0, 192
  %v4469 = vld [vmem:[%s4468] sm:$0xff]
  %v4470 = vld [vmem:[%s4468 + $0x8] sm:$0xff]
  %v4471 = vld [vmem:[%s4468 + $0x10] sm:$0xff]
  %v4472 = vld [vmem:[%s4468 + $0x18] sm:$0xff]
  %v4473 = vunpack.c.l.bf16 %v4469
  %v4474 = vunpack.c.h.bf16 %v4469
  %v4475 = vunpack.c.l.bf16 %v4470
  %v4476 = vunpack.c.h.bf16 %v4470
  %v4477 = vunpack.c.l.bf16 %v4471
  %v4478 = vunpack.c.h.bf16 %v4471
  %v4479 = vunpack.c.l.bf16 %v4472
  %v4480 = vunpack.c.h.bf16 %v4472
  %v4481 = vadd.f32 %v4473, %v4460
  %v4482 = vadd.f32 %v4474, %v4461
  %v4483 = vadd.f32 %v4475, %v4462
  %v4484 = vadd.f32 %v4476, %v4463
  %v4485 = vadd.f32 %v4477, %v4464
  %v4486 = vadd.f32 %v4478, %v4465
  %v4487 = vadd.f32 %v4479, %v4466
  %v4488 = vadd.f32 %v4480, %v4467
  %v4489 = vxor.u32 %v4481, 2147483648
  %v4490 = vxor.u32 %v4485, 2147483648
  %v4491 = vmul.f32 %v4489, 1.442695
  %v4492 = vpow.pop %v4491
  %v4493 = vmul.f32 %v4490, 1.442695
  %v4494 = vpow.pop %v4493
  %v4495 = vadd.f32 %v4492, 1.0
  %v4496 = vadd.f32 %v4494, 1.0
  %v4497 = vrcp.pop %v4495
  %v4498 = vmul.f32 1.0, %v4497
  %v4499 = vrcp.pop %v4496
  %v4500 = vmul.f32 1.0, %v4499
  %v4501 = vxor.u32 %v4482, 2147483648
  %v4502 = vxor.u32 %v4486, 2147483648
  %v4503 = vmul.f32 %v4501, 1.442695
  %v4504 = vpow.pop %v4503
  %v4505 = vmul.f32 %v4502, 1.442695
  %v4506 = vpow.pop %v4505
  %v4507 = vadd.f32 %v4504, 1.0
  %v4508 = vadd.f32 %v4506, 1.0
  %v4509 = vrcp.pop %v4507
  %v4510 = vmul.f32 1.0, %v4509
  %v4511 = vrcp.pop %v4508
  %v4512 = vmul.f32 1.0, %v4511
  %v4513 = vtanh.pop %v4483
  %v4514 = vtanh.pop %v4487
  %v4515 = vxor.u32 %v4484, 2147483648
  %v4516 = vxor.u32 %v4488, 2147483648
  %v4517 = vmul.f32 %v4515, 1.442695
  %v4518 = vpow.pop %v4517
  %v4519 = vmul.f32 %v4516, 1.442695
  %v4520 = vpow.pop %v4519
  %v4521 = vadd.f32 %v4518, 1.0
  %v4522 = vadd.f32 %v4520, 1.0
  %v4523 = vrcp.pop %v4521
  %v4524 = vmul.f32 1.0, %v4523
  %v4525 = vrcp.pop %v4522
  %v4526 = vmul.f32 1.0, %v4525
  %v4527 = vmul.f32 %v4510, %v3897
  %v4528 = vmul.f32 %v4512, %v3898
  %v4529 = vmul.f32 %v4498, %v4513
  %v4530 = vmul.f32 %v4500, %v4514
  %v4531 = vadd.f32 %v4527, %v4529
  %v4532 = vadd.f32 %v4528, %v4530
  %v4533 = vtanh.pop %v4531
  %v4534 = vtanh.pop %v4532
  %v4535 = vmul.f32 %v4524, %v4533
  %v4536 = vmul.f32 %v4526, %v4534
  %v4537 = vsel %vm20, 6, 1
  %v4538 = vsel %vm21, 6, 1
  %vm4539 = vcmp.gt.s32.totalorder %v15, %v4537
  %vm4540 = vcmp.gt.s32.totalorder %v16, %v4538
  %v4541 = vsel %vm4539, %v4535, %v3895
  %v4542 = vsel %vm4540, %v4536, %v3896
  %v4543 = vsel %vm4539, %v4531, %v3897
  %v4544 = vsel %vm4540, %v4532, %v3898
  %v4545 = vpack.c.bf16 %v4541, %v4541
  %4546 = vst [vmem:[%s1313] sm:$0xf] %v4545
  %v4547 = vpack.c.bf16 %v4542, %v4542
  %4548 = vst [vmem:[%s1310 + $0x4] sm:$0xf] %v4547
  %v4549 = vpack.c.bf16 %v4542, %v4541
  %v4550 = vld [vmem:[%s2] sm:$0xff]
  %v4551 = vld [vmem:[%s2 + $0x8] sm:$0xff]
  %v4552 = vld [vmem:[%s2 + $0x10] sm:$0xff]
  %v4553 = vld [vmem:[%s2 + $0x18] sm:$0xff]
  %v4554 = vld [vmem:[%s2 + $0x20] sm:$0xff]
  %v4555 = vld [vmem:[%s2 + $0x28] sm:$0xff]
  %v4556 = vld [vmem:[%s2 + $0x30] sm:$0xff]
  %v4557 = vld [vmem:[%s2 + $0x38] sm:$0xff]
  %v4558 = vld [vmem:[%s2 + $0x40] sm:$0xff]
  %v4559 = vld [vmem:[%s2 + $0x48] sm:$0xff]
  %v4560 = vld [vmem:[%s2 + $0x50] sm:$0xff]
  %v4561 = vld [vmem:[%s2 + $0x58] sm:$0xff]
  %v4562 = vld [vmem:[%s2 + $0x60] sm:$0xff]
  %v4563 = vld [vmem:[%s2 + $0x68] sm:$0xff]
  %v4564 = vld [vmem:[%s2 + $0x70] sm:$0xff]
  %v4565 = vld [vmem:[%s2 + $0x78] sm:$0xff]
  %v4566 = vld [vmem:[%s2 + $0x80] sm:$0xff]
  %v4567 = vld [vmem:[%s2 + $0x88] sm:$0xff]
  %v4568 = vld [vmem:[%s2 + $0x90] sm:$0xff]
  %v4569 = vld [vmem:[%s2 + $0x98] sm:$0xff]
  %v4570 = vld [vmem:[%s2 + $0xa0] sm:$0xff]
  %v4571 = vld [vmem:[%s2 + $0xa8] sm:$0xff]
  %v4572 = vld [vmem:[%s2 + $0xb0] sm:$0xff]
  %v4573 = vld [vmem:[%s2 + $0xb8] sm:$0xff]
  %v4574 = vld [vmem:[%s2 + $0xc0] sm:$0xff]
  %v4575 = vld [vmem:[%s2 + $0xc8] sm:$0xff]
  %v4576 = vld [vmem:[%s2 + $0xd0] sm:$0xff]
  %v4577 = vld [vmem:[%s2 + $0xd8] sm:$0xff]
  %v4578 = vld [vmem:[%s2 + $0xe0] sm:$0xff]
  %v4579 = vld [vmem:[%s2 + $0xe8] sm:$0xff]
  %v4580 = vld [vmem:[%s2 + $0xf0] sm:$0xff]
  %v4581 = vld [vmem:[%s2 + $0xf8] sm:$0xff]
  %v4582 = vld [vmem:[%s2 + $0x100] sm:$0xff]
  %v4583 = vld [vmem:[%s2 + $0x108] sm:$0xff]
  %v4584 = vld [vmem:[%s2 + $0x110] sm:$0xff]
  %v4585 = vld [vmem:[%s2 + $0x118] sm:$0xff]
  %v4586 = vld [vmem:[%s2 + $0x120] sm:$0xff]
  %v4587 = vld [vmem:[%s2 + $0x128] sm:$0xff]
  %v4588 = vld [vmem:[%s2 + $0x130] sm:$0xff]
  %v4589 = vld [vmem:[%s2 + $0x138] sm:$0xff]
  %v4590 = vld [vmem:[%s2 + $0x140] sm:$0xff]
  %v4591 = vld [vmem:[%s2 + $0x148] sm:$0xff]
  %v4592 = vld [vmem:[%s2 + $0x150] sm:$0xff]
  %v4593 = vld [vmem:[%s2 + $0x158] sm:$0xff]
  %v4594 = vld [vmem:[%s2 + $0x160] sm:$0xff]
  %v4595 = vld [vmem:[%s2 + $0x168] sm:$0xff]
  %v4596 = vld [vmem:[%s2 + $0x170] sm:$0xff]
  %v4597 = vld [vmem:[%s2 + $0x178] sm:$0xff]
  %v4598 = vld [vmem:[%s2 + $0x180] sm:$0xff]
  %v4599 = vld [vmem:[%s2 + $0x188] sm:$0xff]
  %v4600 = vld [vmem:[%s2 + $0x190] sm:$0xff]
  %v4601 = vld [vmem:[%s2 + $0x198] sm:$0xff]
  %v4602 = vld [vmem:[%s2 + $0x1a0] sm:$0xff]
  %v4603 = vld [vmem:[%s2 + $0x1a8] sm:$0xff]
  %v4604 = vld [vmem:[%s2 + $0x1b0] sm:$0xff]
  %v4605 = vld [vmem:[%s2 + $0x1b8] sm:$0xff]
  %v4606 = vld [vmem:[%s2 + $0x1c0] sm:$0xff]
  %v4607 = vld [vmem:[%s2 + $0x1c8] sm:$0xff]
  %v4608 = vld [vmem:[%s2 + $0x1d0] sm:$0xff]
  %v4609 = vld [vmem:[%s2 + $0x1d8] sm:$0xff]
  %v4610 = vld [vmem:[%s2 + $0x1e0] sm:$0xff]
  %v4611 = vld [vmem:[%s2 + $0x1e8] sm:$0xff]
  %v4612 = vld [vmem:[%s2 + $0x1f0] sm:$0xff]
  %v4613 = vld [vmem:[%s2 + $0x1f8] sm:$0xff]
  %v4678 = vunpack.c.l.b16 %v4550
  %v4679 = vunpack.c.h.b16 %v4550
  %v4680 = vunpack.c.l.b16 %v4551
  %v4681 = vunpack.c.h.b16 %v4551
  %v4682 = vunpack.c.l.b16 %v4552
  %v4683 = vunpack.c.h.b16 %v4552
  %v4684 = vunpack.c.l.b16 %v4553
  %v4685 = vunpack.c.h.b16 %v4553
  %v4686 = vunpack.c.l.b16 %v4554
  %v4687 = vunpack.c.h.b16 %v4554
  %v4688 = vunpack.c.l.b16 %v4555
  %v4689 = vunpack.c.h.b16 %v4555
  %v4690 = vunpack.c.l.b16 %v4556
  %v4691 = vunpack.c.h.b16 %v4556
  %v4692 = vunpack.c.l.b16 %v4557
  %v4693 = vunpack.c.h.b16 %v4557
  %v4694 = vunpack.c.l.b16 %v4558
  %v4695 = vunpack.c.h.b16 %v4558
  %v4696 = vunpack.c.l.b16 %v4559
  %v4697 = vunpack.c.h.b16 %v4559
  %v4698 = vunpack.c.l.b16 %v4560
  %v4699 = vunpack.c.h.b16 %v4560
  %v4700 = vunpack.c.l.b16 %v4561
  %v4701 = vunpack.c.h.b16 %v4561
  %v4702 = vunpack.c.l.b16 %v4562
  %v4703 = vunpack.c.h.b16 %v4562
  %v4704 = vunpack.c.l.b16 %v4563
  %v4705 = vunpack.c.h.b16 %v4563
  %v4706 = vunpack.c.l.b16 %v4564
  %v4707 = vunpack.c.h.b16 %v4564
  %v4708 = vunpack.c.l.b16 %v4565
  %v4709 = vunpack.c.h.b16 %v4565
  %v4710 = vunpack.c.l.b16 %v4566
  %v4711 = vunpack.c.h.b16 %v4566
  %v4712 = vunpack.c.l.b16 %v4567
  %v4713 = vunpack.c.h.b16 %v4567
  %v4714 = vunpack.c.l.b16 %v4568
  %v4715 = vunpack.c.h.b16 %v4568
  %v4716 = vunpack.c.l.b16 %v4569
  %v4717 = vunpack.c.h.b16 %v4569
  %v4718 = vunpack.c.l.b16 %v4570
  %v4719 = vunpack.c.h.b16 %v4570
  %v4720 = vunpack.c.l.b16 %v4571
  %v4721 = vunpack.c.h.b16 %v4571
  %v4722 = vunpack.c.l.b16 %v4572
  %v4723 = vunpack.c.h.b16 %v4572
  %v4724 = vunpack.c.l.b16 %v4573
  %v4725 = vunpack.c.h.b16 %v4573
  %v4726 = vunpack.c.l.b16 %v4574
  %v4727 = vunpack.c.h.b16 %v4574
  %v4728 = vunpack.c.l.b16 %v4575
  %v4729 = vunpack.c.h.b16 %v4575
  %v4730 = vunpack.c.l.b16 %v4576
  %v4731 = vunpack.c.h.b16 %v4576
  %v4732 = vunpack.c.l.b16 %v4577
  %v4733 = vunpack.c.h.b16 %v4577
  %v4734 = vunpack.c.l.b16 %v4578
  %v4735 = vunpack.c.h.b16 %v4578
  %v4736 = vunpack.c.l.b16 %v4579
  %v4737 = vunpack.c.h.b16 %v4579
  %v4738 = vunpack.c.l.b16 %v4580
  %v4739 = vunpack.c.h.b16 %v4580
  %v4740 = vunpack.c.l.b16 %v4581
  %v4741 = vunpack.c.h.b16 %v4581
  %v4742 = vunpack.c.l.b16 %v4582
  %v4743 = vunpack.c.h.b16 %v4582
  %v4744 = vunpack.c.l.b16 %v4583
  %v4745 = vunpack.c.h.b16 %v4583
  %v4746 = vunpack.c.l.b16 %v4584
  %v4747 = vunpack.c.h.b16 %v4584
  %v4748 = vunpack.c.l.b16 %v4585
  %v4749 = vunpack.c.h.b16 %v4585
  %v4750 = vunpack.c.l.b16 %v4586
  %v4751 = vunpack.c.h.b16 %v4586
  %v4752 = vunpack.c.l.b16 %v4587
  %v4753 = vunpack.c.h.b16 %v4587
  %v4754 = vunpack.c.l.b16 %v4588
  %v4755 = vunpack.c.h.b16 %v4588
  %v4756 = vunpack.c.l.b16 %v4589
  %v4757 = vunpack.c.h.b16 %v4589
  %v4758 = vunpack.c.l.b16 %v4590
  %v4759 = vunpack.c.h.b16 %v4590
  %v4760 = vunpack.c.l.b16 %v4591
  %v4761 = vunpack.c.h.b16 %v4591
  %v4762 = vunpack.c.l.b16 %v4592
  %v4763 = vunpack.c.h.b16 %v4592
  %v4764 = vunpack.c.l.b16 %v4593
  %v4765 = vunpack.c.h.b16 %v4593
  %v4766 = vunpack.c.l.b16 %v4594
  %v4767 = vunpack.c.h.b16 %v4594
  %v4768 = vunpack.c.l.b16 %v4595
  %v4769 = vunpack.c.h.b16 %v4595
  %v4770 = vunpack.c.l.b16 %v4596
  %v4771 = vunpack.c.h.b16 %v4596
  %v4772 = vunpack.c.l.b16 %v4597
  %v4773 = vunpack.c.h.b16 %v4597
  %v4774 = vunpack.c.l.b16 %v4598
  %v4775 = vunpack.c.h.b16 %v4598
  %v4776 = vunpack.c.l.b16 %v4599
  %v4777 = vunpack.c.h.b16 %v4599
  %v4778 = vunpack.c.l.b16 %v4600
  %v4779 = vunpack.c.h.b16 %v4600
  %v4780 = vunpack.c.l.b16 %v4601
  %v4781 = vunpack.c.h.b16 %v4601
  %v4782 = vunpack.c.l.b16 %v4602
  %v4783 = vunpack.c.h.b16 %v4602
  %v4784 = vunpack.c.l.b16 %v4603
  %v4785 = vunpack.c.h.b16 %v4603
  %v4786 = vunpack.c.l.b16 %v4604
  %v4787 = vunpack.c.h.b16 %v4604
  %v4788 = vunpack.c.l.b16 %v4605
  %v4789 = vunpack.c.h.b16 %v4605
  %v4790 = vunpack.c.l.b16 %v4606
  %v4791 = vunpack.c.h.b16 %v4606
  %v4792 = vunpack.c.l.b16 %v4607
  %v4793 = vunpack.c.h.b16 %v4607
  %v4794 = vunpack.c.l.b16 %v4608
  %v4795 = vunpack.c.h.b16 %v4608
  %v4796 = vunpack.c.l.b16 %v4609
  %v4797 = vunpack.c.h.b16 %v4609
  %v4798 = vunpack.c.l.b16 %v4610
  %v4799 = vunpack.c.h.b16 %v4610
  %v4800 = vunpack.c.l.b16 %v4611
  %v4801 = vunpack.c.h.b16 %v4611
  %v4802 = vunpack.c.l.b16 %v4612
  %v4803 = vunpack.c.h.b16 %v4612
  %v4804 = vunpack.c.l.b16 %v4613
  %v4805 = vunpack.c.h.b16 %v4613
  %v4806 = vpack.c.b16 %v4686, %v4678
  %v4807 = vpack.c.b16 %v4687, %v4679
  %v4808 = vpack.c.b16 %v4688, %v4680
  %v4809 = vpack.c.b16 %v4689, %v4681
  %v4810 = vpack.c.b16 %v4690, %v4682
  %v4811 = vpack.c.b16 %v4691, %v4683
  %v4812 = vpack.c.b16 %v4692, %v4684
  %v4813 = vpack.c.b16 %v4693, %v4685
  %v4814 = vpack.c.b16 %v4702, %v4694
  %v4815 = vpack.c.b16 %v4703, %v4695
  %v4816 = vpack.c.b16 %v4704, %v4696
  %v4817 = vpack.c.b16 %v4705, %v4697
  %v4818 = vpack.c.b16 %v4706, %v4698
  %v4819 = vpack.c.b16 %v4707, %v4699
  %v4820 = vpack.c.b16 %v4708, %v4700
  %v4821 = vpack.c.b16 %v4709, %v4701
  %v4822 = vpack.c.b16 %v4718, %v4710
  %v4823 = vpack.c.b16 %v4719, %v4711
  %v4824 = vpack.c.b16 %v4720, %v4712
  %v4825 = vpack.c.b16 %v4721, %v4713
  %v4826 = vpack.c.b16 %v4722, %v4714
  %v4827 = vpack.c.b16 %v4723, %v4715
  %v4828 = vpack.c.b16 %v4724, %v4716
  %v4829 = vpack.c.b16 %v4725, %v4717
  %v4830 = vpack.c.b16 %v4734, %v4726
  %v4831 = vpack.c.b16 %v4735, %v4727
  %v4832 = vpack.c.b16 %v4736, %v4728
  %v4833 = vpack.c.b16 %v4737, %v4729
  %v4834 = vpack.c.b16 %v4738, %v4730
  %v4835 = vpack.c.b16 %v4739, %v4731
  %v4836 = vpack.c.b16 %v4740, %v4732
  %v4837 = vpack.c.b16 %v4741, %v4733
  %v4838 = vpack.c.b16 %v4750, %v4742
  %v4839 = vpack.c.b16 %v4751, %v4743
  %v4840 = vpack.c.b16 %v4752, %v4744
  %v4841 = vpack.c.b16 %v4753, %v4745
  %v4842 = vpack.c.b16 %v4754, %v4746
  %v4843 = vpack.c.b16 %v4755, %v4747
  %v4844 = vpack.c.b16 %v4756, %v4748
  %v4845 = vpack.c.b16 %v4757, %v4749
  %v4846 = vpack.c.b16 %v4766, %v4758
  %v4847 = vpack.c.b16 %v4767, %v4759
  %v4848 = vpack.c.b16 %v4768, %v4760
  %v4849 = vpack.c.b16 %v4769, %v4761
  %v4850 = vpack.c.b16 %v4770, %v4762
  %v4851 = vpack.c.b16 %v4771, %v4763
  %v4852 = vpack.c.b16 %v4772, %v4764
  %v4853 = vpack.c.b16 %v4773, %v4765
  %v4854 = vpack.c.b16 %v4782, %v4774
  %v4855 = vpack.c.b16 %v4783, %v4775
  %v4856 = vpack.c.b16 %v4784, %v4776
  %v4857 = vpack.c.b16 %v4785, %v4777
  %v4858 = vpack.c.b16 %v4786, %v4778
  %v4859 = vpack.c.b16 %v4787, %v4779
  %v4860 = vpack.c.b16 %v4788, %v4780
  %v4861 = vpack.c.b16 %v4789, %v4781
  %v4862 = vpack.c.b16 %v4798, %v4790
  %v4863 = vpack.c.b16 %v4799, %v4791
  %v4864 = vpack.c.b16 %v4800, %v4792
  %v4865 = vpack.c.b16 %v4801, %v4793
  %v4866 = vpack.c.b16 %v4802, %v4794
  %v4867 = vpack.c.b16 %v4803, %v4795
  %v4868 = vpack.c.b16 %v4804, %v4796
  %v4869 = vpack.c.b16 %v4805, %v4797
  %4934 = vmatprep.subr.bf16.mxu0 %v4863
  %4935 = vmatpush1.bf16.msra.mxu0 %v4862
  %4936 = vmatprep.subr.bf16.mxu0 %v4855
  %4937 = vmatpush1.bf16.msra.mxu0 %v4854
  %4938 = vmatprep.subr.bf16.mxu0 %v4847
  %4939 = vmatpush1.bf16.msra.mxu0 %v4846
  %4940 = vmatprep.subr.bf16.mxu0 %v4839
  %4941 = vmatpush1.bf16.msra.mxu0 %v4838
  %4942 = vmatprep.subr.bf16.mxu0 %v4831
  %4943 = vmatpush1.bf16.msra.mxu0 %v4830
  %4944 = vmatprep.subr.bf16.mxu0 %v4823
  %4945 = vmatpush1.bf16.msra.mxu0 %v4822
  %4946 = vmatprep.subr.bf16.mxu0 %v4815
  %4947 = vmatpush1.bf16.msra.mxu0 %v4814
  %4948 = vmatprep.subr.bf16.mxu0 %v4807
  %4949 = vmatpush1.bf16.msra.mxu0 %v4806
  %4950 = vmatprep.subr.bf16.mxu0 0
  %4951 = vmatpush2.bf16.msra.mxu0 0
  %4952 = vmatprep.subr.bf16.mxu0 0
  %4953 = vmatpush2.bf16.msra.mxu0 0
  %4954 = vmatprep.subr.bf16.mxu0 0
  %4955 = vmatpush2.bf16.msra.mxu0 0
  %4956 = vmatprep.subr.bf16.mxu0 0
  %4957 = vmatpush2.bf16.msra.mxu0 0
  %4958 = vmatprep.subr.bf16.mxu0 0
  %4959 = vmatpush2.bf16.msra.mxu0 0
  %4960 = vmatprep.subr.bf16.mxu0 0
  %4961 = vmatpush2.bf16.msra.mxu0 0
  %4962 = vmatprep.subr.bf16.mxu0 0
  %4963 = vmatpush2.bf16.msra.mxu0 0
  %4964 = vmatprep.subr.bf16.mxu0 0
  %4965 = vmatpush2.bf16.msra.mxu0 0
  %4966 = vmatprep.mubr.bf16.mxu0 0
  %4967 = vmatmul.mubr.bf16.gmra.mxu0 %v4549
  %v4968 = vpop.f32.mrf.mxu0
  %v4969 = vadd.f32 0.0, %v4968
  %v4970 = vpop.f32.mrf.mxu0
  %v4971 = vadd.f32 0.0, %v4970
  %v4972 = vpop.f32.mrf.mxu0
  %v4973 = vadd.f32 0.0, %v4972
  %v4974 = vpop.f32.mrf.mxu0
  %v4975 = vadd.f32 0.0, %v4974
  %4976 = vdwg.mxu0
  %4977 = vmatprep.subr.bf16.mxu0 %v4865
  %4978 = vmatpush1.bf16.msra.mxu0 %v4864
  %4979 = vmatprep.subr.bf16.mxu0 %v4857
  %4980 = vmatpush1.bf16.msra.mxu0 %v4856
  %4981 = vmatprep.subr.bf16.mxu0 %v4849
  %4982 = vmatpush1.bf16.msra.mxu0 %v4848
  %4983 = vmatprep.subr.bf16.mxu0 %v4841
  %4984 = vmatpush1.bf16.msra.mxu0 %v4840
  %4985 = vmatprep.subr.bf16.mxu0 %v4833
  %4986 = vmatpush1.bf16.msra.mxu0 %v4832
  %4987 = vmatprep.subr.bf16.mxu0 %v4825
  %4988 = vmatpush1.bf16.msra.mxu0 %v4824
  %4989 = vmatprep.subr.bf16.mxu0 %v4817
  %4990 = vmatpush1.bf16.msra.mxu0 %v4816
  %4991 = vmatprep.subr.bf16.mxu0 %v4809
  %4992 = vmatpush1.bf16.msra.mxu0 %v4808
  %4993 = vmatprep.subr.bf16.mxu0 0
  %4994 = vmatpush2.bf16.msra.mxu0 0
  %4995 = vmatprep.subr.bf16.mxu0 0
  %4996 = vmatpush2.bf16.msra.mxu0 0
  %4997 = vmatprep.subr.bf16.mxu0 0
  %4998 = vmatpush2.bf16.msra.mxu0 0
  %4999 = vmatprep.subr.bf16.mxu0 0
  %5000 = vmatpush2.bf16.msra.mxu0 0
  %5001 = vmatprep.subr.bf16.mxu0 0
  %5002 = vmatpush2.bf16.msra.mxu0 0
  %5003 = vmatprep.subr.bf16.mxu0 0
  %5004 = vmatpush2.bf16.msra.mxu0 0
  %5005 = vmatprep.subr.bf16.mxu0 0
  %5006 = vmatpush2.bf16.msra.mxu0 0
  %5007 = vmatprep.subr.bf16.mxu0 0
  %5008 = vmatpush2.bf16.msra.mxu0 0
  %5009 = vmatprep.mubr.bf16.mxu0 0
  %5010 = vmatmul.mubr.bf16.gmra.mxu0 %v4549
  %v5011 = vpop.f32.mrf.mxu0
  %v5012 = vadd.f32 0.0, %v5011
  %v5013 = vpop.f32.mrf.mxu0
  %v5014 = vadd.f32 0.0, %v5013
  %v5015 = vpop.f32.mrf.mxu0
  %v5016 = vadd.f32 0.0, %v5015
  %v5017 = vpop.f32.mrf.mxu0
  %v5018 = vadd.f32 0.0, %v5017
  %5019 = vdwg.mxu0
  %5020 = vmatprep.subr.bf16.mxu0 %v4867
  %5021 = vmatpush1.bf16.msra.mxu0 %v4866
  %5022 = vmatprep.subr.bf16.mxu0 %v4859
  %5023 = vmatpush1.bf16.msra.mxu0 %v4858
  %5024 = vmatprep.subr.bf16.mxu0 %v4851
  %5025 = vmatpush1.bf16.msra.mxu0 %v4850
  %5026 = vmatprep.subr.bf16.mxu0 %v4843
  %5027 = vmatpush1.bf16.msra.mxu0 %v4842
  %5028 = vmatprep.subr.bf16.mxu0 %v4835
  %5029 = vmatpush1.bf16.msra.mxu0 %v4834
  %5030 = vmatprep.subr.bf16.mxu0 %v4827
  %5031 = vmatpush1.bf16.msra.mxu0 %v4826
  %5032 = vmatprep.subr.bf16.mxu0 %v4819
  %5033 = vmatpush1.bf16.msra.mxu0 %v4818
  %5034 = vmatprep.subr.bf16.mxu0 %v4811
  %5035 = vmatpush1.bf16.msra.mxu0 %v4810
  %5036 = vmatprep.subr.bf16.mxu0 0
  %5037 = vmatpush2.bf16.msra.mxu0 0
  %5038 = vmatprep.subr.bf16.mxu0 0
  %5039 = vmatpush2.bf16.msra.mxu0 0
  %5040 = vmatprep.subr.bf16.mxu0 0
  %5041 = vmatpush2.bf16.msra.mxu0 0
  %5042 = vmatprep.subr.bf16.mxu0 0
  %5043 = vmatpush2.bf16.msra.mxu0 0
  %5044 = vmatprep.subr.bf16.mxu0 0
  %5045 = vmatpush2.bf16.msra.mxu0 0
  %5046 = vmatprep.subr.bf16.mxu0 0
  %5047 = vmatpush2.bf16.msra.mxu0 0
  %5048 = vmatprep.subr.bf16.mxu0 0
  %5049 = vmatpush2.bf16.msra.mxu0 0
  %5050 = vmatprep.subr.bf16.mxu0 0
  %5051 = vmatpush2.bf16.msra.mxu0 0
  %5052 = vmatprep.mubr.bf16.mxu0 0
  %5053 = vmatmul.mubr.bf16.gmra.mxu0 %v4549
  %v5054 = vpop.f32.mrf.mxu0
  %v5055 = vadd.f32 0.0, %v5054
  %v5056 = vpop.f32.mrf.mxu0
  %v5057 = vadd.f32 0.0, %v5056
  %v5058 = vpop.f32.mrf.mxu0
  %v5059 = vadd.f32 0.0, %v5058
  %v5060 = vpop.f32.mrf.mxu0
  %v5061 = vadd.f32 0.0, %v5060
  %5062 = vdwg.mxu0
  %5063 = vmatprep.subr.bf16.mxu0 %v4869
  %5064 = vmatpush1.bf16.msra.mxu0 %v4868
  %5065 = vmatprep.subr.bf16.mxu0 %v4861
  %5066 = vmatpush1.bf16.msra.mxu0 %v4860
  %5067 = vmatprep.subr.bf16.mxu0 %v4853
  %5068 = vmatpush1.bf16.msra.mxu0 %v4852
  %5069 = vmatprep.subr.bf16.mxu0 %v4845
  %5070 = vmatpush1.bf16.msra.mxu0 %v4844
  %5071 = vmatprep.subr.bf16.mxu0 %v4837
  %5072 = vmatpush1.bf16.msra.mxu0 %v4836
  %5073 = vmatprep.subr.bf16.mxu0 %v4829
  %5074 = vmatpush1.bf16.msra.mxu0 %v4828
  %5075 = vmatprep.subr.bf16.mxu0 %v4821
  %5076 = vmatpush1.bf16.msra.mxu0 %v4820
  %5077 = vmatprep.subr.bf16.mxu0 %v4813
  %5078 = vmatpush1.bf16.msra.mxu0 %v4812
  %5079 = vmatprep.subr.bf16.mxu0 0
  %5080 = vmatpush2.bf16.msra.mxu0 0
  %5081 = vmatprep.subr.bf16.mxu0 0
  %5082 = vmatpush2.bf16.msra.mxu0 0
  %5083 = vmatprep.subr.bf16.mxu0 0
  %5084 = vmatpush2.bf16.msra.mxu0 0
  %5085 = vmatprep.subr.bf16.mxu0 0
  %5086 = vmatpush2.bf16.msra.mxu0 0
  %5087 = vmatprep.subr.bf16.mxu0 0
  %5088 = vmatpush2.bf16.msra.mxu0 0
  %5089 = vmatprep.subr.bf16.mxu0 0
  %5090 = vmatpush2.bf16.msra.mxu0 0
  %5091 = vmatprep.subr.bf16.mxu0 0
  %5092 = vmatpush2.bf16.msra.mxu0 0
  %5093 = vmatprep.subr.bf16.mxu0 0
  %5094 = vmatpush2.bf16.msra.mxu0 0
  %5095 = vmatprep.mubr.bf16.mxu0 0
  %5096 = vmatmul.mubr.bf16.gmra.mxu0 %v4549
  %v5097 = vpop.f32.mrf.mxu0
  %v5098 = vadd.f32 0.0, %v5097
  %v5099 = vpop.f32.mrf.mxu0
  %v5100 = vadd.f32 0.0, %v5099
  %v5101 = vpop.f32.mrf.mxu0
  %v5102 = vadd.f32 0.0, %v5101
  %v5103 = vpop.f32.mrf.mxu0
  %v5104 = vadd.f32 0.0, %v5103
  %5105 = vdwg.mxu0
  %v5106 = vsel %vm20, %v4969, %v5055
  %v5107 = vsel %vm20, %v4971, %v5057
  %v5108 = vsel %vm20, %v5012, %v5098
  %v5109 = vsel %vm20, %v5014, %v5100
  %v5110 = vsel %vm21, %v4973, %v5059
  %v5111 = vsel %vm21, %v4975, %v5061
  %v5112 = vsel %vm21, %v5016, %v5102
  %v5113 = vsel %vm21, %v5018, %v5104
  %s5114 = scalar_lea.vmem %s0, 224
  %v5115 = vld [vmem:[%s5114] sm:$0xff]
  %v5116 = vld [vmem:[%s5114 + $0x8] sm:$0xff]
  %v5117 = vld [vmem:[%s5114 + $0x10] sm:$0xff]
  %v5118 = vld [vmem:[%s5114 + $0x18] sm:$0xff]
  %v5119 = vunpack.c.l.bf16 %v5115
  %v5120 = vunpack.c.h.bf16 %v5115
  %v5121 = vunpack.c.l.bf16 %v5116
  %v5122 = vunpack.c.h.bf16 %v5116
  %v5123 = vunpack.c.l.bf16 %v5117
  %v5124 = vunpack.c.h.bf16 %v5117
  %v5125 = vunpack.c.l.bf16 %v5118
  %v5126 = vunpack.c.h.bf16 %v5118
  %v5127 = vadd.f32 %v5119, %v5106
  %v5128 = vadd.f32 %v5120, %v5107
  %v5129 = vadd.f32 %v5121, %v5108
  %v5130 = vadd.f32 %v5122, %v5109
  %v5131 = vadd.f32 %v5123, %v5110
  %v5132 = vadd.f32 %v5124, %v5111
  %v5133 = vadd.f32 %v5125, %v5112
  %v5134 = vadd.f32 %v5126, %v5113
  %v5135 = vxor.u32 %v5127, 2147483648
  %v5136 = vxor.u32 %v5131, 2147483648
  %v5137 = vmul.f32 %v5135, 1.442695
  %v5138 = vpow.pop %v5137
  %v5139 = vmul.f32 %v5136, 1.442695
  %v5140 = vpow.pop %v5139
  %v5141 = vadd.f32 %v5138, 1.0
  %v5142 = vadd.f32 %v5140, 1.0
  %v5143 = vrcp.pop %v5141
  %v5144 = vmul.f32 1.0, %v5143
  %v5145 = vrcp.pop %v5142
  %v5146 = vmul.f32 1.0, %v5145
  %v5147 = vxor.u32 %v5128, 2147483648
  %v5148 = vxor.u32 %v5132, 2147483648
  %v5149 = vmul.f32 %v5147, 1.442695
  %v5150 = vpow.pop %v5149
  %v5151 = vmul.f32 %v5148, 1.442695
  %v5152 = vpow.pop %v5151
  %v5153 = vadd.f32 %v5150, 1.0
  %v5154 = vadd.f32 %v5152, 1.0
  %v5155 = vrcp.pop %v5153
  %v5156 = vmul.f32 1.0, %v5155
  %v5157 = vrcp.pop %v5154
  %v5158 = vmul.f32 1.0, %v5157
  %v5159 = vtanh.pop %v5129
  %v5160 = vtanh.pop %v5133
  %v5161 = vxor.u32 %v5130, 2147483648
  %v5162 = vxor.u32 %v5134, 2147483648
  %v5163 = vmul.f32 %v5161, 1.442695
  %v5164 = vpow.pop %v5163
  %v5165 = vmul.f32 %v5162, 1.442695
  %v5166 = vpow.pop %v5165
  %v5167 = vadd.f32 %v5164, 1.0
  %v5168 = vadd.f32 %v5166, 1.0
  %v5169 = vrcp.pop %v5167
  %v5170 = vmul.f32 1.0, %v5169
  %v5171 = vrcp.pop %v5168
  %v5172 = vmul.f32 1.0, %v5171
  %v5173 = vmul.f32 %v5156, %v4543
  %v5174 = vmul.f32 %v5158, %v4544
  %v5175 = vmul.f32 %v5144, %v5159
  %v5176 = vmul.f32 %v5146, %v5160
  %v5177 = vadd.f32 %v5173, %v5175
  %v5178 = vadd.f32 %v5174, %v5176
  %v5179 = vtanh.pop %v5177
  %v5180 = vtanh.pop %v5178
  %v5181 = vmul.f32 %v5170, %v5179
  %v5182 = vmul.f32 %v5172, %v5180
  %v5183 = vsel %vm20, 7, 0
  %v5184 = vsel %vm21, 7, 0
  %vm5185 = vcmp.gt.s32.totalorder %v15, %v5183
  %vm5186 = vcmp.gt.s32.totalorder %v16, %v5184
  %v5187 = vsel %vm5185, %v5181, %v4541
  %v5188 = vsel %vm5186, %v5182, %v4542
  %v5189 = vpack.c.bf16 %v5187, %v5187
  %5190 = vst [vmem:[%s665] sm:$0xf] %v5189
  %v5191 = vpack.c.bf16 %v5188, %v5188
  %5192 = vst [vmem:[%s3 + $0x4] sm:$0xf] %v5191
  // Predicated region
  $region14: #{lstm_model_forward.2} parent=0 // pred_check
    _
  $region15: #{lstm_model_forward.2} parent=0 // pred_check_branch
    %5194 = sbr.rel (0) target = $region17
  $region16: #{lstm_model_forward.2} parent=0 // pred_region
    _
  $region17: #{lstm_model_forward.2} parent=0 // pred_fallthru
    _
  // Predicated region
  $region18: #{lstm_model_forward.2} parent=0 // pred_check
    _
  $region19: #{lstm_model_forward.2} parent=0 // pred_check_branch
    %5196 = sbr.rel (0) target = $region21
  $region20: #{lstm_model_forward.2} parent=0 // pred_region
    _
  $region21: #{lstm_model_forward.2} parent=0 // pred_fallthru
    _

</llo_original>
